<compile_context>
chip_gen: v5e
topology: v5e:2x2
jax: 0.10.0
libtpu: 0.0.40
codegen_flags: <defaults>
</compile_context>

<pallas_src>
import functools

import jax
import jax.numpy as jnp
from jax import lax
from jax.experimental import pallas as pl
from jax.experimental.pallas import tpu as pltpu


LANE = 128   # lane width: pad feature dims to multiples of this
TM = 256     # row tile (MXU aligned; use 128 on v5e if VMEM-pressed)
TK = 256     # contraction tile for the aggregation matmul


def _round_up(x, m):
    return (x + m - 1) // m * m


def _pad2d(x, rows, cols):
    return jnp.pad(x, ((0, rows - x.shape[0]), (0, cols - x.shape[1])))


# ----------------------------------------------------------------------------
# Kernel 1: per-layer feature projections  HWs = H @ W_self + bias,  HWn = H @ W_neigh
# ----------------------------------------------------------------------------
def _project_kernel(h_ref, ws_ref, wn_ref, b_ref, hws_ref, hwn_ref):
    h = h_ref[...]
    hws = jnp.dot(h, ws_ref[...], preferred_element_type=jnp.float32) + b_ref[...]
    hwn = jnp.dot(h, wn_ref[...], preferred_element_type=jnp.float32)
    hws_ref[...] = hws.astype(hws_ref.dtype)
    hwn_ref[...] = hwn.astype(hwn_ref.dtype)   # bf16: halves HBM traffic of the A-stream matmul


def sage_project(h, w_self, w_neigh, bias, *, tm=TM):
    n_p, f_in_p = h.shape
    f_out_p = w_self.shape[1]
    assert n_p % tm == 0
    return pl.pallas_call(
        _project_kernel,
        out_shape=(
            jax.ShapeDtypeStruct((n_p, f_out_p), jnp.float32),   # HWs (+bias)
            jax.ShapeDtypeStruct((n_p, f_out_p), jnp.bfloat16),  # HWn
        ),
        grid_spec=pltpu.PrefetchScalarGridSpec(
            num_scalar_prefetch=0,
            grid=(n_p // tm,),
            in_specs=[
                pl.BlockSpec((tm, f_in_p), lambda i: (i, 0)),
                pl.BlockSpec((f_in_p, f_out_p), lambda i: (0, 0)),
                pl.BlockSpec((f_in_p, f_out_p), lambda i: (0, 0)),
                pl.BlockSpec((1, f_out_p), lambda i: (0, 0)),
            ],
            out_specs=[
                pl.BlockSpec((tm, f_out_p), lambda i: (i, 0)),
                pl.BlockSpec((tm, f_out_p), lambda i: (i, 0)),
            ],
        ),
        compiler_params=pltpu.CompilerParams(dimension_semantics=("parallel",)),
    )(h, w_self, w_neigh, bias)


# ----------------------------------------------------------------------------
# Kernel 2: K-tiled aggregation  out = A @ HWn + HWs   (bf16 MXU inputs, f32 acc)
# ----------------------------------------------------------------------------
def _aggregate_kernel(a_ref, hwn_ref, hws_ref, o_ref, acc_ref):
    k = pl.program_id(1)

    @pl.when(k == 0)
    def _():
        acc_ref[...] = jnp.zeros_like(acc_ref)

    acc_ref[...] += jnp.dot(a_ref[...], hwn_ref[...], preferred_element_type=jnp.float32)

    @pl.when(k == pl.num_programs(1) - 1)
    def _():
        o_ref[...] = (acc_ref[...] + hws_ref[...]).astype(o_ref.dtype)


def sage_aggregate(a_bf16, hwn, hws, *, tm=TM, tk=TK):
    n_p = a_bf16.shape[0]
    f_out_p = hwn.shape[1]
    assert n_p % tm == 0 and n_p % tk == 0
    flops = 2 * n_p * n_p * f_out_p
    bytes_accessed = (n_p * n_p * 2          # A strip (bf16)
                      + n_p * f_out_p * 2    # HWn (bf16)
                      + n_p * f_out_p * 4    # HWs (f32)
                      + n_p * f_out_p * 4)   # output (f32)
    return pl.pallas_call(
        _aggregate_kernel,
        out_shape=jax.ShapeDtypeStruct((n_p, f_out_p), jnp.float32),
        grid_spec=pltpu.PrefetchScalarGridSpec(
            num_scalar_prefetch=0,
            grid=(n_p // tm, n_p // tk),
            in_specs=[
                pl.BlockSpec((tm, tk), lambda i, k: (i, k)),        # A tile
                pl.BlockSpec((tk, f_out_p), lambda i, k: (k, 0)),   # HWn tile
                pl.BlockSpec((tm, f_out_p), lambda i, k: (i, 0)),   # HWs tile (epilogue)
            ],
            out_specs=pl.BlockSpec((tm, f_out_p), lambda i, k: (i, 0)),
            scratch_shapes=[pltpu.VMEM((tm, f_out_p), jnp.float32)],
        ),
        compiler_params=pltpu.CompilerParams(
            dimension_semantics=("parallel", "arbitrary"),
            vmem_limit_bytes=32 * 1024 * 1024,
        ),
        cost_estimate=pl.CostEstimate(
            flops=int(flops), transcendentals=0, bytes_accessed=int(bytes_accessed)),
    )(a_bf16, hwn, hws)


# ----------------------------------------------------------------------------
# Kernel 3: BatchNorm statistics (per-column sum / sum-of-squares), N-tiled,
#           masked so zero-padded rows never enter the statistics.
# ----------------------------------------------------------------------------
def _bn_stats_kernel(h_ref, o_ref, *, n_valid, tm):
    i = pl.program_id(0)
    x = h_ref[...]
    row = i * tm + lax.broadcasted_iota(jnp.int32, x.shape, 0)
    xm = jnp.where(row < n_valid, x, 0.0)
    s = jnp.sum(xm, axis=0, keepdims=True)
    sq = jnp.sum(xm * xm, axis=0, keepdims=True)

    @pl.when(i == 0)
    def _():
        o_ref[0:1, :] = s
        o_ref[1:2, :] = sq

    @pl.when(i > 0)
    def _():
        o_ref[0:1, :] = o_ref[0:1, :] + s
        o_ref[1:2, :] = o_ref[1:2, :] + sq


def bn_stats(h, n_valid, *, tm=TM):
    n_p, f = h.shape
    assert n_p % tm == 0
    kernel = functools.partial(_bn_stats_kernel, n_valid=n_valid, tm=tm)
    return pl.pallas_call(
        kernel,
        out_shape=jax.ShapeDtypeStruct((2, f), jnp.float32),
        grid_spec=pltpu.PrefetchScalarGridSpec(
            num_scalar_prefetch=0,
            grid=(n_p // tm,),
            in_specs=[pl.BlockSpec((tm, f), lambda i: (i, 0))],
            out_specs=pl.BlockSpec((2, f), lambda i: (0, 0)),   # resident accumulator
        ),
        compiler_params=pltpu.CompilerParams(dimension_semantics=("arbitrary",)),
    )(h)


# ----------------------------------------------------------------------------
# Kernel 4: BatchNorm apply (training-mode batch stats) + ReLU, N-tiled.
# ----------------------------------------------------------------------------
def _bn_apply_relu_kernel(h_ref, stats_ref, gamma_ref, beta_ref, o_ref, *, n_valid):
    x = h_ref[...]
    inv_n = 1.0 / float(n_valid)
    mean = stats_ref[0:1, :] * inv_n
    var = jnp.maximum(stats_ref[1:2, :] * inv_n - mean * mean, 0.0)
    inv = lax.rsqrt(var + 1e-5)
    y = (x - mean) * (inv * gamma_ref[...]) + beta_ref[...]
    o_ref[...] = jnp.maximum(y, 0.0).astype(o_ref.dtype)


def bn_apply_relu(h, stats, gamma, beta, n_valid, *, tm=TM):
    n_p, f = h.shape
    assert n_p % tm == 0
    kernel = functools.partial(_bn_apply_relu_kernel, n_valid=n_valid)
    return pl.pallas_call(
        kernel,
        out_shape=jax.ShapeDtypeStruct((n_p, f), jnp.float32),
        grid_spec=pltpu.PrefetchScalarGridSpec(
            num_scalar_prefetch=0,
            grid=(n_p // tm,),
            in_specs=[
                pl.BlockSpec((tm, f), lambda i: (i, 0)),
                pl.BlockSpec((2, f), lambda i: (0, 0)),
                pl.BlockSpec((1, f), lambda i: (0, 0)),
                pl.BlockSpec((1, f), lambda i: (0, 0)),
            ],
            out_specs=pl.BlockSpec((tm, f), lambda i: (i, 0)),
        ),
        compiler_params=pltpu.CompilerParams(dimension_semantics=("parallel",)),
    )(h, stats, gamma, beta)


# ----------------------------------------------------------------------------
# GraphSAGE forward (padded to MXU/lane-aligned shapes; pad sliced off at the end)
# ----------------------------------------------------------------------------
def graphsage_forward(a_norm, feat, params, n_layers):
    n = feat.shape[0]
    n_classes = params[n_layers - 1]["w_self"].shape[1]

    n_p = _round_up(n, max(TM, TK))
    # Padded rows/cols of A are zero, so padded source nodes contribute nothing.
    a_p = _pad2d(a_norm, n_p, n_p).astype(jnp.bfloat16)

    f_in0 = feat.shape[1]
    h = _pad2d(feat, n_p, _round_up(f_in0, LANE))

    for l in range(n_layers):
        p = params[l]
        f_in_l, f_out_l = p["w_self"].shape
        f_in_p = _round_up(f_in_l, LANE)
        f_out_p = _round_up(f_out_l, LANE)
        assert h.shape[1] == f_in_p

        ws = _pad2d(p["w_self"], f_in_p, f_out_p)
        wn = _pad2d(p["w_neigh"], f_in_p, f_out_p)
        b = jnp.pad(p["bias"], (0, f_out_p - f_out_l)).reshape(1, f_out_p)

        hws, hwn = sage_project(h, ws, wn, b)        # H@Ws + b (f32), H@Wn (bf16)
        h = sage_aggregate(a_p, hwn, hws)            # A @ (H@Wn) + (H@Ws + b)

        if l < n_layers - 1:
            gamma = jnp.pad(p["gamma"], (0, f_out_p - f_out_l),
                            constant_values=1.0).reshape(1, f_out_p)
            beta = jnp.pad(p["beta"], (0, f_out_p - f_out_l)).reshape(1, f_out_p)
            stats = bn_stats(h, n)
            h = bn_apply_relu(h, stats, gamma, beta, n)
            # Dropout: eval-mode identity (see TODO at top of file).

    return h[:n, :n_classes]


def init_params(key, in_feats, n_hidden, n_classes, n_layers):
    params = []
    for i in range(n_layers):
        in_h = n_hidden if i > 0 else in_feats
        out_h = n_hidden if i < n_layers - 1 else n_classes
        key, k1, k2 = jax.random.split(key, 3)
        scale = 1.0 / jnp.sqrt(jnp.float32(in_h))
        p = {
            # stored as (F_in, F_out), i.e. transpose of PyTorch Linear weight
            "w_self": jax.random.normal(k1, (in_h, out_h), jnp.float32) * scale,
            "w_neigh": jax.random.normal(k2, (in_h, out_h), jnp.float32) * scale,
            "bias": jnp.zeros((out_h,), jnp.float32),
        }
        if i < n_layers - 1:
            p["gamma"] = jnp.ones((out_h,), jnp.float32)   # BatchNorm1d default init
            p["beta"] = jnp.zeros((out_h,), jnp.float32)
        params.append(p)
    return params


def reference_forward(a_norm, feat, params, n_layers):
    """Pure-JAX reference with the same numerics (bf16 aggregation, f32 elsewhere)."""
    h = feat
    a_bf16 = a_norm.astype(jnp.bfloat16)
    for l in range(n_layers):
        p = params[l]
        hws = jnp.dot(h, p["w_self"], preferred_element_type=jnp.float32,
                      precision=lax.Precision.HIGHEST) + p["bias"]
        hwn = jnp.dot(h, p["w_neigh"], preferred_element_type=jnp.float32,
                      precision=lax.Precision.HIGHEST)
        neigh = jnp.dot(a_bf16, hwn.astype(jnp.bfloat16),
                        preferred_element_type=jnp.float32)
        h = hws + neigh
        if l < n_layers - 1:
            mean = jnp.mean(h, axis=0, keepdims=True)
            var = jnp.mean(jnp.square(h - mean), axis=0, keepdims=True)
            h = (h - mean) * lax.rsqrt(var + 1e-5) * p["gamma"] + p["beta"]
            h = jnp.maximum(h, 0.0)
    return h


if __name__ == "__main__":
    key = jax.random.PRNGKey(0)

    # Small synthetic problem consistent with the module's forward.
    N = 600          # nodes (not a multiple of 256 -> exercises row padding + masked BN)
    in_feats = 96
    n_hidden = 64
    n_classes = 16
    n_layers = 3

    key, k_adj, k_feat, k_param = jax.random.split(key, 4)

    # Dense random graph with self-loops; row-normalize -> mean aggregation.
    adj = jax.random.bernoulli(k_adj, p=0.05, shape=(N, N)).astype(jnp.float32)
    adj = jnp.maximum(adj, jnp.eye(N, dtype=jnp.float32))
    deg = jnp.maximum(jnp.sum(adj, axis=1, keepdims=True), 1.0)
    a_norm = adj / deg

    feat = jax.random.normal(k_feat, (N, in_feats), jnp.float32)
    params = init_params(k_param, in_feats, n_hidden, n_classes, n_layers)

    fwd = jax.jit(functools.partial(graphsage_forward, n_layers=n_layers))
    out = fwd(a_norm, feat, params)
    jax.block_until_ready(out)

    ref = reference_forward(a_norm, feat, params, n_layers)
    jax.block_until_ready(ref)

    assert out.shape == (N, n_classes), out.shape
    assert out.dtype == jnp.float32
    max_err = float(jnp.max(jnp.abs(out - ref)))
    assert max_err < 5e-2, max_err
    print("KERNEL_OK")
</pallas_src>

<mosaic_0001>
module attributes {stable_mosaic.version = 11 : i64} {
  func.func @_bn_apply_relu_kernel(%arg0: i32, %arg1: memref<256x128xf32, #tpu.memory_space<vmem>>, %arg2: memref<2x128xf32, #tpu.memory_space<vmem>>, %arg3: memref<1x128xf32, #tpu.memory_space<vmem>>, %arg4: memref<1x128xf32, #tpu.memory_space<vmem>>, %arg5: memref<256x128xf32, #tpu.memory_space<vmem>>) attributes {dimension_semantics = [#tpu.dimension_semantics<parallel>], iteration_bounds = array<i64: 3>, scalar_prefetch = 0 : i64, scratch_operands = 0 : i64, tpu.core_type = #tpu.core_type<tc>, window_params = [{transform_indices = @transform_0, window_bounds = array<i64: 256, 128>}, {pipeline_mode = #tpu.pipeline_mode<synchronous>, transform_indices = @transform_1, window_bounds = array<i64: 2, 128>}, {pipeline_mode = #tpu.pipeline_mode<synchronous>, transform_indices = @transform_2, window_bounds = array<i64: 1, 128>}, {pipeline_mode = #tpu.pipeline_mode<synchronous>, transform_indices = @transform_3, window_bounds = array<i64: 1, 128>}, {transform_indices = @transform_4, window_bounds = array<i64: 256, 128>}]} {
    %c0 = arith.constant 0 : index
    %c0_0 = arith.constant 0 : index
    %0 = vector.load %arg1[%c0, %c0_0] : memref<256x128xf32, #tpu.memory_space<vmem>>, vector<256x128xf32>
    %c0_1 = arith.constant 0 : index
    %c0_2 = arith.constant 0 : index
    %1 = vector.load %arg2[%c0_1, %c0_2] : memref<2x128xf32, #tpu.memory_space<vmem>>, vector<1x128xf32>
    %cst = arith.constant 0.00166666671 : f32
    %2 = vector.broadcast %cst : f32 to vector<1x128xf32>
    %3 = arith.mulf %1, %2 : vector<1x128xf32>
    %c1 = arith.constant 1 : index
    %c0_3 = arith.constant 0 : index
    %4 = vector.load %arg2[%c1, %c0_3] : memref<2x128xf32, #tpu.memory_space<vmem>>, vector<1x128xf32>
    %cst_4 = arith.constant 0.00166666671 : f32
    %5 = vector.broadcast %cst_4 : f32 to vector<1x128xf32>
    %6 = arith.mulf %4, %5 : vector<1x128xf32>
    %7 = arith.mulf %3, %3 : vector<1x128xf32>
    %8 = arith.subf %6, %7 : vector<1x128xf32>
    %cst_5 = arith.constant 0.000000e+00 : f32
    %9 = vector.broadcast %cst_5 : f32 to vector<1x128xf32>
    %10 = arith.maximumf %8, %9 : vector<1x128xf32>
    %cst_6 = arith.constant 9.99999974E-6 : f32
    %11 = vector.broadcast %cst_6 : f32 to vector<1x128xf32>
    %12 = arith.addf %10, %11 : vector<1x128xf32>
    %13 = math.rsqrt %12 : vector<1x128xf32>
    %14 = vector.broadcast %3 : vector<1x128xf32> to vector<256x128xf32>
    %15 = arith.subf %0, %14 : vector<256x128xf32>
    %c0_7 = arith.constant 0 : index
    %c0_8 = arith.constant 0 : index
    %16 = vector.load %arg3[%c0_7, %c0_8] : memref<1x128xf32, #tpu.memory_space<vmem>>, vector<1x128xf32>
    %17 = arith.mulf %13, %16 : vector<1x128xf32>
    %18 = vector.broadcast %17 : vector<1x128xf32> to vector<256x128xf32>
    %19 = arith.mulf %15, %18 : vector<256x128xf32>
    %c0_9 = arith.constant 0 : index
    %c0_10 = arith.constant 0 : index
    %20 = vector.load %arg4[%c0_9, %c0_10] : memref<1x128xf32, #tpu.memory_space<vmem>>, vector<1x128xf32>
    %21 = vector.broadcast %20 : vector<1x128xf32> to vector<256x128xf32>
    %22 = arith.addf %19, %21 : vector<256x128xf32>
    %cst_11 = arith.constant 0.000000e+00 : f32
    %23 = vector.broadcast %cst_11 : f32 to vector<256x128xf32>
    %24 = arith.maximumf %22, %23 : vector<256x128xf32>
    %c0_12 = arith.constant 0 : index
    %c0_13 = arith.constant 0 : index
    %25 = vector.load %arg5[%c0_12, %c0_13] : memref<256x128xf32, #tpu.memory_space<vmem>>, vector<256x128xf32>
    tpu.vector_store %arg5[%c0_12, %c0_13], %24 {strides = array<i32>} : memref<256x128xf32, #tpu.memory_space<vmem>>, vector<256x128xf32>,
    return
  }
  func.func @transform_0(%arg0: i32) -> (i32, i32) {
    %c0_i32 = arith.constant 0 : i32
    %c0_i32_0 = arith.constant 0 : i32
    return %arg0, %c0_i32 : i32, i32
  }
  func.func @transform_1(%arg0: i32) -> (i32, i32) {
    %c0_i32 = arith.constant 0 : i32
    %c0_i32_0 = arith.constant 0 : i32
    %c0_i32_1 = arith.constant 0 : i32
    return %c0_i32, %c0_i32_0 : i32, i32
  }
  func.func @transform_2(%arg0: i32) -> (i32, i32) {
    %c0_i32 = arith.constant 0 : i32
    %c0_i32_0 = arith.constant 0 : i32
    %c0_i32_1 = arith.constant 0 : i32
    return %c0_i32, %c0_i32_0 : i32, i32
  }
  func.func @transform_3(%arg0: i32) -> (i32, i32) {
    %c0_i32 = arith.constant 0 : i32
    %c0_i32_0 = arith.constant 0 : i32
    %c0_i32_1 = arith.constant 0 : i32
    return %c0_i32, %c0_i32_0 : i32, i32
  }
  func.func @transform_4(%arg0: i32) -> (i32, i32) {
    %c0_i32 = arith.constant 0 : i32
    %c0_i32_0 = arith.constant 0 : i32
    return %arg0, %c0_i32 : i32, i32
  }
}

module attributes {stable_mosaic.version = 11 : i64} {
  func.func @_aggregate_kernel(%arg0: i32, %arg1: i32, %arg2: memref<256x256xbf16, #tpu.memory_space<vmem>>, %arg3: memref<256x128xbf16, #tpu.memory_space<vmem>>, %arg4: memref<256x128xf32, #tpu.memory_space<vmem>>, %arg5: memref<256x128xf32, #tpu.memory_space<vmem>>, %arg6: memref<256x128xf32, #tpu.memory_space<vmem>>) attributes {dimension_semantics = [#tpu.dimension_semantics<parallel>, #tpu.dimension_semantics<arbitrary>], iteration_bounds = array<i64: 3, 3>, scalar_prefetch = 0 : i64, scratch_operands = 1 : i64, tpu.core_type = #tpu.core_type<tc>, window_params = [{transform_indices = @transform_0, window_bounds = array<i64: 256, 256>}, {transform_indices = @transform_1, window_bounds = array<i64: 256, 128>}, {transform_indices = @transform_2, window_bounds = array<i64: 256, 128>}, {transform_indices = @transform_3, window_bounds = array<i64: 256, 128>}]} {
    %c0_i32 = arith.constant 0 : i32
    %0 = arith.cmpi eq, %arg1, %c0_i32 : i32
    %1 = arith.extui %0 : i1 to i32
    %c0_i32_0 = arith.constant 0 : i32
    %2 = arith.cmpi ne, %1, %c0_i32_0 : i32
    scf.if %2 {
      %cst_9 = arith.constant 0.000000e+00 : f32
      %12 = vector.broadcast %cst_9 : f32 to vector<256x128xf32>
      %c0_10 = arith.constant 0 : index
      %c0_11 = arith.constant 0 : index
      %13 = vector.load %arg6[%c0_10, %c0_11] : memref<256x128xf32, #tpu.memory_space<vmem>>, vector<256x128xf32>
      tpu.vector_store %arg6[%c0_10, %c0_11], %12 {strides = array<i32>} : memref<256x128xf32, #tpu.memory_space<vmem>>, vector<256x128xf32>,
    } else {
    }
    %c0 = arith.constant 0 : index
    %c0_1 = arith.constant 0 : index
    %3 = vector.load %arg6[%c0, %c0_1] : memref<256x128xf32, #tpu.memory_space<vmem>>, vector<256x128xf32>
    %c0_2 = arith.constant 0 : index
    %c0_3 = arith.constant 0 : index
    %4 = vector.load %arg2[%c0_2, %c0_3] : memref<256x256xbf16, #tpu.memory_space<vmem>>, vector<256x256xbf16>
    %c0_4 = arith.constant 0 : index
    %c0_5 = arith.constant 0 : index
    %5 = vector.load %arg3[%c0_4, %c0_5] : memref<256x128xbf16, #tpu.memory_space<vmem>>, vector<256x128xbf16>
    %cst = arith.constant dense<0.000000e+00> : vector<256x128xf32>
    %6 = tpu.matmul %4, %5, %cst {dimension_numbers = #tpu.dot_dimension_numbers<[1], [0], [0], [1], [0, 0, 1, 1], [], []>} : vector<256x256xbf16>, vector<256x128xbf16>, vector<256x128xf32> -> vector<256x128xf32>
    %7 = arith.addf %3, %6 : vector<256x128xf32>
    %c0_6 = arith.constant 0 : index
    %c0_7 = arith.constant 0 : index
    %8 = vector.load %arg6[%c0_6, %c0_7] : memref<256x128xf32, #tpu.memory_space<vmem>>, vector<256x128xf32>
    tpu.vector_store %arg6[%c0_6, %c0_7], %7 {strides = array<i32>} : memref<256x128xf32, #tpu.memory_space<vmem>>, vector<256x128xf32>,
    %c2_i32 = arith.constant 2 : i32
    %9 = arith.cmpi eq, %arg1, %c2_i32 : i32
    %10 = arith.extui %9 : i1 to i32
    %c0_i32_8 = arith.constant 0 : i32
    %11 = arith.cmpi ne, %10, %c0_i32_8 : i32
    scf.if %11 {
      %c0_9 = arith.constant 0 : index
      %c0_10 = arith.constant 0 : index
      %12 = vector.load %arg6[%c0_9, %c0_10] : memref<256x128xf32, #tpu.memory_space<vmem>>, vector<256x128xf32>
      %c0_11 = arith.constant 0 : index
      %c0_12 = arith.constant 0 : index
      %13 = vector.load %arg4[%c0_11, %c0_12] : memref<256x128xf32, #tpu.memory_space<vmem>>, vector<256x128xf32>
      %14 = arith.addf %12, %13 : vector<256x128xf32>
      %c0_13 = arith.constant 0 : index
      %c0_14 = arith.constant 0 : index
      %15 = vector.load %arg5[%c0_13, %c0_14] : memref<256x128xf32, #tpu.memory_space<vmem>>, vector<256x128xf32>
      tpu.vector_store %arg5[%c0_13, %c0_14], %14 {strides = array<i32>} : memref<256x128xf32, #tpu.memory_space<vmem>>, vector<256x128xf32>,
    } else {
    }
    return
  }
  func.func @transform_0(%arg0: i32, %arg1: i32) -> (i32, i32) {
    %c0_i32 = arith.constant 0 : i32
    return %arg0, %arg1 : i32, i32
  }
  func.func @transform_1(%arg0: i32, %arg1: i32) -> (i32, i32) {
    %c0_i32 = arith.constant 0 : i32
    %c0_i32_0 = arith.constant 0 : i32
    return %arg1, %c0_i32 : i32, i32
  }
  func.func @transform_2(%arg0: i32, %arg1: i32) -> (i32, i32) {
    %c0_i32 = arith.constant 0 : i32
    %c0_i32_0 = arith.constant 0 : i32
    return %arg0, %c0_i32 : i32, i32
  }
  func.func @transform_3(%arg0: i32, %arg1: i32) -> (i32, i32) {
    %c0_i32 = arith.constant 0 : i32
    %c0_i32_0 = arith.constant 0 : i32
    return %arg0, %c0_i32 : i32, i32
  }
}

module attributes {stable_mosaic.version = 11 : i64} {
  func.func @_project_kernel(%arg0: i32, %arg1: memref<256x128xf32, #tpu.memory_space<vmem>>, %arg2: memref<128x128xf32, #tpu.memory_space<vmem>>, %arg3: memref<128x128xf32, #tpu.memory_space<vmem>>, %arg4: memref<1x128xf32, #tpu.memory_space<vmem>>, %arg5: memref<256x128xf32, #tpu.memory_space<vmem>>, %arg6: memref<256x128xbf16, #tpu.memory_space<vmem>>) attributes {dimension_semantics = [#tpu.dimension_semantics<parallel>], iteration_bounds = array<i64: 3>, scalar_prefetch = 0 : i64, scratch_operands = 0 : i64, tpu.core_type = #tpu.core_type<tc>, window_params = [{transform_indices = @transform_0, window_bounds = array<i64: 256, 128>}, {pipeline_mode = #tpu.pipeline_mode<synchronous>, transform_indices = @transform_1, window_bounds = array<i64: 128, 128>}, {pipeline_mode = #tpu.pipeline_mode<synchronous>, transform_indices = @transform_2, window_bounds = array<i64: 128, 128>}, {pipeline_mode = #tpu.pipeline_mode<synchronous>, transform_indices = @transform_3, window_bounds = array<i64: 1, 128>}, {transform_indices = @transform_4, window_bounds = array<i64: 256, 128>}, {transform_indices = @transform_5, window_bounds = array<i64: 256, 128>}]} {
    %c0 = arith.constant 0 : index
    %c0_0 = arith.constant 0 : index
    %0 = vector.load %arg1[%c0, %c0_0] : memref<256x128xf32, #tpu.memory_space<vmem>>, vector<256x128xf32>
    %c0_1 = arith.constant 0 : index
    %c0_2 = arith.constant 0 : index
    %1 = vector.load %arg2[%c0_1, %c0_2] : memref<128x128xf32, #tpu.memory_space<vmem>>, vector<128x128xf32>
    %cst = arith.constant dense<0.000000e+00> : vector<256x128xf32>
    %2 = tpu.matmul %0, %1, %cst {dimension_numbers = #tpu.dot_dimension_numbers<[1], [0], [0], [1], [0, 0, 1, 1], [], []>} : vector<256x128xf32>, vector<128x128xf32>, vector<256x128xf32> -> vector<256x128xf32>
    %c0_3 = arith.constant 0 : index
    %c0_4 = arith.constant 0 : index
    %3 = vector.load %arg4[%c0_3, %c0_4] : memref<1x128xf32, #tpu.memory_space<vmem>>, vector<1x128xf32>
    %4 = vector.broadcast %3 : vector<1x128xf32> to vector<256x128xf32>
    %5 = arith.addf %2, %4 : vector<256x128xf32>
    %c0_5 = arith.constant 0 : index
    %c0_6 = arith.constant 0 : index
    %6 = vector.load %arg3[%c0_5, %c0_6] : memref<128x128xf32, #tpu.memory_space<vmem>>, vector<128x128xf32>
    %cst_7 = arith.constant dense<0.000000e+00> : vector<256x128xf32>
    %7 = tpu.matmul %0, %6, %cst_7 {dimension_numbers = #tpu.dot_dimension_numbers<[1], [0], [0], [1], [0, 0, 1, 1], [], []>} : vector<256x128xf32>, vector<128x128xf32>, vector<256x128xf32> -> vector<256x128xf32>
    %c0_8 = arith.constant 0 : index
    %c0_9 = arith.constant 0 : index
    %8 = vector.load %arg5[%c0_8, %c0_9] : memref<256x128xf32, #tpu.memory_space<vmem>>, vector<256x128xf32>
    tpu.vector_store %arg5[%c0_8, %c0_9], %5 {strides = array<i32>} : memref<256x128xf32, #tpu.memory_space<vmem>>, vector<256x128xf32>,
    %9 = arith.truncf %7 : vector<256x128xf32> to vector<256x128xbf16>
    %c0_10 = arith.constant 0 : index
    %c0_11 = arith.constant 0 : index
    %10 = vector.load %arg6[%c0_10, %c0_11] : memref<256x128xbf16, #tpu.memory_space<vmem>>, vector<256x128xbf16>
    tpu.vector_store %arg6[%c0_10, %c0_11], %9 {strides = array<i32>} : memref<256x128xbf16, #tpu.memory_space<vmem>>, vector<256x128xbf16>,
    return
  }
  func.func @transform_0(%arg0: i32) -> (i32, i32) {
    %c0_i32 = arith.constant 0 : i32
    %c0_i32_0 = arith.constant 0 : i32
    return %arg0, %c0_i32 : i32, i32
  }
  func.func @transform_1(%arg0: i32) -> (i32, i32) {
    %c0_i32 = arith.constant 0 : i32
    %c0_i32_0 = arith.constant 0 : i32
    %c0_i32_1 = arith.constant 0 : i32
    return %c0_i32, %c0_i32_0 : i32, i32
  }
  func.func @transform_2(%arg0: i32) -> (i32, i32) {
    %c0_i32 = arith.constant 0 : i32
    %c0_i32_0 = arith.constant 0 : i32
    %c0_i32_1 = arith.constant 0 : i32
    return %c0_i32, %c0_i32_0 : i32, i32
  }
  func.func @transform_3(%arg0: i32) -> (i32, i32) {
    %c0_i32 = arith.constant 0 : i32
    %c0_i32_0 = arith.constant 0 : i32
    %c0_i32_1 = arith.constant 0 : i32
    return %c0_i32, %c0_i32_0 : i32, i32
  }
  func.func @transform_4(%arg0: i32) -> (i32, i32) {
    %c0_i32 = arith.constant 0 : i32
    %c0_i32_0 = arith.constant 0 : i32
    return %arg0, %c0_i32 : i32, i32
  }
  func.func @transform_5(%arg0: i32) -> (i32, i32) {
    %c0_i32 = arith.constant 0 : i32
    %c0_i32_0 = arith.constant 0 : i32
    return %arg0, %c0_i32 : i32, i32
  }
}

module attributes {stable_mosaic.version = 11 : i64} {
  func.func @_bn_stats_kernel(%arg0: i32, %arg1: memref<256x128xf32, #tpu.memory_space<vmem>>, %arg2: memref<2x128xf32, #tpu.memory_space<vmem>>) attributes {dimension_semantics = [#tpu.dimension_semantics<arbitrary>], iteration_bounds = array<i64: 3>, scalar_prefetch = 0 : i64, scratch_operands = 0 : i64, tpu.core_type = #tpu.core_type<tc>, window_params = [{transform_indices = @transform_0, window_bounds = array<i64: 256, 128>}, {pipeline_mode = #tpu.pipeline_mode<synchronous>, transform_indices = @transform_1, window_bounds = array<i64: 2, 128>}]} {
    %c0 = arith.constant 0 : index
    %c0_0 = arith.constant 0 : index
    %0 = vector.load %arg1[%c0, %c0_0] : memref<256x128xf32, #tpu.memory_space<vmem>>, vector<256x128xf32>
    %c256_i32 = arith.constant 256 : i32
    %1 = arith.muli %arg0, %c256_i32 : i32
    %2 = tpu.iota {dimensions = array<i32: 0>} : vector<256x128xi32>
    %3 = vector.broadcast %1 : i32 to vector<256x128xi32>
    %4 = arith.addi %3, %2 : vector<256x128xi32>
    %c600_i32 = arith.constant 600 : i32
    %5 = vector.broadcast %c600_i32 : i32 to vector<256x128xi32>
    %6 = arith.cmpi slt, %4, %5 : vector<256x128xi32>
    %cst = arith.constant 0.000000e+00 : f32
    %7 = vector.broadcast %cst : f32 to vector<256x128xf32>
    %8 = arith.select %6, %0, %7 : vector<256x128xi1>, vector<256x128xf32>
    %cst_1 = arith.constant dense<0.000000e+00> : vector<128xf32>
    %9 = vector.multi_reduction <add>, %8, %cst_1 [0] : vector<256x128xf32> to vector<128xf32>
    %10 = vector.shape_cast %9 : vector<128xf32> to vector<1x128xf32>
    %11 = arith.mulf %8, %8 : vector<256x128xf32>
    %cst_2 = arith.constant dense<0.000000e+00> : vector<128xf32>
    %12 = vector.multi_reduction <add>, %11, %cst_2 [0] : vector<256x128xf32> to vector<128xf32>
    %13 = vector.shape_cast %12 : vector<128xf32> to vector<1x128xf32>
    %c0_i32 = arith.constant 0 : i32
    %14 = arith.cmpi eq, %arg0, %c0_i32 : i32
    %15 = arith.extui %14 : i1 to i32
    %c0_i32_3 = arith.constant 0 : i32
    %16 = arith.cmpi ne, %15, %c0_i32_3 : i32
    scf.if %16 {
      %c0_6 = arith.constant 0 : index
      %c0_7 = arith.constant 0 : index
      %20 = vector.load %arg2[%c0_6, %c0_7] : memref<2x128xf32, #tpu.memory_space<vmem>>, vector<1x128xf32>
      tpu.vector_store %arg2[%c0_6, %c0_7], %10 {strides = array<i32>} : memref<2x128xf32, #tpu.memory_space<vmem>>, vector<1x128xf32>,
      %c1 = arith.constant 1 : index
      %c0_8 = arith.constant 0 : index
      %21 = vector.load %arg2[%c1, %c0_8] : memref<2x128xf32, #tpu.memory_space<vmem>>, vector<1x128xf32>
      tpu.vector_store %arg2[%c1, %c0_8], %13 {strides = array<i32>} : memref<2x128xf32, #tpu.memory_space<vmem>>, vector<1x128xf32>,
    } else {
    }
    %c0_i32_4 = arith.constant 0 : i32
    %17 = arith.cmpi sgt, %arg0, %c0_i32_4 : i32
    %18 = arith.extui %17 : i1 to i32
    %c0_i32_5 = arith.constant 0 : i32
    %19 = arith.cmpi ne, %18, %c0_i32_5 : i32
    scf.if %19 {
      %c0_6 = arith.constant 0 : index
      %c0_7 = arith.constant 0 : index
      %20 = vector.load %arg2[%c0_6, %c0_7] : memref<2x128xf32, #tpu.memory_space<vmem>>, vector<1x128xf32>
      %21 = arith.addf %20, %10 : vector<1x128xf32>
      %c0_8 = arith.constant 0 : index
      %c0_9 = arith.constant 0 : index
      %22 = vector.load %arg2[%c0_8, %c0_9] : memref<2x128xf32, #tpu.memory_space<vmem>>, vector<1x128xf32>
      tpu.vector_store %arg2[%c0_8, %c0_9], %21 {strides = array<i32>} : memref<2x128xf32, #tpu.memory_space<vmem>>, vector<1x128xf32>,
      %c1 = arith.constant 1 : index
      %c0_10 = arith.constant 0 : index
      %23 = vector.load %arg2[%c1, %c0_10] : memref<2x128xf32, #tpu.memory_space<vmem>>, vector<1x128xf32>
      %24 = arith.addf %23, %13 : vector<1x128xf32>
      %c1_11 = arith.constant 1 : index
      %c0_12 = arith.constant 0 : index
      %25 = vector.load %arg2[%c1_11, %c0_12] : memref<2x128xf32, #tpu.memory_space<vmem>>, vector<1x128xf32>
      tpu.vector_store %arg2[%c1_11, %c0_12], %24 {strides = array<i32>} : memref<2x128xf32, #tpu.memory_space<vmem>>, vector<1x128xf32>,
    } else {
    }
    return
  }
  func.func @transform_0(%arg0: i32) -> (i32, i32) {
    %c0_i32 = arith.constant 0 : i32
    %c0_i32_0 = arith.constant 0 : i32
    return %arg0, %c0_i32 : i32, i32
  }
  func.func @transform_1(%arg0: i32) -> (i32, i32) {
    %c0_i32 = arith.constant 0 : i32
    %c0_i32_0 = arith.constant 0 : i32
    %c0_i32_1 = arith.constant 0 : i32
    return %c0_i32, %c0_i32_0 : i32, i32
  }
}

</mosaic_0001>

<llo_original>
// kernel: graphsage_forward.13
$region0: #{graphsage_forward.13}
  #allocation0 [shape = 'u32[]', space=smem, size = 0x4, offset = 0x4, fixed_abs, tag = 'smem constant byte address 0x4 - core index']
  #allocation1 [shape = 'u32[72,128]{1,0:T(1,128)}', space=vmem, size = 0x9000, scoped, tag = 'internal scratch']
  %s0 = inlined_call_operand.vmem [shape: f32[768,128], index: 0, kind: input, shape index: {}]
  %s1 = inlined_call_operand.vmem [shape: f32[2,128], index: 1, kind: input, shape index: {}]
  %s2 = inlined_call_operand.vmem [shape: f32[1,128], index: 2, kind: input, shape index: {}]
  %s3 = inlined_call_operand.vmem [shape: f32[1,128], index: 3, kind: input, shape index: {}]
  %s4 = inlined_call_operand.vmem [shape: f32[768,128], index: 4, kind: output, shape index: {}]
  %s5 = sld [smem:[#allocation0]]
  $region49: #{graphsage_forward.13} parent=0
    _
  %s7 = ssub.s32 1, %s5
  %s8 = scalar_select 0, %s7, %s5
  loop: start=0, step=1, limit=5
  $region2: #{graphsage_forward.13} parent=0 // loop_pre_header
    _
  $region3: #{graphsage_forward.13} parent=0 // loop_header
    %s10 = sphi 0, %s14
    %p11 = scmp.ge.s32.totalorder %s10, 5
    %s20 = sphi 0, %s22
    %s23 = sphi 0, %s20
    %s24 = sphi 0, %s23
    %s40 = sphi 0, %s24
    %s44 = sphi 0, %s44
    %s46 = sphi 0, %s44
    %s47 = sphi 0, %s46
    %s61 = sphi 0, %s47
    %s65 = sphi 0, %s65
    %s67 = sphi 0, %s65
    %s68 = sphi 0, %s67
    %s82 = sphi 0, %s68
    %s86 = sphi 0, %s86
    %s88 = sphi 0, %s86
    %s89 = sphi 0, %s88
    %s103 = sphi 0, %s89
    %s109 = sphi 0, %s111
    %s112 = sphi 0, %s109
    %s113 = sphi 0, %s112
    %s129 = sphi 0, %s113
  $region4: #{graphsage_forward.13} parent=0 // loop_header_branch
    %13 = sbr.rel (%p11) target = $region8
  $region5: #{graphsage_forward.13} parent=0 // loop_body
    %s15 = ssub.s32 %s10, 1
    %s16 = ssub.s32 %s10, 2
    %s17 = sadd.s32 %s10, 1
    %s18 = ssub.s32 %s10, %s17
    %p19 = scmp.eq.s32.totalorder %s18, 0
    %s21 = sadd.s32 %s20, 1
    %s22 = scalar_select %p19, %s20, %s21
    %p25 = pneg %p19
    %p26 = scmp.eq.s32.totalorder %s10, 2
    %p27 = por %p25, %p26
    %p28 = scmp.ne.s32.totalorder %s20, %s23
    %p29 = scmp.eq.s32.totalorder %s10, 0
    %p30 = por %p28, %p29
    %p31 = scmp.ne.s32.totalorder %s20, %s23
    %p32 = scmp.eq.s32.totalorder %s15, 2
    %p33 = por %p31, %p32
    %p34 = scmp.ne.s32.totalorder %s23, %s24
    %p35 = scmp.eq.s32.totalorder %s15, 0
    %p36 = por %p34, %p35
    %p37 = scmp.ne.s32.totalorder %s23, %s24
    %p38 = scmp.eq.s32.totalorder %s16, 2
    %p39 = por %p37, %p38
    %p41 = scmp.ne.s32.totalorder %s24, %s40
    %p42 = scmp.eq.s32.totalorder %s16, 0
    %p43 = por %p41, %p42
    %s45 = sadd.s32 %s44, 1
    %p48 = scmp.eq.s32.totalorder %s10, 2
    %p49 = scmp.ne.s32.totalorder %s44, %s46
    %p50 = scmp.eq.s32.totalorder %s10, 0
    %p51 = por %p49, %p50
    %p52 = scmp.ne.s32.totalorder %s44, %s46
    %p53 = scmp.eq.s32.totalorder %s15, 2
    %p54 = por %p52, %p53
    %p55 = scmp.ne.s32.totalorder %s46, %s47
    %p56 = scmp.eq.s32.totalorder %s15, 0
    %p57 = por %p55, %p56
    %p58 = scmp.ne.s32.totalorder %s46, %s47
    %p59 = scmp.eq.s32.totalorder %s16, 2
    %p60 = por %p58, %p59
    %p62 = scmp.ne.s32.totalorder %s47, %s61
    %p63 = scmp.eq.s32.totalorder %s16, 0
    %p64 = por %p62, %p63
    %s66 = sadd.s32 %s65, 1
    %p69 = scmp.eq.s32.totalorder %s10, 2
    %p70 = scmp.ne.s32.totalorder %s65, %s67
    %p71 = scmp.eq.s32.totalorder %s10, 0
    %p72 = por %p70, %p71
    %p73 = scmp.ne.s32.totalorder %s65, %s67
    %p74 = scmp.eq.s32.totalorder %s15, 2
    %p75 = por %p73, %p74
    %p76 = scmp.ne.s32.totalorder %s67, %s68
    %p77 = scmp.eq.s32.totalorder %s15, 0
    %p78 = por %p76, %p77
    %p79 = scmp.ne.s32.totalorder %s67, %s68
    %p80 = scmp.eq.s32.totalorder %s16, 2
    %p81 = por %p79, %p80
    %p83 = scmp.ne.s32.totalorder %s68, %s82
    %p84 = scmp.eq.s32.totalorder %s16, 0
    %p85 = por %p83, %p84
    %s87 = sadd.s32 %s86, 1
    %p90 = scmp.eq.s32.totalorder %s10, 2
    %p91 = scmp.ne.s32.totalorder %s86, %s88
    %p92 = scmp.eq.s32.totalorder %s10, 0
    %p93 = por %p91, %p92
    %p94 = scmp.ne.s32.totalorder %s86, %s88
    %p95 = scmp.eq.s32.totalorder %s15, 2
    %p96 = por %p94, %p95
    %p97 = scmp.ne.s32.totalorder %s88, %s89
    %p98 = scmp.eq.s32.totalorder %s15, 0
    %p99 = por %p97, %p98
    %p100 = scmp.ne.s32.totalorder %s88, %s89
    %p101 = scmp.eq.s32.totalorder %s16, 2
    %p102 = por %p100, %p101
    %p104 = scmp.ne.s32.totalorder %s89, %s103
    %p105 = scmp.eq.s32.totalorder %s16, 0
    %p106 = por %p104, %p105
    %s107 = ssub.s32 %s10, %s17
    %p108 = scmp.eq.s32.totalorder %s107, 0
    %s110 = sadd.s32 %s109, 1
    %s111 = scalar_select %p108, %s109, %s110
    %p114 = pneg %p108
    %p115 = scmp.eq.s32.totalorder %s10, 2
    %p116 = por %p114, %p115
    %p117 = scmp.ne.s32.totalorder %s109, %s112
    %p118 = scmp.eq.s32.totalorder %s10, 0
    %p119 = por %p117, %p118
    %p120 = scmp.ne.s32.totalorder %s109, %s112
    %p121 = scmp.eq.s32.totalorder %s15, 2
    %p122 = por %p120, %p121
    %p123 = scmp.ne.s32.totalorder %s112, %s113
    %p124 = scmp.eq.s32.totalorder %s15, 0
    %p125 = por %p123, %p124
    %p126 = scmp.ne.s32.totalorder %s112, %s113
    %p127 = scmp.eq.s32.totalorder %s16, 2
    %p128 = por %p126, %p127
    %p130 = scmp.ne.s32.totalorder %s113, %s129
    %p131 = scmp.eq.s32.totalorder %s16, 0
    %p132 = por %p130, %p131
    %p133 = scmp.le.s32.totalorder 1, %s10
    %p134 = scmp.lt.s32.totalorder %s10, 4
    %p135 = pnand %p133, %p134
    %p136 = pneg %p135
    // Predicated region
    $region9: #{graphsage_forward.13} parent=5 // pred_check
      _
    $region10: #{graphsage_forward.13} parent=5 // pred_check_branch
      %138 = sbr.rel (%p135) target = $region12
    $region11: #{graphsage_forward.13} parent=5 // pred_region
      %s139 = ssub.s32 %s10, 1
      // Predicated region
      $region13: #{graphsage_forward.13} parent=11 // pred_check
        %p140 = pneg %p57
      $region14: #{graphsage_forward.13} parent=11 // pred_check_branch
        %142 = sbr.rel (%p140) target = $region16
      $region15: #{graphsage_forward.13} parent=11 // pred_region
        _
      $region16: #{graphsage_forward.13} parent=11 // pred_fallthru
        _
      // Predicated region
      $region17: #{graphsage_forward.13} parent=11 // pred_check
        %p143 = pneg %p78
      $region18: #{graphsage_forward.13} parent=11 // pred_check_branch
        %145 = sbr.rel (%p143) target = $region20
      $region19: #{graphsage_forward.13} parent=11 // pred_region
        _
      $region20: #{graphsage_forward.13} parent=11 // pred_fallthru
        _
      // Predicated region
      $region21: #{graphsage_forward.13} parent=11 // pred_check
        %p146 = pneg %p99
      $region22: #{graphsage_forward.13} parent=11 // pred_check_branch
        %148 = sbr.rel (%p146) target = $region24
      $region23: #{graphsage_forward.13} parent=11 // pred_region
        _
      $region24: #{graphsage_forward.13} parent=11 // pred_fallthru
        _
    $region12: #{graphsage_forward.13} parent=5 // pred_fallthru
      _
    %p149 = scmp.lt.s32.totalorder %s10, 3
    // Predicated region
    $region25: #{graphsage_forward.13} parent=5 // pred_check
      %p150 = pneg %p149
    $region26: #{graphsage_forward.13} parent=5 // pred_check_branch
      %152 = sbr.rel (%p150) target = $region28
    $region27: #{graphsage_forward.13} parent=5 // pred_region
      // Predicated region
      $region29: #{graphsage_forward.13} parent=27 // pred_check
        %p153 = pneg %p30
      $region30: #{graphsage_forward.13} parent=27 // pred_check_branch
        %155 = sbr.rel (%p153) target = $region32
      $region31: #{graphsage_forward.13} parent=27 // pred_region
        %s156 = smul.u32 32, %s10
        %p157 = scmp.lt.s32.totalorder %s156, 95
        %s158 = scalar_select %p157, %s156, 95
        %s159 = smul.addr %s158, 8
        %s160 = scalar_lea.vmem %s0, %s159
        %s161 = smul.u32 32, %s10
      $region32: #{graphsage_forward.13} parent=27 // pred_fallthru
        _
    $region28: #{graphsage_forward.13} parent=5 // pred_fallthru
      _
    %p162 = scmp.le.s32.totalorder 1, %s10
    %p163 = scmp.lt.s32.totalorder %s10, 4
    %p164 = pnand %p162, %p163
    %p165 = pneg %p164
    // Predicated region
    $region33: #{graphsage_forward.13} parent=5 // pred_check
      _
    $region34: #{graphsage_forward.13} parent=5 // pred_check_branch
      %167 = sbr.rel (%p164) target = $region36
    $region35: #{graphsage_forward.13} parent=5 // pred_region
      %s168 = ssub.s32 %s10, 1
      %s169 = smul.u32 32, %s15
      %p170 = scmp.lt.s32.totalorder %s169, 95
      %s171 = scalar_select %p170, %s169, 95
      %s172 = smul.addr %s171, 8
      %s173 = scalar_lea.vmem %s0, %s172
      %p174 = pneg %p36
      %p175 = pneg %p33
      %p176 = pneg %p57
      %p177 = pneg %p54
      %p178 = pneg %p78
      %p179 = pneg %p75
      %p180 = pneg %p99
      %p181 = pneg %p96
      %p182 = pneg %p125
      %p183 = pneg %p122
      %s184 = smul.u32 32, %s15
      %p185 = scmp.lt.s32.totalorder %s184, 95
      %s186 = scalar_select %p185, %s184, 95
      %s187 = smul.addr %s186, 8
      %s188 = scalar_lea.vmem %s4, %s187
      %s189 = smul.u32 32, %s15
      %p190 = scmp.lt.s32.totalorder %s189, 95
      %s191 = scalar_select %p190, %s189, 95
      %s192 = smul.addr %s191, 8
      %s193 = scalar_lea.vmem %s0, %s192
      %s194 = smul.u32 32, %s15
      %s195 = smul.u32 32, %s15
      %p196 = scmp.lt.s32.totalorder %s195, 95
      %s197 = scalar_select %p196, %s195, 95
      %s198 = smul.addr %s197, 8
      %s199 = scalar_lea.vmem %s4, %s198
      %s200 = smul.u32 32, %s15
      %v201 = vld [vmem:[%s193] sm:$0xff]
      %v202 = vld [vmem:[%s193 + $0x8] sm:$0xff]
      %v203 = vld [vmem:[%s193 + $0x10] sm:$0xff]
      %v204 = vld [vmem:[%s193 + $0x18] sm:$0xff]
      %v205 = vld [vmem:[%s193 + $0x20] sm:$0xff]
      %v206 = vld [vmem:[%s193 + $0x28] sm:$0xff]
      %v207 = vld [vmem:[%s193 + $0x30] sm:$0xff]
      %v208 = vld [vmem:[%s193 + $0x38] sm:$0xff]
      %v209 = vld [vmem:[%s193 + $0x40] sm:$0xff]
      %v210 = vld [vmem:[%s193 + $0x48] sm:$0xff]
      %v211 = vld [vmem:[%s193 + $0x50] sm:$0xff]
      %v212 = vld [vmem:[%s193 + $0x58] sm:$0xff]
      %v213 = vld [vmem:[%s193 + $0x60] sm:$0xff]
      %v214 = vld [vmem:[%s193 + $0x68] sm:$0xff]
      %v215 = vld [vmem:[%s193 + $0x70] sm:$0xff]
      %v216 = vld [vmem:[%s193 + $0x78] sm:$0xff]
      %v217 = vld [vmem:[%s193 + $0x80] sm:$0xff]
      %v218 = vld [vmem:[%s193 + $0x88] sm:$0xff]
      %v219 = vld [vmem:[%s193 + $0x90] sm:$0xff]
      %v220 = vld [vmem:[%s193 + $0x98] sm:$0xff]
      %v221 = vld [vmem:[%s193 + $0xa0] sm:$0xff]
      %v222 = vld [vmem:[%s193 + $0xa8] sm:$0xff]
      %v223 = vld [vmem:[%s193 + $0xb0] sm:$0xff]
      %v224 = vld [vmem:[%s193 + $0xb8] sm:$0xff]
      %v225 = vld [vmem:[%s193 + $0xc0] sm:$0xff]
      %v226 = vld [vmem:[%s193 + $0xc8] sm:$0xff]
      %v227 = vld [vmem:[%s193 + $0xd0] sm:$0xff]
      %v228 = vld [vmem:[%s193 + $0xd8] sm:$0xff]
      %v229 = vld [vmem:[%s193 + $0xe0] sm:$0xff]
      %v230 = vld [vmem:[%s193 + $0xe8] sm:$0xff]
      %v231 = vld [vmem:[%s193 + $0xf0] sm:$0xff]
      %v232 = vld [vmem:[%s193 + $0xf8] sm:$0xff]
      %v233 = vld [vmem:[%s1] sm:$0x1]
      %v234 = vmul.f32 %v233, 0.0016666667
      %v235 = vld [vmem:[%s1 + $0x1] sm:$0x1]
      %v236 = vmul.f32 %v235, 0.0016666667
      %v237 = vmul.f32 %v234, %v234
      %v238 = vsub.f32 %v236, %v237
      %v239 = vmax.f32 %v238, 0.0
      %v240 = vadd.f32 %v239, 1e-05
      %v241 = vrsqrt.pop %v240
      %v242 = vmul.f32 %v241, %v240
      %v243 = vmul.f32 %v242, %v241
      %v244 = vmul.f32 0.5, %v243
      %v245 = vsub.f32 1.5, %v244
      %v246 = vmul.f32 %v241, %v245
      %vm247 = vweird.f32 %v240
      %vm248 = vweird.f32 %v241
      %vm249 = vmor %vm247, %vm248
      %v250 = vsel %vm249, %v241, %v246
      %v251 = vperm.slane %v234, 0
      %v252 = vsub.f32 %v201, %v251
      %v253 = vsub.f32 %v202, %v251
      %v254 = vsub.f32 %v203, %v251
      %v255 = vsub.f32 %v204, %v251
      %v256 = vsub.f32 %v205, %v251
      %v257 = vsub.f32 %v206, %v251
      %v258 = vsub.f32 %v207, %v251
      %v259 = vsub.f32 %v208, %v251
      %v260 = vsub.f32 %v209, %v251
      %v261 = vsub.f32 %v210, %v251
      %v262 = vsub.f32 %v211, %v251
      %v263 = vsub.f32 %v212, %v251
      %v264 = vsub.f32 %v213, %v251
      %v265 = vsub.f32 %v214, %v251
      %v266 = vsub.f32 %v215, %v251
      %v267 = vsub.f32 %v216, %v251
      %v268 = vsub.f32 %v217, %v251
      %v269 = vsub.f32 %v218, %v251
      %v270 = vsub.f32 %v219, %v251
      %v271 = vsub.f32 %v220, %v251
      %v272 = vsub.f32 %v221, %v251
      %v273 = vsub.f32 %v222, %v251
      %v274 = vsub.f32 %v223, %v251
      %v275 = vsub.f32 %v224, %v251
      %v276 = vsub.f32 %v225, %v251
      %v277 = vsub.f32 %v226, %v251
      %v278 = vsub.f32 %v227, %v251
      %v279 = vsub.f32 %v228, %v251
      %v280 = vsub.f32 %v229, %v251
      %v281 = vsub.f32 %v230, %v251
      %v282 = vsub.f32 %v231, %v251
      %v283 = vsub.f32 %v232, %v251
      %v284 = vld [vmem:[%s2] sm:$0x1]
      %v285 = vmul.f32 %v250, %v284
      %v286 = vperm.slane %v285, 0
      %v287 = vmul.f32 %v252, %v286
      %v288 = vmul.f32 %v253, %v286
      %v289 = vmul.f32 %v254, %v286
      %v290 = vmul.f32 %v255, %v286
      %v291 = vmul.f32 %v256, %v286
      %v292 = vmul.f32 %v257, %v286
      %v293 = vmul.f32 %v258, %v286
      %v294 = vmul.f32 %v259, %v286
      %v295 = vmul.f32 %v260, %v286
      %v296 = vmul.f32 %v261, %v286
      %v297 = vmul.f32 %v262, %v286
      %v298 = vmul.f32 %v263, %v286
      %v299 = vmul.f32 %v264, %v286
      %v300 = vmul.f32 %v265, %v286
      %v301 = vmul.f32 %v266, %v286
      %v302 = vmul.f32 %v267, %v286
      %v303 = vmul.f32 %v268, %v286
      %v304 = vmul.f32 %v269, %v286
      %v305 = vmul.f32 %v270, %v286
      %v306 = vmul.f32 %v271, %v286
      %v307 = vmul.f32 %v272, %v286
      %v308 = vmul.f32 %v273, %v286
      %v309 = vmul.f32 %v274, %v286
      %v310 = vmul.f32 %v275, %v286
      %v311 = vmul.f32 %v276, %v286
      %v312 = vmul.f32 %v277, %v286
      %v313 = vmul.f32 %v278, %v286
      %v314 = vmul.f32 %v279, %v286
      %v315 = vmul.f32 %v280, %v286
      %v316 = vmul.f32 %v281, %v286
      %v317 = vmul.f32 %v282, %v286
      %v318 = vmul.f32 %v283, %v286
      %v319 = vld [vmem:[%s3] sm:$0x1]
      %v321 = vperm.slane %v319, 0
      %v323 = vadd.f32 %v287, %v321
      %v324 = vadd.f32 %v288, %v321
      %v325 = vadd.f32 %v289, %v321
      %v326 = vadd.f32 %v290, %v321
      %v327 = vadd.f32 %v291, %v321
      %v328 = vadd.f32 %v292, %v321
      %v329 = vadd.f32 %v293, %v321
      %v330 = vadd.f32 %v294, %v321
      %v331 = vadd.f32 %v295, %v321
      %v332 = vadd.f32 %v296, %v321
      %v333 = vadd.f32 %v297, %v321
      %v334 = vadd.f32 %v298, %v321
      %v335 = vadd.f32 %v299, %v321
      %v336 = vadd.f32 %v300, %v321
      %v337 = vadd.f32 %v301, %v321
      %v338 = vadd.f32 %v302, %v321
      %v339 = vadd.f32 %v303, %v321
      %v340 = vadd.f32 %v304, %v321
      %v341 = vadd.f32 %v305, %v321
      %v342 = vadd.f32 %v306, %v321
      %v343 = vadd.f32 %v307, %v321
      %v344 = vadd.f32 %v308, %v321
      %v345 = vadd.f32 %v309, %v321
      %v346 = vadd.f32 %v310, %v321
      %v347 = vadd.f32 %v311, %v321
      %v348 = vadd.f32 %v312, %v321
      %v349 = vadd.f32 %v313, %v321
      %v350 = vadd.f32 %v314, %v321
      %v351 = vadd.f32 %v315, %v321
      %v352 = vadd.f32 %v316, %v321
      %v353 = vadd.f32 %v317, %v321
      %v354 = vadd.f32 %v318, %v321
      %v355 = vmax.f32 %v323, 0.0
      %v356 = vmax.f32 %v324, 0.0
      %v357 = vmax.f32 %v325, 0.0
      %v358 = vmax.f32 %v326, 0.0
      %v359 = vmax.f32 %v327, 0.0
      %v360 = vmax.f32 %v328, 0.0
      %v361 = vmax.f32 %v329, 0.0
      %v362 = vmax.f32 %v330, 0.0
      %v363 = vmax.f32 %v331, 0.0
      %v364 = vmax.f32 %v332, 0.0
      %v365 = vmax.f32 %v333, 0.0
      %v366 = vmax.f32 %v334, 0.0
      %v367 = vmax.f32 %v335, 0.0
      %v368 = vmax.f32 %v336, 0.0
      %v369 = vmax.f32 %v337, 0.0
      %v370 = vmax.f32 %v338, 0.0
      %v371 = vmax.f32 %v339, 0.0
      %v372 = vmax.f32 %v340, 0.0
      %v373 = vmax.f32 %v341, 0.0
      %v374 = vmax.f32 %v342, 0.0
      %v375 = vmax.f32 %v343, 0.0
      %v376 = vmax.f32 %v344, 0.0
      %v377 = vmax.f32 %v345, 0.0
      %v378 = vmax.f32 %v346, 0.0
      %v379 = vmax.f32 %v347, 0.0
      %v380 = vmax.f32 %v348, 0.0
      %v381 = vmax.f32 %v349, 0.0
      %v382 = vmax.f32 %v350, 0.0
      %v383 = vmax.f32 %v351, 0.0
      %v384 = vmax.f32 %v352, 0.0
      %v385 = vmax.f32 %v353, 0.0
      %v386 = vmax.f32 %v354, 0.0
      %387 = vst [vmem:[%s199] sm:$0xff] %v355
      %388 = vst [vmem:[%s199 + $0x8] sm:$0xff] %v356
      %389 = vst [vmem:[%s199 + $0x10] sm:$0xff] %v357
      %390 = vst [vmem:[%s199 + $0x18] sm:$0xff] %v358
      %391 = vst [vmem:[%s199 + $0x20] sm:$0xff] %v359
      %392 = vst [vmem:[%s199 + $0x28] sm:$0xff] %v360
      %393 = vst [vmem:[%s199 + $0x30] sm:$0xff] %v361
      %394 = vst [vmem:[%s199 + $0x38] sm:$0xff] %v362
      %395 = vst [vmem:[%s199 + $0x40] sm:$0xff] %v363
      %396 = vst [vmem:[%s199 + $0x48] sm:$0xff] %v364
      %397 = vst [vmem:[%s199 + $0x50] sm:$0xff] %v365
      %398 = vst [vmem:[%s199 + $0x58] sm:$0xff] %v366
      %399 = vst [vmem:[%s199 + $0x60] sm:$0xff] %v367
      %400 = vst [vmem:[%s199 + $0x68] sm:$0xff] %v368
      %401 = vst [vmem:[%s199 + $0x70] sm:$0xff] %v369
      %402 = vst [vmem:[%s199 + $0x78] sm:$0xff] %v370
      %403 = vst [vmem:[%s199 + $0x80] sm:$0xff] %v371
      %404 = vst [vmem:[%s199 + $0x88] sm:$0xff] %v372
      %405 = vst [vmem:[%s199 + $0x90] sm:$0xff] %v373
      %406 = vst [vmem:[%s199 + $0x98] sm:$0xff] %v374
      %407 = vst [vmem:[%s199 + $0xa0] sm:$0xff] %v375
      %408 = vst [vmem:[%s199 + $0xa8] sm:$0xff] %v376
      %409 = vst [vmem:[%s199 + $0xb0] sm:$0xff] %v377
      %410 = vst [vmem:[%s199 + $0xb8] sm:$0xff] %v378
      %411 = vst [vmem:[%s199 + $0xc0] sm:$0xff] %v379
      %412 = vst [vmem:[%s199 + $0xc8] sm:$0xff] %v380
      %413 = vst [vmem:[%s199 + $0xd0] sm:$0xff] %v381
      %414 = vst [vmem:[%s199 + $0xd8] sm:$0xff] %v382
      %415 = vst [vmem:[%s199 + $0xe0] sm:$0xff] %v383
      %416 = vst [vmem:[%s199 + $0xe8] sm:$0xff] %v384
      %417 = vst [vmem:[%s199 + $0xf0] sm:$0xff] %v385
      %418 = vst [vmem:[%s199 + $0xf8] sm:$0xff] %v386
      %s419 = smul.u32 32, %s15
      %p420 = scmp.lt.s32.totalorder %s419, 95
      %s421 = scalar_select %p420, %s419, 95
      %s422 = smul.addr %s421, 8
      %s423 = scalar_lea.vmem %s4, %s422
      // Predicated region
      $region37: #{graphsage_forward.13} parent=35 // pred_check
        %p424 = pneg %p122
      $region38: #{graphsage_forward.13} parent=35 // pred_check_branch
        %426 = sbr.rel (%p424) target = $region40
      $region39: #{graphsage_forward.13} parent=35 // pred_region
        %s427 = smul.u32 32, %s15
      $region40: #{graphsage_forward.13} parent=35 // pred_fallthru
        _
    $region36: #{graphsage_forward.13} parent=5 // pred_fallthru
      _
    %p428 = scmp.le.s32.totalorder 2, %s10
    // Predicated region
    $region41: #{graphsage_forward.13} parent=5 // pred_check
      %p429 = pneg %p428
    $region42: #{graphsage_forward.13} parent=5 // pred_check_branch
      %431 = sbr.rel (%p429) target = $region44
    $region43: #{graphsage_forward.13} parent=5 // pred_region
      %s432 = ssub.s32 %s10, 2
      // Predicated region
      $region45: #{graphsage_forward.13} parent=43 // pred_check
        %p433 = pneg %p128
      $region46: #{graphsage_forward.13} parent=43 // pred_check_branch
        %435 = sbr.rel (%p433) target = $region48
      $region47: #{graphsage_forward.13} parent=43 // pred_region
        %s436 = smul.u32 32, %s16
        %p437 = scmp.lt.s32.totalorder %s436, 95
        %s438 = scalar_select %p437, %s436, 95
        %s439 = smul.addr %s438, 8
        %s440 = scalar_lea.vmem %s4, %s439
      $region48: #{graphsage_forward.13} parent=43 // pred_fallthru
        _
    $region44: #{graphsage_forward.13} parent=5 // pred_fallthru
      _
  $region6: #{graphsage_forward.13} parent=0 // loop_footer
    %s14 = sadd.s32 1, %s10
  $region7: #{graphsage_forward.13} parent=0 // loop_footer_branch
    %9 = sbr.rel target = $region3
  $region8: #{graphsage_forward.13} parent=0 // loop_exit
    _

// kernel: graphsage_forward.10
$region0: #{graphsage_forward.10}
  #allocation0 [shape = 'u32[]', space=smem, size = 0x4, offset = 0x4, fixed_abs, tag = 'smem constant byte address 0x4 - core index']
  #allocation1 [shape = 'u32[72,128]{1,0:T(1,128)}', space=vmem, size = 0x9000, scoped, tag = 'internal scratch']
  %s0 = inlined_call_operand.vmem [shape: f32[768,128], index: 0, kind: input, shape index: {}]
  %s1 = inlined_call_operand.vmem [shape: f32[128,128], index: 1, kind: input, shape index: {}]
  %s2 = inlined_call_operand.vmem [shape: f32[128,128], index: 2, kind: input, shape index: {}]
  %s3 = inlined_call_operand.vmem [shape: f32[1,128], index: 3, kind: input, shape index: {}]
  %s4 = inlined_call_operand.vmem [shape: f32[768,128], index: 4, kind: output, shape index: {0}]
  %s5 = inlined_call_operand.vmem [shape: bf16[768,128], index: 5, kind: output, shape index: {1}]
  %6 = xla_tuple %s4, %s5
  %s7 = sld [smem:[#allocation0]]
  $region57: #{graphsage_forward.10} parent=0
    _
  %s9 = ssub.s32 1, %s7
  %s10 = scalar_select 0, %s9, %s7
  loop: start=0, step=1, limit=5
  $region2: #{graphsage_forward.10} parent=0 // loop_pre_header
    _
  $region3: #{graphsage_forward.10} parent=0 // loop_header
    %s12 = sphi 0, %s16
    %p13 = scmp.ge.s32.totalorder %s12, 5
    %s22 = sphi 0, %s24
    %s25 = sphi 0, %s22
    %s26 = sphi 0, %s25
    %s42 = sphi 0, %s26
    %s46 = sphi 0, %s46
    %s48 = sphi 0, %s46
    %s49 = sphi 0, %s48
    %s63 = sphi 0, %s49
    %s67 = sphi 0, %s67
    %s69 = sphi 0, %s67
    %s70 = sphi 0, %s69
    %s84 = sphi 0, %s70
    %s88 = sphi 0, %s88
    %s90 = sphi 0, %s88
    %s91 = sphi 0, %s90
    %s105 = sphi 0, %s91
    %s111 = sphi 0, %s113
    %s114 = sphi 0, %s111
    %s115 = sphi 0, %s114
    %s131 = sphi 0, %s115
    %s137 = sphi 0, %s139
    %s140 = sphi 0, %s137
    %s141 = sphi 0, %s140
    %s157 = sphi 0, %s141
  $region4: #{graphsage_forward.10} parent=0 // loop_header_branch
    %15 = sbr.rel (%p13) target = $region8
  $region5: #{graphsage_forward.10} parent=0 // loop_body
    %s17 = ssub.s32 %s12, 1
    %s18 = ssub.s32 %s12, 2
    %s19 = sadd.s32 %s12, 1
    %s20 = ssub.s32 %s12, %s19
    %p21 = scmp.eq.s32.totalorder %s20, 0
    %s23 = sadd.s32 %s22, 1
    %s24 = scalar_select %p21, %s22, %s23
    %p27 = pneg %p21
    %p28 = scmp.eq.s32.totalorder %s12, 2
    %p29 = por %p27, %p28
    %p30 = scmp.ne.s32.totalorder %s22, %s25
    %p31 = scmp.eq.s32.totalorder %s12, 0
    %p32 = por %p30, %p31
    %p33 = scmp.ne.s32.totalorder %s22, %s25
    %p34 = scmp.eq.s32.totalorder %s17, 2
    %p35 = por %p33, %p34
    %p36 = scmp.ne.s32.totalorder %s25, %s26
    %p37 = scmp.eq.s32.totalorder %s17, 0
    %p38 = por %p36, %p37
    %p39 = scmp.ne.s32.totalorder %s25, %s26
    %p40 = scmp.eq.s32.totalorder %s18, 2
    %p41 = por %p39, %p40
    %p43 = scmp.ne.s32.totalorder %s26, %s42
    %p44 = scmp.eq.s32.totalorder %s18, 0
    %p45 = por %p43, %p44
    %s47 = sadd.s32 %s46, 1
    %p50 = scmp.eq.s32.totalorder %s12, 2
    %p51 = scmp.ne.s32.totalorder %s46, %s48
    %p52 = scmp.eq.s32.totalorder %s12, 0
    %p53 = por %p51, %p52
    %p54 = scmp.ne.s32.totalorder %s46, %s48
    %p55 = scmp.eq.s32.totalorder %s17, 2
    %p56 = por %p54, %p55
    %p57 = scmp.ne.s32.totalorder %s48, %s49
    %p58 = scmp.eq.s32.totalorder %s17, 0
    %p59 = por %p57, %p58
    %p60 = scmp.ne.s32.totalorder %s48, %s49
    %p61 = scmp.eq.s32.totalorder %s18, 2
    %p62 = por %p60, %p61
    %p64 = scmp.ne.s32.totalorder %s49, %s63
    %p65 = scmp.eq.s32.totalorder %s18, 0
    %p66 = por %p64, %p65
    %s68 = sadd.s32 %s67, 1
    %p71 = scmp.eq.s32.totalorder %s12, 2
    %p72 = scmp.ne.s32.totalorder %s67, %s69
    %p73 = scmp.eq.s32.totalorder %s12, 0
    %p74 = por %p72, %p73
    %p75 = scmp.ne.s32.totalorder %s67, %s69
    %p76 = scmp.eq.s32.totalorder %s17, 2
    %p77 = por %p75, %p76
    %p78 = scmp.ne.s32.totalorder %s69, %s70
    %p79 = scmp.eq.s32.totalorder %s17, 0
    %p80 = por %p78, %p79
    %p81 = scmp.ne.s32.totalorder %s69, %s70
    %p82 = scmp.eq.s32.totalorder %s18, 2
    %p83 = por %p81, %p82
    %p85 = scmp.ne.s32.totalorder %s70, %s84
    %p86 = scmp.eq.s32.totalorder %s18, 0
    %p87 = por %p85, %p86
    %s89 = sadd.s32 %s88, 1
    %p92 = scmp.eq.s32.totalorder %s12, 2
    %p93 = scmp.ne.s32.totalorder %s88, %s90
    %p94 = scmp.eq.s32.totalorder %s12, 0
    %p95 = por %p93, %p94
    %p96 = scmp.ne.s32.totalorder %s88, %s90
    %p97 = scmp.eq.s32.totalorder %s17, 2
    %p98 = por %p96, %p97
    %p99 = scmp.ne.s32.totalorder %s90, %s91
    %p100 = scmp.eq.s32.totalorder %s17, 0
    %p101 = por %p99, %p100
    %p102 = scmp.ne.s32.totalorder %s90, %s91
    %p103 = scmp.eq.s32.totalorder %s18, 2
    %p104 = por %p102, %p103
    %p106 = scmp.ne.s32.totalorder %s91, %s105
    %p107 = scmp.eq.s32.totalorder %s18, 0
    %p108 = por %p106, %p107
    %s109 = ssub.s32 %s12, %s19
    %p110 = scmp.eq.s32.totalorder %s109, 0
    %s112 = sadd.s32 %s111, 1
    %s113 = scalar_select %p110, %s111, %s112
    %p116 = pneg %p110
    %p117 = scmp.eq.s32.totalorder %s12, 2
    %p118 = por %p116, %p117
    %p119 = scmp.ne.s32.totalorder %s111, %s114
    %p120 = scmp.eq.s32.totalorder %s12, 0
    %p121 = por %p119, %p120
    %p122 = scmp.ne.s32.totalorder %s111, %s114
    %p123 = scmp.eq.s32.totalorder %s17, 2
    %p124 = por %p122, %p123
    %p125 = scmp.ne.s32.totalorder %s114, %s115
    %p126 = scmp.eq.s32.totalorder %s17, 0
    %p127 = por %p125, %p126
    %p128 = scmp.ne.s32.totalorder %s114, %s115
    %p129 = scmp.eq.s32.totalorder %s18, 2
    %p130 = por %p128, %p129
    %p132 = scmp.ne.s32.totalorder %s115, %s131
    %p133 = scmp.eq.s32.totalorder %s18, 0
    %p134 = por %p132, %p133
    %s135 = ssub.s32 %s12, %s19
    %p136 = scmp.eq.s32.totalorder %s135, 0
    %s138 = sadd.s32 %s137, 1
    %s139 = scalar_select %p136, %s137, %s138
    %p142 = pneg %p136
    %p143 = scmp.eq.s32.totalorder %s12, 2
    %p144 = por %p142, %p143
    %p145 = scmp.ne.s32.totalorder %s137, %s140
    %p146 = scmp.eq.s32.totalorder %s12, 0
    %p147 = por %p145, %p146
    %p148 = scmp.ne.s32.totalorder %s137, %s140
    %p149 = scmp.eq.s32.totalorder %s17, 2
    %p150 = por %p148, %p149
    %p151 = scmp.ne.s32.totalorder %s140, %s141
    %p152 = scmp.eq.s32.totalorder %s17, 0
    %p153 = por %p151, %p152
    %p154 = scmp.ne.s32.totalorder %s140, %s141
    %p155 = scmp.eq.s32.totalorder %s18, 2
    %p156 = por %p154, %p155
    %p158 = scmp.ne.s32.totalorder %s141, %s157
    %p159 = scmp.eq.s32.totalorder %s18, 0
    %p160 = por %p158, %p159
    %p161 = scmp.le.s32.totalorder 1, %s12
    %p162 = scmp.lt.s32.totalorder %s12, 4
    %p163 = pnand %p161, %p162
    %p164 = pneg %p163
    // Predicated region
    $region9: #{graphsage_forward.10} parent=5 // pred_check
      _
    $region10: #{graphsage_forward.10} parent=5 // pred_check_branch
      %166 = sbr.rel (%p163) target = $region12
    $region11: #{graphsage_forward.10} parent=5 // pred_region
      %s167 = ssub.s32 %s12, 1
      // Predicated region
      $region13: #{graphsage_forward.10} parent=11 // pred_check
        %p168 = pneg %p59
      $region14: #{graphsage_forward.10} parent=11 // pred_check_branch
        %170 = sbr.rel (%p168) target = $region16
      $region15: #{graphsage_forward.10} parent=11 // pred_region
        _
      $region16: #{graphsage_forward.10} parent=11 // pred_fallthru
        _
      // Predicated region
      $region17: #{graphsage_forward.10} parent=11 // pred_check
        %p171 = pneg %p80
      $region18: #{graphsage_forward.10} parent=11 // pred_check_branch
        %173 = sbr.rel (%p171) target = $region20
      $region19: #{graphsage_forward.10} parent=11 // pred_region
        _
      $region20: #{graphsage_forward.10} parent=11 // pred_fallthru
        _
      // Predicated region
      $region21: #{graphsage_forward.10} parent=11 // pred_check
        %p174 = pneg %p101
      $region22: #{graphsage_forward.10} parent=11 // pred_check_branch
        %176 = sbr.rel (%p174) target = $region24
      $region23: #{graphsage_forward.10} parent=11 // pred_region
        _
      $region24: #{graphsage_forward.10} parent=11 // pred_fallthru
        _
    $region12: #{graphsage_forward.10} parent=5 // pred_fallthru
      _
    %p177 = scmp.lt.s32.totalorder %s12, 3
    // Predicated region
    $region25: #{graphsage_forward.10} parent=5 // pred_check
      %p178 = pneg %p177
    $region26: #{graphsage_forward.10} parent=5 // pred_check_branch
      %180 = sbr.rel (%p178) target = $region28
    $region27: #{graphsage_forward.10} parent=5 // pred_region
      // Predicated region
      $region29: #{graphsage_forward.10} parent=27 // pred_check
        %p181 = pneg %p32
      $region30: #{graphsage_forward.10} parent=27 // pred_check_branch
        %183 = sbr.rel (%p181) target = $region32
      $region31: #{graphsage_forward.10} parent=27 // pred_region
        %s184 = smul.u32 32, %s12
        %p185 = scmp.lt.s32.totalorder %s184, 95
        %s186 = scalar_select %p185, %s184, 95
        %s187 = smul.addr %s186, 8
        %s188 = scalar_lea.vmem %s0, %s187
        %s189 = smul.u32 32, %s12
      $region32: #{graphsage_forward.10} parent=27 // pred_fallthru
        _
    $region28: #{graphsage_forward.10} parent=5 // pred_fallthru
      _
    %p190 = scmp.le.s32.totalorder 1, %s12
    %p191 = scmp.lt.s32.totalorder %s12, 4
    %p192 = pnand %p190, %p191
    %p193 = pneg %p192
    // Predicated region
    $region33: #{graphsage_forward.10} parent=5 // pred_check
      _
    $region34: #{graphsage_forward.10} parent=5 // pred_check_branch
      %195 = sbr.rel (%p192) target = $region36
    $region35: #{graphsage_forward.10} parent=5 // pred_region
      %s196 = ssub.s32 %s12, 1
      %s197 = smul.u32 32, %s17
      %p198 = scmp.lt.s32.totalorder %s197, 95
      %s199 = scalar_select %p198, %s197, 95
      %s200 = smul.addr %s199, 8
      %s201 = scalar_lea.vmem %s0, %s200
      %p202 = pneg %p38
      %p203 = pneg %p35
      %p204 = pneg %p59
      %p205 = pneg %p56
      %p206 = pneg %p80
      %p207 = pneg %p77
      %p208 = pneg %p101
      %p209 = pneg %p98
      %p210 = pneg %p127
      %p211 = pneg %p124
      %s212 = smul.u32 32, %s17
      %p213 = scmp.lt.s32.totalorder %s212, 95
      %s214 = scalar_select %p213, %s212, 95
      %s215 = smul.addr %s214, 8
      %s216 = scalar_lea.vmem %s4, %s215
      %p217 = pneg %p153
      %p218 = pneg %p150
      %s219 = smul.u32 32, %s17
      %p220 = scmp.lt.s32.totalorder %s219, 95
      %s221 = scalar_select %p220, %s219, 95
      %s222 = smul.addr %s221, 4
      %s223 = scalar_lea.vmem %s5, %s222
      %s224 = smul.u32 32, %s17
      %p225 = scmp.lt.s32.totalorder %s224, 95
      %s226 = scalar_select %p225, %s224, 95
      %s227 = smul.addr %s226, 8
      %s228 = scalar_lea.vmem %s0, %s227
      %s229 = smul.u32 32, %s17
      %s230 = smul.u32 32, %s17
      %p231 = scmp.lt.s32.totalorder %s230, 95
      %s232 = scalar_select %p231, %s230, 95
      %s233 = smul.addr %s232, 8
      %s234 = scalar_lea.vmem %s4, %s233
      %s235 = smul.u32 32, %s17
      %s236 = smul.u32 32, %s17
      %p237 = scmp.lt.s32.totalorder %s236, 95
      %s238 = scalar_select %p237, %s236, 95
      %s239 = smul.addr %s238, 4
      %s240 = scalar_lea.vmem %s5, %s239
      %s241 = smul.u32 32, %s17
      %v242 = vld [vmem:[%s228] sm:$0xff]
      %v243 = vld [vmem:[%s228 + $0x8] sm:$0xff]
      %v244 = vld [vmem:[%s228 + $0x10] sm:$0xff]
      %v245 = vld [vmem:[%s228 + $0x18] sm:$0xff]
      %v246 = vld [vmem:[%s228 + $0x20] sm:$0xff]
      %v247 = vld [vmem:[%s228 + $0x28] sm:$0xff]
      %v248 = vld [vmem:[%s228 + $0x30] sm:$0xff]
      %v249 = vld [vmem:[%s228 + $0x38] sm:$0xff]
      %v250 = vld [vmem:[%s228 + $0x40] sm:$0xff]
      %v251 = vld [vmem:[%s228 + $0x48] sm:$0xff]
      %v252 = vld [vmem:[%s228 + $0x50] sm:$0xff]
      %v253 = vld [vmem:[%s228 + $0x58] sm:$0xff]
      %v254 = vld [vmem:[%s228 + $0x60] sm:$0xff]
      %v255 = vld [vmem:[%s228 + $0x68] sm:$0xff]
      %v256 = vld [vmem:[%s228 + $0x70] sm:$0xff]
      %v257 = vld [vmem:[%s228 + $0x78] sm:$0xff]
      %v258 = vld [vmem:[%s228 + $0x80] sm:$0xff]
      %v259 = vld [vmem:[%s228 + $0x88] sm:$0xff]
      %v260 = vld [vmem:[%s228 + $0x90] sm:$0xff]
      %v261 = vld [vmem:[%s228 + $0x98] sm:$0xff]
      %v262 = vld [vmem:[%s228 + $0xa0] sm:$0xff]
      %v263 = vld [vmem:[%s228 + $0xa8] sm:$0xff]
      %v264 = vld [vmem:[%s228 + $0xb0] sm:$0xff]
      %v265 = vld [vmem:[%s228 + $0xb8] sm:$0xff]
      %v266 = vld [vmem:[%s228 + $0xc0] sm:$0xff]
      %v267 = vld [vmem:[%s228 + $0xc8] sm:$0xff]
      %v268 = vld [vmem:[%s228 + $0xd0] sm:$0xff]
      %v269 = vld [vmem:[%s228 + $0xd8] sm:$0xff]
      %v270 = vld [vmem:[%s228 + $0xe0] sm:$0xff]
      %v271 = vld [vmem:[%s228 + $0xe8] sm:$0xff]
      %v272 = vld [vmem:[%s228 + $0xf0] sm:$0xff]
      %v273 = vld [vmem:[%s228 + $0xf8] sm:$0xff]
      %v274 = vld [vmem:[%s1] sm:$0xff]
      %v275 = vld [vmem:[%s1 + $0x8] sm:$0xff]
      %v276 = vld [vmem:[%s1 + $0x10] sm:$0xff]
      %v277 = vld [vmem:[%s1 + $0x18] sm:$0xff]
      %v278 = vld [vmem:[%s1 + $0x20] sm:$0xff]
      %v279 = vld [vmem:[%s1 + $0x28] sm:$0xff]
      %v280 = vld [vmem:[%s1 + $0x30] sm:$0xff]
      %v281 = vld [vmem:[%s1 + $0x38] sm:$0xff]
      %v282 = vld [vmem:[%s1 + $0x40] sm:$0xff]
      %v283 = vld [vmem:[%s1 + $0x48] sm:$0xff]
      %v284 = vld [vmem:[%s1 + $0x50] sm:$0xff]
      %v285 = vld [vmem:[%s1 + $0x58] sm:$0xff]
      %v286 = vld [vmem:[%s1 + $0x60] sm:$0xff]
      %v287 = vld [vmem:[%s1 + $0x68] sm:$0xff]
      %v288 = vld [vmem:[%s1 + $0x70] sm:$0xff]
      %v289 = vld [vmem:[%s1 + $0x78] sm:$0xff]
      %v290 = vld [vmem:[%s3] sm:$0x1]
      %v292 = vperm.slane %v290, 0
      %294 = vmatpush.msra.mxu0 %v289
      %295 = vmatpush.msra.mxu0 %v288
      %296 = vmatpush.msra.mxu0 %v287
      %297 = vmatpush.msra.mxu0 %v286
      %298 = vmatpush.msra.mxu0 %v285
      %299 = vmatpush.msra.mxu0 %v284
      %300 = vmatpush.msra.mxu0 %v283
      %301 = vmatpush.msra.mxu0 %v282
      %302 = vmatpush.msra.mxu0 %v281
      %303 = vmatpush.msra.mxu0 %v280
      %304 = vmatpush.msra.mxu0 %v279
      %305 = vmatpush.msra.mxu0 %v278
      %306 = vmatpush.msra.mxu0 %v277
      %307 = vmatpush.msra.mxu0 %v276
      %308 = vmatpush.msra.mxu0 %v275
      %309 = vmatpush.msra.mxu0 %v274
      %310 = vmatmul.f32.gmra.mxu0 %v242
      %v311 = vpop.f32.mrf.mxu0
      %v312 = vadd.f32 %v292, %v311
      %313 = vmatmul.f32.gmra.mxu0 %v243
      %v314 = vpop.f32.mrf.mxu0
      %v315 = vadd.f32 %v292, %v314
      %316 = vmatmul.f32.gmra.mxu0 %v244
      %v317 = vpop.f32.mrf.mxu0
      %v318 = vadd.f32 %v292, %v317
      %319 = vmatmul.f32.gmra.mxu0 %v245
      %v320 = vpop.f32.mrf.mxu0
      %v321 = vadd.f32 %v292, %v320
      %322 = vmatmul.f32.gmra.mxu0 %v246
      %v323 = vpop.f32.mrf.mxu0
      %v324 = vadd.f32 %v292, %v323
      %325 = vmatmul.f32.gmra.mxu0 %v247
      %v326 = vpop.f32.mrf.mxu0
      %v327 = vadd.f32 %v292, %v326
      %328 = vmatmul.f32.gmra.mxu0 %v248
      %v329 = vpop.f32.mrf.mxu0
      %v330 = vadd.f32 %v292, %v329
      %331 = vmatmul.f32.gmra.mxu0 %v249
      %v332 = vpop.f32.mrf.mxu0
      %v333 = vadd.f32 %v292, %v332
      %334 = vmatmul.f32.gmra.mxu0 %v250
      %v335 = vpop.f32.mrf.mxu0
      %v336 = vadd.f32 %v292, %v335
      %337 = vmatmul.f32.gmra.mxu0 %v251
      %v338 = vpop.f32.mrf.mxu0
      %v339 = vadd.f32 %v292, %v338
      %340 = vmatmul.f32.gmra.mxu0 %v252
      %v341 = vpop.f32.mrf.mxu0
      %v342 = vadd.f32 %v292, %v341
      %343 = vmatmul.f32.gmra.mxu0 %v253
      %v344 = vpop.f32.mrf.mxu0
      %v345 = vadd.f32 %v292, %v344
      %346 = vmatmul.f32.gmra.mxu0 %v254
      %v347 = vpop.f32.mrf.mxu0
      %v348 = vadd.f32 %v292, %v347
      %349 = vmatmul.f32.gmra.mxu0 %v255
      %v350 = vpop.f32.mrf.mxu0
      %v351 = vadd.f32 %v292, %v350
      %352 = vmatmul.f32.gmra.mxu0 %v256
      %v353 = vpop.f32.mrf.mxu0
      %v354 = vadd.f32 %v292, %v353
      %355 = vmatmul.f32.gmra.mxu0 %v257
      %v356 = vpop.f32.mrf.mxu0
      %v357 = vadd.f32 %v292, %v356
      %358 = vmatmul.f32.gmra.mxu0 %v258
      %v359 = vpop.f32.mrf.mxu0
      %v360 = vadd.f32 %v292, %v359
      %361 = vmatmul.f32.gmra.mxu0 %v259
      %v362 = vpop.f32.mrf.mxu0
      %v363 = vadd.f32 %v292, %v362
      %364 = vmatmul.f32.gmra.mxu0 %v260
      %v365 = vpop.f32.mrf.mxu0
      %v366 = vadd.f32 %v292, %v365
      %367 = vmatmul.f32.gmra.mxu0 %v261
      %v368 = vpop.f32.mrf.mxu0
      %v369 = vadd.f32 %v292, %v368
      %370 = vmatmul.f32.gmra.mxu0 %v262
      %v371 = vpop.f32.mrf.mxu0
      %v372 = vadd.f32 %v292, %v371
      %373 = vmatmul.f32.gmra.mxu0 %v263
      %v374 = vpop.f32.mrf.mxu0
      %v375 = vadd.f32 %v292, %v374
      %376 = vmatmul.f32.gmra.mxu0 %v264
      %v377 = vpop.f32.mrf.mxu0
      %v378 = vadd.f32 %v292, %v377
      %379 = vmatmul.f32.gmra.mxu0 %v265
      %v380 = vpop.f32.mrf.mxu0
      %v381 = vadd.f32 %v292, %v380
      %382 = vmatmul.f32.gmra.mxu0 %v266
      %v383 = vpop.f32.mrf.mxu0
      %v384 = vadd.f32 %v292, %v383
      %385 = vmatmul.f32.gmra.mxu0 %v267
      %v386 = vpop.f32.mrf.mxu0
      %v387 = vadd.f32 %v292, %v386
      %388 = vmatmul.f32.gmra.mxu0 %v268
      %v389 = vpop.f32.mrf.mxu0
      %v390 = vadd.f32 %v292, %v389
      %391 = vmatmul.f32.gmra.mxu0 %v269
      %v392 = vpop.f32.mrf.mxu0
      %v393 = vadd.f32 %v292, %v392
      %394 = vmatmul.f32.gmra.mxu0 %v270
      %v395 = vpop.f32.mrf.mxu0
      %v396 = vadd.f32 %v292, %v395
      %397 = vmatmul.f32.gmra.mxu0 %v271
      %v398 = vpop.f32.mrf.mxu0
      %v399 = vadd.f32 %v292, %v398
      %400 = vmatmul.f32.gmra.mxu0 %v272
      %v401 = vpop.f32.mrf.mxu0
      %v402 = vadd.f32 %v292, %v401
      %403 = vmatmul.f32.gmra.mxu0 %v273
      %v404 = vpop.f32.mrf.mxu0
      %v405 = vadd.f32 %v292, %v404
      %406 = vdwg.mxu0
      %v407 = vld [vmem:[%s2] sm:$0xff]
      %v408 = vld [vmem:[%s2 + $0x8] sm:$0xff]
      %v409 = vld [vmem:[%s2 + $0x10] sm:$0xff]
      %v410 = vld [vmem:[%s2 + $0x18] sm:$0xff]
      %v411 = vld [vmem:[%s2 + $0x20] sm:$0xff]
      %v412 = vld [vmem:[%s2 + $0x28] sm:$0xff]
      %v413 = vld [vmem:[%s2 + $0x30] sm:$0xff]
      %v414 = vld [vmem:[%s2 + $0x38] sm:$0xff]
      %v415 = vld [vmem:[%s2 + $0x40] sm:$0xff]
      %v416 = vld [vmem:[%s2 + $0x48] sm:$0xff]
      %v417 = vld [vmem:[%s2 + $0x50] sm:$0xff]
      %v418 = vld [vmem:[%s2 + $0x58] sm:$0xff]
      %v419 = vld [vmem:[%s2 + $0x60] sm:$0xff]
      %v420 = vld [vmem:[%s2 + $0x68] sm:$0xff]
      %v421 = vld [vmem:[%s2 + $0x70] sm:$0xff]
      %v422 = vld [vmem:[%s2 + $0x78] sm:$0xff]
      %423 = vmatpush.msra.mxu0 %v422
      %424 = vmatpush.msra.mxu0 %v421
      %425 = vmatpush.msra.mxu0 %v420
      %426 = vmatpush.msra.mxu0 %v419
      %427 = vmatpush.msra.mxu0 %v418
      %428 = vmatpush.msra.mxu0 %v417
      %429 = vmatpush.msra.mxu0 %v416
      %430 = vmatpush.msra.mxu0 %v415
      %431 = vmatpush.msra.mxu0 %v414
      %432 = vmatpush.msra.mxu0 %v413
      %433 = vmatpush.msra.mxu0 %v412
      %434 = vmatpush.msra.mxu0 %v411
      %435 = vmatpush.msra.mxu0 %v410
      %436 = vmatpush.msra.mxu0 %v409
      %437 = vmatpush.msra.mxu0 %v408
      %438 = vmatpush.msra.mxu0 %v407
      %439 = vmatmul.f32.gmra.mxu0 %v242
      %v440 = vpop.f32.mrf.mxu0
      %v441 = vadd.f32 0.0, %v440
      %442 = vmatmul.f32.gmra.mxu0 %v243
      %v443 = vpop.f32.mrf.mxu0
      %v444 = vadd.f32 0.0, %v443
      %445 = vmatmul.f32.gmra.mxu0 %v244
      %v446 = vpop.f32.mrf.mxu0
      %v447 = vadd.f32 0.0, %v446
      %448 = vmatmul.f32.gmra.mxu0 %v245
      %v449 = vpop.f32.mrf.mxu0
      %v450 = vadd.f32 0.0, %v449
      %451 = vmatmul.f32.gmra.mxu0 %v246
      %v452 = vpop.f32.mrf.mxu0
      %v453 = vadd.f32 0.0, %v452
      %454 = vmatmul.f32.gmra.mxu0 %v247
      %v455 = vpop.f32.mrf.mxu0
      %v456 = vadd.f32 0.0, %v455
      %457 = vmatmul.f32.gmra.mxu0 %v248
      %v458 = vpop.f32.mrf.mxu0
      %v459 = vadd.f32 0.0, %v458
      %460 = vmatmul.f32.gmra.mxu0 %v249
      %v461 = vpop.f32.mrf.mxu0
      %v462 = vadd.f32 0.0, %v461
      %463 = vmatmul.f32.gmra.mxu0 %v250
      %v464 = vpop.f32.mrf.mxu0
      %v465 = vadd.f32 0.0, %v464
      %466 = vmatmul.f32.gmra.mxu0 %v251
      %v467 = vpop.f32.mrf.mxu0
      %v468 = vadd.f32 0.0, %v467
      %469 = vmatmul.f32.gmra.mxu0 %v252
      %v470 = vpop.f32.mrf.mxu0
      %v471 = vadd.f32 0.0, %v470
      %472 = vmatmul.f32.gmra.mxu0 %v253
      %v473 = vpop.f32.mrf.mxu0
      %v474 = vadd.f32 0.0, %v473
      %475 = vmatmul.f32.gmra.mxu0 %v254
      %v476 = vpop.f32.mrf.mxu0
      %v477 = vadd.f32 0.0, %v476
      %478 = vmatmul.f32.gmra.mxu0 %v255
      %v479 = vpop.f32.mrf.mxu0
      %v480 = vadd.f32 0.0, %v479
      %481 = vmatmul.f32.gmra.mxu0 %v256
      %v482 = vpop.f32.mrf.mxu0
      %v483 = vadd.f32 0.0, %v482
      %484 = vmatmul.f32.gmra.mxu0 %v257
      %v485 = vpop.f32.mrf.mxu0
      %v486 = vadd.f32 0.0, %v485
      %487 = vmatmul.f32.gmra.mxu0 %v258
      %v488 = vpop.f32.mrf.mxu0
      %v489 = vadd.f32 0.0, %v488
      %490 = vmatmul.f32.gmra.mxu0 %v259
      %v491 = vpop.f32.mrf.mxu0
      %v492 = vadd.f32 0.0, %v491
      %493 = vmatmul.f32.gmra.mxu0 %v260
      %v494 = vpop.f32.mrf.mxu0
      %v495 = vadd.f32 0.0, %v494
      %496 = vmatmul.f32.gmra.mxu0 %v261
      %v497 = vpop.f32.mrf.mxu0
      %v498 = vadd.f32 0.0, %v497
      %499 = vmatmul.f32.gmra.mxu0 %v262
      %v500 = vpop.f32.mrf.mxu0
      %v501 = vadd.f32 0.0, %v500
      %502 = vmatmul.f32.gmra.mxu0 %v263
      %v503 = vpop.f32.mrf.mxu0
      %v504 = vadd.f32 0.0, %v503
      %505 = vmatmul.f32.gmra.mxu0 %v264
      %v506 = vpop.f32.mrf.mxu0
      %v507 = vadd.f32 0.0, %v506
      %508 = vmatmul.f32.gmra.mxu0 %v265
      %v509 = vpop.f32.mrf.mxu0
      %v510 = vadd.f32 0.0, %v509
      %511 = vmatmul.f32.gmra.mxu0 %v266
      %v512 = vpop.f32.mrf.mxu0
      %v513 = vadd.f32 0.0, %v512
      %514 = vmatmul.f32.gmra.mxu0 %v267
      %v515 = vpop.f32.mrf.mxu0
      %v516 = vadd.f32 0.0, %v515
      %517 = vmatmul.f32.gmra.mxu0 %v268
      %v518 = vpop.f32.mrf.mxu0
      %v519 = vadd.f32 0.0, %v518
      %520 = vmatmul.f32.gmra.mxu0 %v269
      %v521 = vpop.f32.mrf.mxu0
      %v522 = vadd.f32 0.0, %v521
      %523 = vmatmul.f32.gmra.mxu0 %v270
      %v524 = vpop.f32.mrf.mxu0
      %v525 = vadd.f32 0.0, %v524
      %526 = vmatmul.f32.gmra.mxu0 %v271
      %v527 = vpop.f32.mrf.mxu0
      %v528 = vadd.f32 0.0, %v527
      %529 = vmatmul.f32.gmra.mxu0 %v272
      %v530 = vpop.f32.mrf.mxu0
      %v531 = vadd.f32 0.0, %v530
      %532 = vmatmul.f32.gmra.mxu0 %v273
      %v533 = vpop.f32.mrf.mxu0
      %v534 = vadd.f32 0.0, %v533
      %535 = vdwg.mxu0
      %536 = vst [vmem:[%s234] sm:$0xff] %v312
      %537 = vst [vmem:[%s234 + $0x8] sm:$0xff] %v315
      %538 = vst [vmem:[%s234 + $0x10] sm:$0xff] %v318
      %539 = vst [vmem:[%s234 + $0x18] sm:$0xff] %v321
      %540 = vst [vmem:[%s234 + $0x20] sm:$0xff] %v324
      %541 = vst [vmem:[%s234 + $0x28] sm:$0xff] %v327
      %542 = vst [vmem:[%s234 + $0x30] sm:$0xff] %v330
      %543 = vst [vmem:[%s234 + $0x38] sm:$0xff] %v333
      %544 = vst [vmem:[%s234 + $0x40] sm:$0xff] %v336
      %545 = vst [vmem:[%s234 + $0x48] sm:$0xff] %v339
      %546 = vst [vmem:[%s234 + $0x50] sm:$0xff] %v342
      %547 = vst [vmem:[%s234 + $0x58] sm:$0xff] %v345
      %548 = vst [vmem:[%s234 + $0x60] sm:$0xff] %v348
      %549 = vst [vmem:[%s234 + $0x68] sm:$0xff] %v351
      %550 = vst [vmem:[%s234 + $0x70] sm:$0xff] %v354
      %551 = vst [vmem:[%s234 + $0x78] sm:$0xff] %v357
      %552 = vst [vmem:[%s234 + $0x80] sm:$0xff] %v360
      %553 = vst [vmem:[%s234 + $0x88] sm:$0xff] %v363
      %554 = vst [vmem:[%s234 + $0x90] sm:$0xff] %v366
      %555 = vst [vmem:[%s234 + $0x98] sm:$0xff] %v369
      %556 = vst [vmem:[%s234 + $0xa0] sm:$0xff] %v372
      %557 = vst [vmem:[%s234 + $0xa8] sm:$0xff] %v375
      %558 = vst [vmem:[%s234 + $0xb0] sm:$0xff] %v378
      %559 = vst [vmem:[%s234 + $0xb8] sm:$0xff] %v381
      %560 = vst [vmem:[%s234 + $0xc0] sm:$0xff] %v384
      %561 = vst [vmem:[%s234 + $0xc8] sm:$0xff] %v387
      %562 = vst [vmem:[%s234 + $0xd0] sm:$0xff] %v390
      %563 = vst [vmem:[%s234 + $0xd8] sm:$0xff] %v393
      %564 = vst [vmem:[%s234 + $0xe0] sm:$0xff] %v396
      %565 = vst [vmem:[%s234 + $0xe8] sm:$0xff] %v399
      %566 = vst [vmem:[%s234 + $0xf0] sm:$0xff] %v402
      %567 = vst [vmem:[%s234 + $0xf8] sm:$0xff] %v405
      %v568 = vpack.c.bf16 %v441, %v441
      %v569 = vpack.c.bf16 %v444, %v444
      %v570 = vpack.c.bf16 %v447, %v447
      %v571 = vpack.c.bf16 %v450, %v450
      %v572 = vpack.c.bf16 %v453, %v453
      %v573 = vpack.c.bf16 %v456, %v456
      %v574 = vpack.c.bf16 %v459, %v459
      %v575 = vpack.c.bf16 %v462, %v462
      %v576 = vpack.c.bf16 %v465, %v465
      %v577 = vpack.c.bf16 %v468, %v468
      %v578 = vpack.c.bf16 %v471, %v471
      %v579 = vpack.c.bf16 %v474, %v474
      %v580 = vpack.c.bf16 %v477, %v477
      %v581 = vpack.c.bf16 %v480, %v480
      %v582 = vpack.c.bf16 %v483, %v483
      %v583 = vpack.c.bf16 %v486, %v486
      %v584 = vpack.c.bf16 %v489, %v489
      %v585 = vpack.c.bf16 %v492, %v492
      %v586 = vpack.c.bf16 %v495, %v495
      %v587 = vpack.c.bf16 %v498, %v498
      %v588 = vpack.c.bf16 %v501, %v501
      %v589 = vpack.c.bf16 %v504, %v504
      %v590 = vpack.c.bf16 %v507, %v507
      %v591 = vpack.c.bf16 %v510, %v510
      %v592 = vpack.c.bf16 %v513, %v513
      %v593 = vpack.c.bf16 %v516, %v516
      %v594 = vpack.c.bf16 %v519, %v519
      %v595 = vpack.c.bf16 %v522, %v522
      %v596 = vpack.c.bf16 %v525, %v525
      %v597 = vpack.c.bf16 %v528, %v528
      %v598 = vpack.c.bf16 %v531, %v531
      %v599 = vpack.c.bf16 %v534, %v534
      %600 = vst [vmem:[%s240] sm:$0xf] %v568
      %601 = vst [vmem:[%s240 + $0x4] sm:$0xf] %v569
      %602 = vst [vmem:[%s240 + $0x8] sm:$0xf] %v570
      %603 = vst [vmem:[%s240 + $0xc] sm:$0xf] %v571
      %604 = vst [vmem:[%s240 + $0x10] sm:$0xf] %v572
      %605 = vst [vmem:[%s240 + $0x14] sm:$0xf] %v573
      %606 = vst [vmem:[%s240 + $0x18] sm:$0xf] %v574
      %607 = vst [vmem:[%s240 + $0x1c] sm:$0xf] %v575
      %608 = vst [vmem:[%s240 + $0x20] sm:$0xf] %v576
      %609 = vst [vmem:[%s240 + $0x24] sm:$0xf] %v577
      %610 = vst [vmem:[%s240 + $0x28] sm:$0xf] %v578
      %611 = vst [vmem:[%s240 + $0x2c] sm:$0xf] %v579
      %612 = vst [vmem:[%s240 + $0x30] sm:$0xf] %v580
      %613 = vst [vmem:[%s240 + $0x34] sm:$0xf] %v581
      %614 = vst [vmem:[%s240 + $0x38] sm:$0xf] %v582
      %615 = vst [vmem:[%s240 + $0x3c] sm:$0xf] %v583
      %616 = vst [vmem:[%s240 + $0x40] sm:$0xf] %v584
      %617 = vst [vmem:[%s240 + $0x44] sm:$0xf] %v585
      %618 = vst [vmem:[%s240 + $0x48] sm:$0xf] %v586
      %619 = vst [vmem:[%s240 + $0x4c] sm:$0xf] %v587
      %620 = vst [vmem:[%s240 + $0x50] sm:$0xf] %v588
      %621 = vst [vmem:[%s240 + $0x54] sm:$0xf] %v589
      %622 = vst [vmem:[%s240 + $0x58] sm:$0xf] %v590
      %623 = vst [vmem:[%s240 + $0x5c] sm:$0xf] %v591
      %624 = vst [vmem:[%s240 + $0x60] sm:$0xf] %v592
      %625 = vst [vmem:[%s240 + $0x64] sm:$0xf] %v593
      %626 = vst [vmem:[%s240 + $0x68] sm:$0xf] %v594
      %627 = vst [vmem:[%s240 + $0x6c] sm:$0xf] %v595
      %628 = vst [vmem:[%s240 + $0x70] sm:$0xf] %v596
      %629 = vst [vmem:[%s240 + $0x74] sm:$0xf] %v597
      %630 = vst [vmem:[%s240 + $0x78] sm:$0xf] %v598
      %631 = vst [vmem:[%s240 + $0x7c] sm:$0xf] %v599
      %s632 = smul.u32 32, %s17
      %p633 = scmp.lt.s32.totalorder %s632, 95
      %s634 = scalar_select %p633, %s632, 95
      %s635 = smul.addr %s634, 8
      %s636 = scalar_lea.vmem %s4, %s635
      %s637 = smul.u32 32, %s17
      %p638 = scmp.lt.s32.totalorder %s637, 95
      %s639 = scalar_select %p638, %s637, 95
      %s640 = smul.addr %s639, 4
      %s641 = scalar_lea.vmem %s5, %s640
      // Predicated region
      $region37: #{graphsage_forward.10} parent=35 // pred_check
        %p642 = pneg %p124
      $region38: #{graphsage_forward.10} parent=35 // pred_check_branch
        %644 = sbr.rel (%p642) target = $region40
      $region39: #{graphsage_forward.10} parent=35 // pred_region
        %s645 = smul.u32 32, %s17
      $region40: #{graphsage_forward.10} parent=35 // pred_fallthru
        _
      // Predicated region
      $region41: #{graphsage_forward.10} parent=35 // pred_check
        %p646 = pneg %p150
      $region42: #{graphsage_forward.10} parent=35 // pred_check_branch
        %648 = sbr.rel (%p646) target = $region44
      $region43: #{graphsage_forward.10} parent=35 // pred_region
        %s649 = smul.u32 32, %s17
      $region44: #{graphsage_forward.10} parent=35 // pred_fallthru
        _
    $region36: #{graphsage_forward.10} parent=5 // pred_fallthru
      _
    %p650 = scmp.le.s32.totalorder 2, %s12
    // Predicated region
    $region45: #{graphsage_forward.10} parent=5 // pred_check
      %p651 = pneg %p650
    $region46: #{graphsage_forward.10} parent=5 // pred_check_branch
      %653 = sbr.rel (%p651) target = $region48
    $region47: #{graphsage_forward.10} parent=5 // pred_region
      %s654 = ssub.s32 %s12, 2
      // Predicated region
      $region49: #{graphsage_forward.10} parent=47 // pred_check
        %p655 = pneg %p130
      $region50: #{graphsage_forward.10} parent=47 // pred_check_branch
        %657 = sbr.rel (%p655) target = $region52
      $region51: #{graphsage_forward.10} parent=47 // pred_region
        %s658 = smul.u32 32, %s18
        %p659 = scmp.lt.s32.totalorder %s658, 95
        %s660 = scalar_select %p659, %s658, 95
        %s661 = smul.addr %s660, 8
        %s662 = scalar_lea.vmem %s4, %s661
      $region52: #{graphsage_forward.10} parent=47 // pred_fallthru
        _
      // Predicated region
      $region53: #{graphsage_forward.10} parent=47 // pred_check
        %p663 = pneg %p156
      $region54: #{graphsage_forward.10} parent=47 // pred_check_branch
        %665 = sbr.rel (%p663) target = $region56
      $region55: #{graphsage_forward.10} parent=47 // pred_region
        %s666 = smul.u32 32, %s18
        %p667 = scmp.lt.s32.totalorder %s666, 95
        %s668 = scalar_select %p667, %s666, 95
        %s669 = smul.addr %s668, 4
        %s670 = scalar_lea.vmem %s5, %s669
      $region56: #{graphsage_forward.10} parent=47 // pred_fallthru
        _
    $region48: #{graphsage_forward.10} parent=5 // pred_fallthru
      _
  $region6: #{graphsage_forward.10} parent=0 // loop_footer
    %s16 = sadd.s32 1, %s12
  $region7: #{graphsage_forward.10} parent=0 // loop_footer_branch
    %11 = sbr.rel target = $region3
  $region8: #{graphsage_forward.10} parent=0 // loop_exit
    _

// kernel: graphsage_forward.12
$region0: #{graphsage_forward.12}
  #allocation0 [shape = 'u32[]', space=smem, size = 0x4, offset = 0x4, fixed_abs, tag = 'smem constant byte address 0x4 - core index']
  #allocation1 [shape = 'u32[72,128]{1,0:T(1,128)}', space=vmem, size = 0x9000, scoped, tag = 'internal scratch']
  %s0 = inlined_call_operand.vmem [shape: f32[768,128], index: 0, kind: input, shape index: {}]
  %s1 = inlined_call_operand.vmem [shape: f32[2,128], index: 1, kind: output, shape index: {}]
  %s2 = sld [smem:[#allocation0]]
  $region45: #{graphsage_forward.12} parent=0
    _
  %s4 = ssub.s32 1, %s2
  %s5 = scalar_select 0, %s4, %s2
  loop: start=0, step=1, limit=5
  $region2: #{graphsage_forward.12} parent=0 // loop_pre_header
    _
  $region3: #{graphsage_forward.12} parent=0 // loop_header
    %s7 = sphi 0, %s11
    %p8 = scmp.ge.s32.totalorder %s7, 5
    %s17 = sphi 0, %s19
    %s20 = sphi 0, %s17
    %s21 = sphi 0, %s20
    %s37 = sphi 0, %s21
    %s41 = sphi 0, %s41
    %s43 = sphi 0, %s41
    %s44 = sphi 0, %s43
    %s58 = sphi 0, %s44
  $region4: #{graphsage_forward.12} parent=0 // loop_header_branch
    %10 = sbr.rel (%p8) target = $region8
  $region5: #{graphsage_forward.12} parent=0 // loop_body
    %s12 = ssub.s32 %s7, 1
    %s13 = ssub.s32 %s7, 2
    %s14 = sadd.s32 %s7, 1
    %s15 = ssub.s32 %s7, %s14
    %p16 = scmp.eq.s32.totalorder %s15, 0
    %s18 = sadd.s32 %s17, 1
    %s19 = scalar_select %p16, %s17, %s18
    %p22 = pneg %p16
    %p23 = scmp.eq.s32.totalorder %s7, 2
    %p24 = por %p22, %p23
    %p25 = scmp.ne.s32.totalorder %s17, %s20
    %p26 = scmp.eq.s32.totalorder %s7, 0
    %p27 = por %p25, %p26
    %p28 = scmp.ne.s32.totalorder %s17, %s20
    %p29 = scmp.eq.s32.totalorder %s12, 2
    %p30 = por %p28, %p29
    %p31 = scmp.ne.s32.totalorder %s20, %s21
    %p32 = scmp.eq.s32.totalorder %s12, 0
    %p33 = por %p31, %p32
    %p34 = scmp.ne.s32.totalorder %s20, %s21
    %p35 = scmp.eq.s32.totalorder %s13, 2
    %p36 = por %p34, %p35
    %p38 = scmp.ne.s32.totalorder %s21, %s37
    %p39 = scmp.eq.s32.totalorder %s13, 0
    %p40 = por %p38, %p39
    %s42 = sadd.s32 %s41, 1
    %p45 = scmp.eq.s32.totalorder %s7, 2
    %p46 = scmp.ne.s32.totalorder %s41, %s43
    %p47 = scmp.eq.s32.totalorder %s7, 0
    %p48 = por %p46, %p47
    %p49 = scmp.ne.s32.totalorder %s41, %s43
    %p50 = scmp.eq.s32.totalorder %s12, 2
    %p51 = por %p49, %p50
    %p52 = scmp.ne.s32.totalorder %s43, %s44
    %p53 = scmp.eq.s32.totalorder %s12, 0
    %p54 = por %p52, %p53
    %p55 = scmp.ne.s32.totalorder %s43, %s44
    %p56 = scmp.eq.s32.totalorder %s13, 2
    %p57 = por %p55, %p56
    %p59 = scmp.ne.s32.totalorder %s44, %s58
    %p60 = scmp.eq.s32.totalorder %s13, 0
    %p61 = por %p59, %p60
    %p62 = scmp.le.s32.totalorder 1, %s7
    %p63 = scmp.lt.s32.totalorder %s7, 4
    %p64 = pnand %p62, %p63
    %p65 = pneg %p64
    // Predicated region
    $region9: #{graphsage_forward.12} parent=5 // pred_check
      _
    $region10: #{graphsage_forward.12} parent=5 // pred_check_branch
      %67 = sbr.rel (%p64) target = $region12
    $region11: #{graphsage_forward.12} parent=5 // pred_region
      %s68 = ssub.s32 %s7, 1
    $region12: #{graphsage_forward.12} parent=5 // pred_fallthru
      _
    %p69 = scmp.lt.s32.totalorder %s7, 3
    // Predicated region
    $region13: #{graphsage_forward.12} parent=5 // pred_check
      %p70 = pneg %p69
    $region14: #{graphsage_forward.12} parent=5 // pred_check_branch
      %72 = sbr.rel (%p70) target = $region16
    $region15: #{graphsage_forward.12} parent=5 // pred_region
      // Predicated region
      $region17: #{graphsage_forward.12} parent=15 // pred_check
        %p73 = pneg %p27
      $region18: #{graphsage_forward.12} parent=15 // pred_check_branch
        %75 = sbr.rel (%p73) target = $region20
      $region19: #{graphsage_forward.12} parent=15 // pred_region
        %s76 = smul.u32 32, %s7
        %p77 = scmp.lt.s32.totalorder %s76, 95
        %s78 = scalar_select %p77, %s76, 95
        %s79 = smul.addr %s78, 8
        %s80 = scalar_lea.vmem %s0, %s79
        %s81 = smul.u32 32, %s7
      $region20: #{graphsage_forward.12} parent=15 // pred_fallthru
        _
    $region16: #{graphsage_forward.12} parent=5 // pred_fallthru
      _
    %p82 = scmp.le.s32.totalorder 1, %s7
    %p83 = scmp.lt.s32.totalorder %s7, 4
    %p84 = pnand %p82, %p83
    %p85 = pneg %p84
    // Predicated region
    $region21: #{graphsage_forward.12} parent=5 // pred_check
      _
    $region22: #{graphsage_forward.12} parent=5 // pred_check_branch
      %87 = sbr.rel (%p84) target = $region24
    $region23: #{graphsage_forward.12} parent=5 // pred_region
      %s88 = ssub.s32 %s7, 1
      %s89 = smul.u32 32, %s12
      %p90 = scmp.lt.s32.totalorder %s89, 95
      %s91 = scalar_select %p90, %s89, 95
      %s92 = smul.addr %s91, 8
      %s93 = scalar_lea.vmem %s0, %s92
      %p94 = pneg %p33
      %p95 = pneg %p30
      %p96 = pneg %p54
      %p97 = pneg %p51
      %s98 = smul.u32 32, %s12
      %p99 = scmp.lt.s32.totalorder %s98, 95
      %s100 = scalar_select %p99, %s98, 95
      %s101 = smul.addr %s100, 8
      %s102 = scalar_lea.vmem %s0, %s101
      %s103 = smul.u32 32, %s12
      %v104 = vld [vmem:[%s102] sm:$0xff]
      %v105 = vld [vmem:[%s102 + $0x8] sm:$0xff]
      %v106 = vld [vmem:[%s102 + $0x10] sm:$0xff]
      %v107 = vld [vmem:[%s102 + $0x18] sm:$0xff]
      %v108 = vld [vmem:[%s102 + $0x20] sm:$0xff]
      %v109 = vld [vmem:[%s102 + $0x28] sm:$0xff]
      %v110 = vld [vmem:[%s102 + $0x30] sm:$0xff]
      %v111 = vld [vmem:[%s102 + $0x38] sm:$0xff]
      %v112 = vld [vmem:[%s102 + $0x40] sm:$0xff]
      %v113 = vld [vmem:[%s102 + $0x48] sm:$0xff]
      %v114 = vld [vmem:[%s102 + $0x50] sm:$0xff]
      %v115 = vld [vmem:[%s102 + $0x58] sm:$0xff]
      %v116 = vld [vmem:[%s102 + $0x60] sm:$0xff]
      %v117 = vld [vmem:[%s102 + $0x68] sm:$0xff]
      %v118 = vld [vmem:[%s102 + $0x70] sm:$0xff]
      %v119 = vld [vmem:[%s102 + $0x78] sm:$0xff]
      %v120 = vld [vmem:[%s102 + $0x80] sm:$0xff]
      %v121 = vld [vmem:[%s102 + $0x88] sm:$0xff]
      %v122 = vld [vmem:[%s102 + $0x90] sm:$0xff]
      %v123 = vld [vmem:[%s102 + $0x98] sm:$0xff]
      %v124 = vld [vmem:[%s102 + $0xa0] sm:$0xff]
      %v125 = vld [vmem:[%s102 + $0xa8] sm:$0xff]
      %v126 = vld [vmem:[%s102 + $0xb0] sm:$0xff]
      %v127 = vld [vmem:[%s102 + $0xb8] sm:$0xff]
      %v128 = vld [vmem:[%s102 + $0xc0] sm:$0xff]
      %v129 = vld [vmem:[%s102 + $0xc8] sm:$0xff]
      %v130 = vld [vmem:[%s102 + $0xd0] sm:$0xff]
      %v131 = vld [vmem:[%s102 + $0xd8] sm:$0xff]
      %v132 = vld [vmem:[%s102 + $0xe0] sm:$0xff]
      %v133 = vld [vmem:[%s102 + $0xe8] sm:$0xff]
      %v134 = vld [vmem:[%s102 + $0xf0] sm:$0xff]
      %v135 = vld [vmem:[%s102 + $0xf8] sm:$0xff]
      %s136 = smul.u32 %s12, 256
      %v137 = vlaneseq
      %v138 = vshrl.u32 %v137, 7
      %v139 = vadd.s32 %v138, 8
      %v140 = vadd.s32 %v138, 16
      %v141 = vadd.s32 %v138, 24
      %v142 = vadd.s32 %v138, 32
      %v143 = vadd.s32 %v138, 40
      %v144 = vadd.s32 %v138, 48
      %v145 = vadd.s32 %v138, 56
      %v146 = vadd.s32 %v138, 64
      %v147 = vadd.s32 %v138, 72
      %v148 = vadd.s32 %v138, 80
      %v149 = vadd.s32 %v138, 88
      %v150 = vadd.s32 %v138, 96
      %v151 = vadd.s32 %v138, 104
      %v152 = vadd.s32 %v138, 112
      %v153 = vadd.s32 %v138, 120
      %v154 = vadd.s32 %v138, 128
      %v155 = vadd.s32 %v138, 136
      %v156 = vadd.s32 %v138, 144
      %v157 = vadd.s32 %v138, 152
      %v158 = vadd.s32 %v138, 160
      %v159 = vadd.s32 %v138, 168
      %v160 = vadd.s32 %v138, 176
      %v161 = vadd.s32 %v138, 184
      %v162 = vadd.s32 %v138, 192
      %v163 = vadd.s32 %v138, 200
      %v164 = vadd.s32 %v138, 208
      %v165 = vadd.s32 %v138, 216
      %v166 = vadd.s32 %v138, 224
      %v167 = vadd.s32 %v138, 232
      %v168 = vadd.s32 %v138, 240
      %v169 = vadd.s32 %v138, 248
      %v170 = vstv %s136
      %v171 = vadd.s32 %v170, %v138
      %v172 = vadd.s32 %v170, %v139
      %v173 = vadd.s32 %v170, %v140
      %v174 = vadd.s32 %v170, %v141
      %v175 = vadd.s32 %v170, %v142
      %v176 = vadd.s32 %v170, %v143
      %v177 = vadd.s32 %v170, %v144
      %v178 = vadd.s32 %v170, %v145
      %v179 = vadd.s32 %v170, %v146
      %v180 = vadd.s32 %v170, %v147
      %v181 = vadd.s32 %v170, %v148
      %v182 = vadd.s32 %v170, %v149
      %v183 = vadd.s32 %v170, %v150
      %v184 = vadd.s32 %v170, %v151
      %v185 = vadd.s32 %v170, %v152
      %v186 = vadd.s32 %v170, %v153
      %v187 = vadd.s32 %v170, %v154
      %v188 = vadd.s32 %v170, %v155
      %v189 = vadd.s32 %v170, %v156
      %v190 = vadd.s32 %v170, %v157
      %v191 = vadd.s32 %v170, %v158
      %v192 = vadd.s32 %v170, %v159
      %v193 = vadd.s32 %v170, %v160
      %v194 = vadd.s32 %v170, %v161
      %v195 = vadd.s32 %v170, %v162
      %v196 = vadd.s32 %v170, %v163
      %v197 = vadd.s32 %v170, %v164
      %v198 = vadd.s32 %v170, %v165
      %v199 = vadd.s32 %v170, %v166
      %v200 = vadd.s32 %v170, %v167
      %v201 = vadd.s32 %v170, %v168
      %v202 = vadd.s32 %v170, %v169
      %vm203 = vcmp.lt.s32.totalorder %v171, 600
      %vm204 = vcmp.lt.s32.totalorder %v172, 600
      %vm205 = vcmp.lt.s32.totalorder %v173, 600
      %vm206 = vcmp.lt.s32.totalorder %v174, 600
      %vm207 = vcmp.lt.s32.totalorder %v175, 600
      %vm208 = vcmp.lt.s32.totalorder %v176, 600
      %vm209 = vcmp.lt.s32.totalorder %v177, 600
      %vm210 = vcmp.lt.s32.totalorder %v178, 600
      %vm211 = vcmp.lt.s32.totalorder %v179, 600
      %vm212 = vcmp.lt.s32.totalorder %v180, 600
      %vm213 = vcmp.lt.s32.totalorder %v181, 600
      %vm214 = vcmp.lt.s32.totalorder %v182, 600
      %vm215 = vcmp.lt.s32.totalorder %v183, 600
      %vm216 = vcmp.lt.s32.totalorder %v184, 600
      %vm217 = vcmp.lt.s32.totalorder %v185, 600
      %vm218 = vcmp.lt.s32.totalorder %v186, 600
      %vm219 = vcmp.lt.s32.totalorder %v187, 600
      %vm220 = vcmp.lt.s32.totalorder %v188, 600
      %vm221 = vcmp.lt.s32.totalorder %v189, 600
      %vm222 = vcmp.lt.s32.totalorder %v190, 600
      %vm223 = vcmp.lt.s32.totalorder %v191, 600
      %vm224 = vcmp.lt.s32.totalorder %v192, 600
      %vm225 = vcmp.lt.s32.totalorder %v193, 600
      %vm226 = vcmp.lt.s32.totalorder %v194, 600
      %vm227 = vcmp.lt.s32.totalorder %v195, 600
      %vm228 = vcmp.lt.s32.totalorder %v196, 600
      %vm229 = vcmp.lt.s32.totalorder %v197, 600
      %vm230 = vcmp.lt.s32.totalorder %v198, 600
      %vm231 = vcmp.lt.s32.totalorder %v199, 600
      %vm232 = vcmp.lt.s32.totalorder %v200, 600
      %vm233 = vcmp.lt.s32.totalorder %v201, 600
      %vm234 = vcmp.lt.s32.totalorder %v202, 600
      %v235 = vsel %vm203, %v104, 0.0
      %v236 = vsel %vm204, %v105, 0.0
      %v237 = vsel %vm205, %v106, 0.0
      %v238 = vsel %vm206, %v107, 0.0
      %v239 = vsel %vm207, %v108, 0.0
      %v240 = vsel %vm208, %v109, 0.0
      %v241 = vsel %vm209, %v110, 0.0
      %v242 = vsel %vm210, %v111, 0.0
      %v243 = vsel %vm211, %v112, 0.0
      %v244 = vsel %vm212, %v113, 0.0
      %v245 = vsel %vm213, %v114, 0.0
      %v246 = vsel %vm214, %v115, 0.0
      %v247 = vsel %vm215, %v116, 0.0
      %v248 = vsel %vm216, %v117, 0.0
      %v249 = vsel %vm217, %v118, 0.0
      %v250 = vsel %vm218, %v119, 0.0
      %v251 = vsel %vm219, %v120, 0.0
      %v252 = vsel %vm220, %v121, 0.0
      %v253 = vsel %vm221, %v122, 0.0
      %v254 = vsel %vm222, %v123, 0.0
      %v255 = vsel %vm223, %v124, 0.0
      %v256 = vsel %vm224, %v125, 0.0
      %v257 = vsel %vm225, %v126, 0.0
      %v258 = vsel %vm226, %v127, 0.0
      %v259 = vsel %vm227, %v128, 0.0
      %v260 = vsel %vm228, %v129, 0.0
      %v261 = vsel %vm229, %v130, 0.0
      %v262 = vsel %vm230, %v131, 0.0
      %v263 = vsel %vm231, %v132, 0.0
      %v264 = vsel %vm232, %v133, 0.0
      %v265 = vsel %vm233, %v134, 0.0
      %v266 = vsel %vm234, %v135, 0.0
      %v267 = vadd.f32 %v235, %v236
      %v268 = vadd.f32 %v267, %v237
      %v269 = vadd.f32 %v268, %v238
      %v270 = vadd.f32 %v269, %v239
      %v271 = vadd.f32 %v270, %v240
      %v272 = vadd.f32 %v271, %v241
      %v273 = vadd.f32 %v272, %v242
      %v274 = vadd.f32 %v273, %v243
      %v275 = vadd.f32 %v274, %v244
      %v276 = vadd.f32 %v275, %v245
      %v277 = vadd.f32 %v276, %v246
      %v278 = vadd.f32 %v277, %v247
      %v279 = vadd.f32 %v278, %v248
      %v280 = vadd.f32 %v279, %v249
      %v281 = vadd.f32 %v280, %v250
      %v282 = vadd.f32 %v281, %v251
      %v283 = vadd.f32 %v282, %v252
      %v284 = vadd.f32 %v283, %v253
      %v285 = vadd.f32 %v284, %v254
      %v286 = vadd.f32 %v285, %v255
      %v287 = vadd.f32 %v286, %v256
      %v288 = vadd.f32 %v287, %v257
      %v289 = vadd.f32 %v288, %v258
      %v290 = vadd.f32 %v289, %v259
      %v291 = vadd.f32 %v290, %v260
      %v292 = vadd.f32 %v291, %v261
      %v293 = vadd.f32 %v292, %v262
      %v294 = vadd.f32 %v293, %v263
      %v295 = vadd.f32 %v294, %v264
      %v296 = vadd.f32 %v295, %v265
      %v297 = vadd.f32 %v296, %v266
      %v298 = vrot.slane %v297, 4
      %v299 = vadd.f32 %v297, %v298
      %v300 = vrot.slane %v299, 2
      %v301 = vadd.f32 %v299, %v300
      %v302 = vrot.slane %v301, 1
      %v303 = vadd.f32 %v301, %v302
      %v304 = vmul.f32 %v235, %v235
      %v305 = vmul.f32 %v236, %v236
      %v306 = vmul.f32 %v237, %v237
      %v307 = vmul.f32 %v238, %v238
      %v308 = vmul.f32 %v239, %v239
      %v309 = vmul.f32 %v240, %v240
      %v310 = vmul.f32 %v241, %v241
      %v311 = vmul.f32 %v242, %v242
      %v312 = vmul.f32 %v243, %v243
      %v313 = vmul.f32 %v244, %v244
      %v314 = vmul.f32 %v245, %v245
      %v315 = vmul.f32 %v246, %v246
      %v316 = vmul.f32 %v247, %v247
      %v317 = vmul.f32 %v248, %v248
      %v318 = vmul.f32 %v249, %v249
      %v319 = vmul.f32 %v250, %v250
      %v320 = vmul.f32 %v251, %v251
      %v321 = vmul.f32 %v252, %v252
      %v322 = vmul.f32 %v253, %v253
      %v323 = vmul.f32 %v254, %v254
      %v324 = vmul.f32 %v255, %v255
      %v325 = vmul.f32 %v256, %v256
      %v326 = vmul.f32 %v257, %v257
      %v327 = vmul.f32 %v258, %v258
      %v328 = vmul.f32 %v259, %v259
      %v329 = vmul.f32 %v260, %v260
      %v330 = vmul.f32 %v261, %v261
      %v331 = vmul.f32 %v262, %v262
      %v332 = vmul.f32 %v263, %v263
      %v333 = vmul.f32 %v264, %v264
      %v334 = vmul.f32 %v265, %v265
      %v335 = vmul.f32 %v266, %v266
      %v336 = vadd.f32 %v304, %v305
      %v337 = vadd.f32 %v336, %v306
      %v338 = vadd.f32 %v337, %v307
      %v339 = vadd.f32 %v338, %v308
      %v340 = vadd.f32 %v339, %v309
      %v341 = vadd.f32 %v340, %v310
      %v342 = vadd.f32 %v341, %v311
      %v343 = vadd.f32 %v342, %v312
      %v344 = vadd.f32 %v343, %v313
      %v345 = vadd.f32 %v344, %v314
      %v346 = vadd.f32 %v345, %v315
      %v347 = vadd.f32 %v346, %v316
      %v348 = vadd.f32 %v347, %v317
      %v349 = vadd.f32 %v348, %v318
      %v350 = vadd.f32 %v349, %v319
      %v351 = vadd.f32 %v350, %v320
      %v352 = vadd.f32 %v351, %v321
      %v353 = vadd.f32 %v352, %v322
      %v354 = vadd.f32 %v353, %v323
      %v355 = vadd.f32 %v354, %v324
      %v356 = vadd.f32 %v355, %v325
      %v357 = vadd.f32 %v356, %v326
      %v358 = vadd.f32 %v357, %v327
      %v359 = vadd.f32 %v358, %v328
      %v360 = vadd.f32 %v359, %v329
      %v361 = vadd.f32 %v360, %v330
      %v362 = vadd.f32 %v361, %v331
      %v363 = vadd.f32 %v362, %v332
      %v364 = vadd.f32 %v363, %v333
      %v365 = vadd.f32 %v364, %v334
      %v366 = vadd.f32 %v365, %v335
      %v367 = vrot.slane %v366, 4
      %v368 = vadd.f32 %v366, %v367
      %v369 = vrot.slane %v368, 2
      %v370 = vadd.f32 %v368, %v369
      %v371 = vrot.slane %v370, 1
      %v372 = vadd.f32 %v370, %v371
      %p373 = scmp.eq.s32.totalorder %s12, 0
      // Predicated region
      $region25: #{graphsage_forward.12} parent=23 // pred_check
        %p374 = pneg %p373
      $region26: #{graphsage_forward.12} parent=23 // pred_check_branch
        %376 = sbr.rel (%p374) target = $region28
      $region27: #{graphsage_forward.12} parent=23 // pred_region
        %377 = vst [vmem:[%s1] sm:$0x1] %v303
        %378 = vst [vmem:[%s1 + $0x1] sm:$0x1] %v372
      $region28: #{graphsage_forward.12} parent=23 // pred_fallthru
        _
      %p379 = scmp.gt.s32.totalorder %s12, 0
      // Predicated region
      $region29: #{graphsage_forward.12} parent=23 // pred_check
        %p380 = pneg %p379
      $region30: #{graphsage_forward.12} parent=23 // pred_check_branch
        %382 = sbr.rel (%p380) target = $region32
      $region31: #{graphsage_forward.12} parent=23 // pred_region
        %v383 = vld [vmem:[%s1] sm:$0x1]
        %v384 = vadd.f32 %v383, %v303
        %385 = vst [vmem:[%s1] sm:$0x1] %v384
        %v386 = vld [vmem:[%s1 + $0x1] sm:$0x1]
        %v387 = vadd.f32 %v386, %v372
        %388 = vst [vmem:[%s1 + $0x1] sm:$0x1] %v387
      $region32: #{graphsage_forward.12} parent=23 // pred_fallthru
        _
      // Predicated region
      $region33: #{graphsage_forward.12} parent=23 // pred_check
        %p389 = pneg %p51
      $region34: #{graphsage_forward.12} parent=23 // pred_check_branch
        %391 = sbr.rel (%p389) target = $region36
      $region35: #{graphsage_forward.12} parent=23 // pred_region
        _
      $region36: #{graphsage_forward.12} parent=23 // pred_fallthru
        _
      // Predicated region
      $region37: #{graphsage_forward.12} parent=23 // pred_check
        %p392 = pneg %p51
      $region38: #{graphsage_forward.12} parent=23 // pred_check_branch
        %394 = sbr.rel (%p392) target = $region40
      $region39: #{graphsage_forward.12} parent=23 // pred_region
        _
      $region40: #{graphsage_forward.12} parent=23 // pred_fallthru
        _
    $region24: #{graphsage_forward.12} parent=5 // pred_fallthru
      _
    %p395 = scmp.le.s32.totalorder 2, %s7
    // Predicated region
    $region41: #{graphsage_forward.12} parent=5 // pred_check
      %p396 = pneg %p395
    $region42: #{graphsage_forward.12} parent=5 // pred_check_branch
      %398 = sbr.rel (%p396) target = $region44
    $region43: #{graphsage_forward.12} parent=5 // pred_region
      %s399 = ssub.s32 %s7, 2
    $region44: #{graphsage_forward.12} parent=5 // pred_fallthru
      _
  $region6: #{graphsage_forward.12} parent=0 // loop_footer
    %s11 = sadd.s32 1, %s7
  $region7: #{graphsage_forward.12} parent=0 // loop_footer_branch
    %6 = sbr.rel target = $region3
  $region8: #{graphsage_forward.12} parent=0 // loop_exit
    _

// kernel: graphsage_forward.11
$region0: #{graphsage_forward.11}
  #allocation0 [shape = 'u32[]', space=smem, size = 0x4, offset = 0x4, fixed_abs, tag = 'smem constant byte address 0x4 - core index']
  #allocation1 [shape = 'u32[72,128]{1,0:T(1,128)}', space=vmem, size = 0x9000, scoped, tag = 'internal scratch']
  #allocation2 [shape = 'f32[256,128]{1,0:T(8,128)}', space=vmem, size = 0x20000, scoped, tag = 'scratch operand']
  %s0 = inlined_call_operand.vmem [shape: bf16[768,768], index: 0, kind: input, shape index: {}]
  %s1 = inlined_call_operand.vmem [shape: bf16[768,128], index: 1, kind: input, shape index: {}]
  %s2 = inlined_call_operand.vmem [shape: f32[768,128], index: 2, kind: input, shape index: {}]
  %s3 = inlined_call_operand.vmem [shape: f32[768,128], index: 3, kind: output, shape index: {}]
  %s4 = sld [smem:[#allocation0]]
  $region91: #{graphsage_forward.11} parent=0
    _
  %s6 = ssub.s32 1, %s4
  %s7 = scalar_select 0, %s6, %s4
  $region1: #{graphsage_forward.11} parent=0
    #allocation3 [shape = 'u8[262144]{0}', space=vmem, size = 0x40000, scoped, tag = 'input window, operand 0']
    loop: start=0, step=1, limit=11
    $region2: #{graphsage_forward.11} parent=1 // loop_pre_header
      _
    $region3: #{graphsage_forward.11} parent=1 // loop_header
      %s9 = sphi 0, %s13
      %p10 = scmp.ge.s32.totalorder %s9, 11
      %s16 = sphi 0, %s28
      %s17 = sphi 0, %s24
      %s18 = sphi 0, %s16
      %s19 = sphi 0, %s17
      %s20 = sphi 0, %s18
      %s21 = sphi 0, %s19
      %s33 = sphi 0, %s35
      %s36 = sphi 0, %s33
      %s37 = sphi 0, %s36
      %s53 = sphi 0, %s37
      %s59 = sphi 0, %s61
      %s62 = sphi 0, %s59
      %s63 = sphi 0, %s62
      %s79 = sphi 0, %s63
      %s85 = sphi 0, %s87
      %s88 = sphi 0, %s85
      %s89 = sphi 0, %s88
      %s105 = sphi 0, %s89
      %s111 = sphi 0, %s113
      %s114 = sphi 0, %s111
      %s115 = sphi 0, %s114
      %s131 = sphi 0, %s115
    $region4: #{graphsage_forward.11} parent=1 // loop_header_branch
      %12 = sbr.rel (%p10) target = $region8
    $region5: #{graphsage_forward.11} parent=1 // loop_body
      %s14 = ssub.s32 %s9, 1
      %s15 = ssub.s32 %s9, 2
      %s22 = sadd.s32 1, %s17
      %p23 = scmp.ge.s32.totalorder %s22, 3
      %s24 = scalar_select %p23, 0, %s22
      %s25 = sadd.s32 1, %s16
      %s26 = scalar_select %p23, %s25, %s16
      %p27 = scmp.ge.s32.totalorder %s26, 3
      %s28 = scalar_select %p27, 0, %s26
      %s29 = ssub.s32 %s16, %s28
      %s30 = ssub.s32 %s17, %s24
      %s31 = sor.u32 %s29, %s30
      %p32 = scmp.eq.s32.totalorder %s31, 0
      %s34 = sadd.s32 %s33, 1
      %s35 = scalar_select %p32, %s33, %s34
      %p38 = pneg %p32
      %p39 = scmp.eq.s32.totalorder %s9, 8
      %p40 = por %p38, %p39
      %p41 = scmp.ne.s32.totalorder %s33, %s36
      %p42 = scmp.eq.s32.totalorder %s9, 0
      %p43 = por %p41, %p42
      %p44 = scmp.ne.s32.totalorder %s33, %s36
      %p45 = scmp.eq.s32.totalorder %s14, 8
      %p46 = por %p44, %p45
      %p47 = scmp.ne.s32.totalorder %s36, %s37
      %p48 = scmp.eq.s32.totalorder %s14, 0
      %p49 = por %p47, %p48
      %p50 = scmp.ne.s32.totalorder %s36, %s37
      %p51 = scmp.eq.s32.totalorder %s15, 8
      %p52 = por %p50, %p51
      %p54 = scmp.ne.s32.totalorder %s37, %s53
      %p55 = scmp.eq.s32.totalorder %s15, 0
      %p56 = por %p54, %p55
      %s57 = ssub.s32 %s17, %s24
      %p58 = scmp.eq.s32.totalorder %s57, 0
      %s60 = sadd.s32 %s59, 1
      %s61 = scalar_select %p58, %s59, %s60
      %p64 = pneg %p58
      %p65 = scmp.eq.s32.totalorder %s9, 8
      %p66 = por %p64, %p65
      %p67 = scmp.ne.s32.totalorder %s59, %s62
      %p68 = scmp.eq.s32.totalorder %s9, 0
      %p69 = por %p67, %p68
      %p70 = scmp.ne.s32.totalorder %s59, %s62
      %p71 = scmp.eq.s32.totalorder %s14, 8
      %p72 = por %p70, %p71
      %p73 = scmp.ne.s32.totalorder %s62, %s63
      %p74 = scmp.eq.s32.totalorder %s14, 0
      %p75 = por %p73, %p74
      %p76 = scmp.ne.s32.totalorder %s62, %s63
      %p77 = scmp.eq.s32.totalorder %s15, 8
      %p78 = por %p76, %p77
      %p80 = scmp.ne.s32.totalorder %s63, %s79
      %p81 = scmp.eq.s32.totalorder %s15, 0
      %p82 = por %p80, %p81
      %s83 = ssub.s32 %s16, %s28
      %p84 = scmp.eq.s32.totalorder %s83, 0
      %s86 = sadd.s32 %s85, 1
      %s87 = scalar_select %p84, %s85, %s86
      %p90 = pneg %p84
      %p91 = scmp.eq.s32.totalorder %s9, 8
      %p92 = por %p90, %p91
      %p93 = scmp.ne.s32.totalorder %s85, %s88
      %p94 = scmp.eq.s32.totalorder %s9, 0
      %p95 = por %p93, %p94
      %p96 = scmp.ne.s32.totalorder %s85, %s88
      %p97 = scmp.eq.s32.totalorder %s14, 8
      %p98 = por %p96, %p97
      %p99 = scmp.ne.s32.totalorder %s88, %s89
      %p100 = scmp.eq.s32.totalorder %s14, 0
      %p101 = por %p99, %p100
      %p102 = scmp.ne.s32.totalorder %s88, %s89
      %p103 = scmp.eq.s32.totalorder %s15, 8
      %p104 = por %p102, %p103
      %p106 = scmp.ne.s32.totalorder %s89, %s105
      %p107 = scmp.eq.s32.totalorder %s15, 0
      %p108 = por %p106, %p107
      %s109 = ssub.s32 %s16, %s28
      %p110 = scmp.eq.s32.totalorder %s109, 0
      %s112 = sadd.s32 %s111, 1
      %s113 = scalar_select %p110, %s111, %s112
      %p116 = pneg %p110
      %p117 = scmp.eq.s32.totalorder %s9, 8
      %p118 = por %p116, %p117
      %p119 = scmp.ne.s32.totalorder %s111, %s114
      %p120 = scmp.eq.s32.totalorder %s9, 0
      %p121 = por %p119, %p120
      %p122 = scmp.ne.s32.totalorder %s111, %s114
      %p123 = scmp.eq.s32.totalorder %s14, 8
      %p124 = por %p122, %p123
      %p125 = scmp.ne.s32.totalorder %s114, %s115
      %p126 = scmp.eq.s32.totalorder %s14, 0
      %p127 = por %p125, %p126
      %p128 = scmp.ne.s32.totalorder %s114, %s115
      %p129 = scmp.eq.s32.totalorder %s15, 8
      %p130 = por %p128, %p129
      %p132 = scmp.ne.s32.totalorder %s115, %s131
      %p133 = scmp.eq.s32.totalorder %s15, 0
      %p134 = por %p132, %p133
      %p135 = scmp.le.s32.totalorder 1, %s9
      %p136 = scmp.lt.s32.totalorder %s9, 10
      %p137 = pnand %p135, %p136
      %p138 = pneg %p137
      // Predicated region
      $region9: #{graphsage_forward.11} parent=5 // pred_check
        _
      $region10: #{graphsage_forward.11} parent=5 // pred_check_branch
        %140 = sbr.rel (%p137) target = $region12
      $region11: #{graphsage_forward.11} parent=5 // pred_region
        %s141 = ssub.s32 %s9, 1
      $region12: #{graphsage_forward.11} parent=5 // pred_fallthru
        _
      %p142 = scmp.lt.s32.totalorder %s9, 9
      // Predicated region
      $region13: #{graphsage_forward.11} parent=5 // pred_check
        %p143 = pneg %p142
      $region14: #{graphsage_forward.11} parent=5 // pred_check_branch
        %145 = sbr.rel (%p143) target = $region16
      $region15: #{graphsage_forward.11} parent=5 // pred_region
        // Predicated region
        $region17: #{graphsage_forward.11} parent=15 // pred_check
          %p146 = pneg %p43
        $region18: #{graphsage_forward.11} parent=15 // pred_check_branch
          %148 = sbr.rel (%p146) target = $region20
        $region19: #{graphsage_forward.11} parent=15 // pred_region
          %s149 = sand.u32 %s33, 1
          %s150 = sand.u32 %s33, 1
          %s151 = smul.addr %s150, 256
          %s152 = scalar_lea.vmem [#allocation3], %s151
          %s153 = smul.u32 32, %s16
          %s154 = smul.u32 2, %s17
          %s155 = smul.addr %s153, 6
          %s156 = sadd.s32 %s154, %s155
          %s157 = smul.addr %s156, 4
          %s158 = scalar_lea.vmem %s0, %s157
          // Predicated region
          $region21: #{graphsage_forward.11} parent=19 // pred_check
            _
          $region22: #{graphsage_forward.11} parent=19 // pred_check_branch
            %160 = sbr.rel (0) target = $region24
          $region23: #{graphsage_forward.11} parent=19 // pred_region
            // Predicated region
            $region25: #{graphsage_forward.11} parent=23 // pred_check
              _
            $region26: #{graphsage_forward.11} parent=23 // pred_check_branch
              %162 = sbr.rel (0) target = $region28
            $region27: #{graphsage_forward.11} parent=23 // pred_region
              // Predicated region
              $region40: #{graphsage_forward.11} parent=27 // pred_check
                _
              $region41: #{graphsage_forward.11} parent=27 // pred_check_branch
                %240 = sbr.rel (0) target = $region43
              $region42: #{graphsage_forward.11} parent=27 // pred_region
                loop: start=0, step=1, limit=1
                $region44: #{graphsage_forward.11} parent=42 // loop_pre_header
                  _
                $region45: #{graphsage_forward.11} parent=42 // loop_header
                  %s242 = sphi 0, %s246
                  %p243 = scmp.ge.s32.totalorder %s242, 1
                  %s247 = sphi %s158, %s158
                  %s248 = sphi %s152, %s152
                $region46: #{graphsage_forward.11} parent=42 // loop_header_branch
                  %245 = sbr.rel (%p243) target = $region50
                $region47: #{graphsage_forward.11} parent=42 // loop_body
                  %v249 = vld [vmem:[%s247] sm:$0xff]
                  %250 = vst [vmem:[%s248] sm:$0xff] %v249
                  %v251 = vld [vmem:[%s247 + $0x18] sm:$0xff]
                  %252 = vst [vmem:[%s248 + $0x8] sm:$0xff] %v251
                  %v253 = vld [vmem:[%s247 + $0x30] sm:$0xff]
                  %254 = vst [vmem:[%s248 + $0x10] sm:$0xff] %v253
                  %v255 = vld [vmem:[%s247 + $0x48] sm:$0xff]
                  %256 = vst [vmem:[%s248 + $0x18] sm:$0xff] %v255
                  %v257 = vld [vmem:[%s247 + $0x60] sm:$0xff]
                  %258 = vst [vmem:[%s248 + $0x20] sm:$0xff] %v257
                  %v259 = vld [vmem:[%s247 + $0x78] sm:$0xff]
                  %260 = vst [vmem:[%s248 + $0x28] sm:$0xff] %v259
                  %v261 = vld [vmem:[%s247 + $0x90] sm:$0xff]
                  %262 = vst [vmem:[%s248 + $0x30] sm:$0xff] %v261
                  %v263 = vld [vmem:[%s247 + $0xa8] sm:$0xff]
                  %264 = vst [vmem:[%s248 + $0x38] sm:$0xff] %v263
                  %v265 = vld [vmem:[%s247 + $0xc0] sm:$0xff]
                  %266 = vst [vmem:[%s248 + $0x40] sm:$0xff] %v265
                  %v267 = vld [vmem:[%s247 + $0xd8] sm:$0xff]
                  %268 = vst [vmem:[%s248 + $0x48] sm:$0xff] %v267
                  %v269 = vld [vmem:[%s247 + $0xf0] sm:$0xff]
                  %270 = vst [vmem:[%s248 + $0x50] sm:$0xff] %v269
                  %v271 = vld [vmem:[%s247 + $0x108] sm:$0xff]
                  %272 = vst [vmem:[%s248 + $0x58] sm:$0xff] %v271
                  %v273 = vld [vmem:[%s247 + $0x120] sm:$0xff]
                  %274 = vst [vmem:[%s248 + $0x60] sm:$0xff] %v273
                  %v275 = vld [vmem:[%s247 + $0x138] sm:$0xff]
                  %276 = vst [vmem:[%s248 + $0x68] sm:$0xff] %v275
                  %v277 = vld [vmem:[%s247 + $0x150] sm:$0xff]
                  %278 = vst [vmem:[%s248 + $0x70] sm:$0xff] %v277
                  %v279 = vld [vmem:[%s247 + $0x168] sm:$0xff]
                  %280 = vst [vmem:[%s248 + $0x78] sm:$0xff] %v279
                  %v281 = vld [vmem:[%s247 + $0x180] sm:$0xff]
                  %282 = vst [vmem:[%s248 + $0x80] sm:$0xff] %v281
                  %v283 = vld [vmem:[%s247 + $0x198] sm:$0xff]
                  %284 = vst [vmem:[%s248 + $0x88] sm:$0xff] %v283
                  %v285 = vld [vmem:[%s247 + $0x1b0] sm:$0xff]
                  %286 = vst [vmem:[%s248 + $0x90] sm:$0xff] %v285
                  %v287 = vld [vmem:[%s247 + $0x1c8] sm:$0xff]
                  %288 = vst [vmem:[%s248 + $0x98] sm:$0xff] %v287
                  %v289 = vld [vmem:[%s247 + $0x1e0] sm:$0xff]
                  %290 = vst [vmem:[%s248 + $0xa0] sm:$0xff] %v289
                  %v291 = vld [vmem:[%s247 + $0x1f8] sm:$0xff]
                  %292 = vst [vmem:[%s248 + $0xa8] sm:$0xff] %v291
                  %v293 = vld [vmem:[%s247 + $0x210] sm:$0xff]
                  %294 = vst [vmem:[%s248 + $0xb0] sm:$0xff] %v293
                  %v295 = vld [vmem:[%s247 + $0x228] sm:$0xff]
                  %296 = vst [vmem:[%s248 + $0xb8] sm:$0xff] %v295
                  %v297 = vld [vmem:[%s247 + $0x240] sm:$0xff]
                  %298 = vst [vmem:[%s248 + $0xc0] sm:$0xff] %v297
                  %v299 = vld [vmem:[%s247 + $0x258] sm:$0xff]
                  %300 = vst [vmem:[%s248 + $0xc8] sm:$0xff] %v299
                  %v301 = vld [vmem:[%s247 + $0x270] sm:$0xff]
                  %302 = vst [vmem:[%s248 + $0xd0] sm:$0xff] %v301
                  %v303 = vld [vmem:[%s247 + $0x288] sm:$0xff]
                  %304 = vst [vmem:[%s248 + $0xd8] sm:$0xff] %v303
                  %v305 = vld [vmem:[%s247 + $0x2a0] sm:$0xff]
                  %306 = vst [vmem:[%s248 + $0xe0] sm:$0xff] %v305
                  %v307 = vld [vmem:[%s247 + $0x2b8] sm:$0xff]
                  %308 = vst [vmem:[%s248 + $0xe8] sm:$0xff] %v307
                  %v309 = vld [vmem:[%s247 + $0x2d0] sm:$0xff]
                  %310 = vst [vmem:[%s248 + $0xf0] sm:$0xff] %v309
                  %v311 = vld [vmem:[%s247 + $0x2e8] sm:$0xff]
                  %312 = vst [vmem:[%s248 + $0xf8] sm:$0xff] %v311
                $region48: #{graphsage_forward.11} parent=42 // loop_footer
                  %s246 = sadd.s32 1, %s242
                $region49: #{graphsage_forward.11} parent=42 // loop_footer_branch
                  %241 = sbr.rel target = $region45
                $region50: #{graphsage_forward.11} parent=42 // loop_exit
                  _
              $region43: #{graphsage_forward.11} parent=27 // pred_fallthru
                _
              // Predicated region
              $region51: #{graphsage_forward.11} parent=27 // pred_check
                _
              $region52: #{graphsage_forward.11} parent=27 // pred_check_branch
                %314 = sbr.rel target = $region54
              $region53: #{graphsage_forward.11} parent=27 // pred_region
                _
              $region54: #{graphsage_forward.11} parent=27 // pred_fallthru
                _
            $region28: #{graphsage_forward.11} parent=23 // pred_fallthru
              _
            // Predicated region
            $region29: #{graphsage_forward.11} parent=23 // pred_check
              _
            $region30: #{graphsage_forward.11} parent=23 // pred_check_branch
              %164 = sbr.rel target = $region32
            $region31: #{graphsage_forward.11} parent=23 // pred_region
              %s166 = ssub.s32 256, 1
              loop: start=0, step=1, limit=1
              $region33: #{graphsage_forward.11} parent=31 // loop_pre_header
                _
              $region34: #{graphsage_forward.11} parent=31 // loop_header
                %s168 = sphi 0, %s172
                %p169 = scmp.ge.s32.totalorder %s168, 1
                %s173 = sphi %s158, %s158
                %s174 = sphi %s152, %s152
              $region35: #{graphsage_forward.11} parent=31 // loop_header_branch
                %171 = sbr.rel (%p169) target = $region39
              $region36: #{graphsage_forward.11} parent=31 // loop_body
                %v175 = vld [vmem:[%s173] sm:%s166]
                %176 = vst [vmem:[%s174] sm:%s166] %v175
                %v177 = vld [vmem:[%s173 + $0x18] sm:%s166]
                %178 = vst [vmem:[%s174 + $0x8] sm:%s166] %v177
                %v179 = vld [vmem:[%s173 + $0x30] sm:%s166]
                %180 = vst [vmem:[%s174 + $0x10] sm:%s166] %v179
                %v181 = vld [vmem:[%s173 + $0x48] sm:%s166]
                %182 = vst [vmem:[%s174 + $0x18] sm:%s166] %v181
                %v183 = vld [vmem:[%s173 + $0x60] sm:%s166]
                %184 = vst [vmem:[%s174 + $0x20] sm:%s166] %v183
                %v185 = vld [vmem:[%s173 + $0x78] sm:%s166]
                %186 = vst [vmem:[%s174 + $0x28] sm:%s166] %v185
                %v187 = vld [vmem:[%s173 + $0x90] sm:%s166]
                %188 = vst [vmem:[%s174 + $0x30] sm:%s166] %v187
                %v189 = vld [vmem:[%s173 + $0xa8] sm:%s166]
                %190 = vst [vmem:[%s174 + $0x38] sm:%s166] %v189
                %v191 = vld [vmem:[%s173 + $0xc0] sm:%s166]
                %192 = vst [vmem:[%s174 + $0x40] sm:%s166] %v191
                %v193 = vld [vmem:[%s173 + $0xd8] sm:%s166]
                %194 = vst [vmem:[%s174 + $0x48] sm:%s166] %v193
                %v195 = vld [vmem:[%s173 + $0xf0] sm:%s166]
                %196 = vst [vmem:[%s174 + $0x50] sm:%s166] %v195
                %v197 = vld [vmem:[%s173 + $0x108] sm:%s166]
                %198 = vst [vmem:[%s174 + $0x58] sm:%s166] %v197
                %v199 = vld [vmem:[%s173 + $0x120] sm:%s166]
                %200 = vst [vmem:[%s174 + $0x60] sm:%s166] %v199
                %v201 = vld [vmem:[%s173 + $0x138] sm:%s166]
                %202 = vst [vmem:[%s174 + $0x68] sm:%s166] %v201
                %v203 = vld [vmem:[%s173 + $0x150] sm:%s166]
                %204 = vst [vmem:[%s174 + $0x70] sm:%s166] %v203
                %v205 = vld [vmem:[%s173 + $0x168] sm:%s166]
                %206 = vst [vmem:[%s174 + $0x78] sm:%s166] %v205
                %v207 = vld [vmem:[%s173 + $0x180] sm:%s166]
                %208 = vst [vmem:[%s174 + $0x80] sm:%s166] %v207
                %v209 = vld [vmem:[%s173 + $0x198] sm:%s166]
                %210 = vst [vmem:[%s174 + $0x88] sm:%s166] %v209
                %v211 = vld [vmem:[%s173 + $0x1b0] sm:%s166]
                %212 = vst [vmem:[%s174 + $0x90] sm:%s166] %v211
                %v213 = vld [vmem:[%s173 + $0x1c8] sm:%s166]
                %214 = vst [vmem:[%s174 + $0x98] sm:%s166] %v213
                %v215 = vld [vmem:[%s173 + $0x1e0] sm:%s166]
                %216 = vst [vmem:[%s174 + $0xa0] sm:%s166] %v215
                %v217 = vld [vmem:[%s173 + $0x1f8] sm:%s166]
                %218 = vst [vmem:[%s174 + $0xa8] sm:%s166] %v217
                %v219 = vld [vmem:[%s173 + $0x210] sm:%s166]
                %220 = vst [vmem:[%s174 + $0xb0] sm:%s166] %v219
                %v221 = vld [vmem:[%s173 + $0x228] sm:%s166]
                %222 = vst [vmem:[%s174 + $0xb8] sm:%s166] %v221
                %v223 = vld [vmem:[%s173 + $0x240] sm:%s166]
                %224 = vst [vmem:[%s174 + $0xc0] sm:%s166] %v223
                %v225 = vld [vmem:[%s173 + $0x258] sm:%s166]
                %226 = vst [vmem:[%s174 + $0xc8] sm:%s166] %v225
                %v227 = vld [vmem:[%s173 + $0x270] sm:%s166]
                %228 = vst [vmem:[%s174 + $0xd0] sm:%s166] %v227
                %v229 = vld [vmem:[%s173 + $0x288] sm:%s166]
                %230 = vst [vmem:[%s174 + $0xd8] sm:%s166] %v229
                %v231 = vld [vmem:[%s173 + $0x2a0] sm:%s166]
                %232 = vst [vmem:[%s174 + $0xe0] sm:%s166] %v231
                %v233 = vld [vmem:[%s173 + $0x2b8] sm:%s166]
                %234 = vst [vmem:[%s174 + $0xe8] sm:%s166] %v233
                %v235 = vld [vmem:[%s173 + $0x2d0] sm:%s166]
                %236 = vst [vmem:[%s174 + $0xf0] sm:%s166] %v235
                %v237 = vld [vmem:[%s173 + $0x2e8] sm:%s166]
                %238 = vst [vmem:[%s174 + $0xf8] sm:%s166] %v237
              $region37: #{graphsage_forward.11} parent=31 // loop_footer
                %s172 = sadd.s32 1, %s168
              $region38: #{graphsage_forward.11} parent=31 // loop_footer_branch
                %167 = sbr.rel target = $region34
              $region39: #{graphsage_forward.11} parent=31 // loop_exit
                _
            $region32: #{graphsage_forward.11} parent=23 // pred_fallthru
              _
          $region24: #{graphsage_forward.11} parent=19 // pred_fallthru
            _
          %315 = vnop
        $region20: #{graphsage_forward.11} parent=15 // pred_fallthru
          _
        // Predicated region
        $region55: #{graphsage_forward.11} parent=15 // pred_check
          %p316 = pneg %p69
        $region56: #{graphsage_forward.11} parent=15 // pred_check_branch
          %318 = sbr.rel (%p316) target = $region58
        $region57: #{graphsage_forward.11} parent=15 // pred_region
          %s319 = smul.u32 32, %s17
          %p320 = scmp.lt.s32.totalorder %s319, 95
          %s321 = scalar_select %p320, %s319, 95
          %s322 = smul.addr %s321, 4
          %s323 = scalar_lea.vmem %s1, %s322
          %s324 = smul.u32 32, %s17
        $region58: #{graphsage_forward.11} parent=15 // pred_fallthru
          _
        // Predicated region
        $region59: #{graphsage_forward.11} parent=15 // pred_check
          %p325 = pneg %p95
        $region60: #{graphsage_forward.11} parent=15 // pred_check_branch
          %327 = sbr.rel (%p325) target = $region62
        $region61: #{graphsage_forward.11} parent=15 // pred_region
          %s328 = smul.u32 32, %s16
          %p329 = scmp.lt.s32.totalorder %s328, 95
          %s330 = scalar_select %p329, %s328, 95
          %s331 = smul.addr %s330, 8
          %s332 = scalar_lea.vmem %s2, %s331
          %s333 = smul.u32 32, %s16
        $region62: #{graphsage_forward.11} parent=15 // pred_fallthru
          _
      $region16: #{graphsage_forward.11} parent=5 // pred_fallthru
        _
      %p334 = scmp.le.s32.totalorder 1, %s9
      %p335 = scmp.lt.s32.totalorder %s9, 10
      %p336 = pnand %p334, %p335
      %p337 = pneg %p336
      // Predicated region
      $region63: #{graphsage_forward.11} parent=5 // pred_check
        _
      $region64: #{graphsage_forward.11} parent=5 // pred_check_branch
        %339 = sbr.rel (%p336) target = $region66
      $region65: #{graphsage_forward.11} parent=5 // pred_region
        %s340 = ssub.s32 %s9, 1
        %s341 = sand.u32 %s36, 1
        %s342 = sand.u32 %s36, 1
        %s343 = smul.addr %s342, 256
        %s344 = scalar_lea.vmem [#allocation3], %s343
        // Predicated region
        $region67: #{graphsage_forward.11} parent=65 // pred_check
          %p345 = pneg %p49
        $region68: #{graphsage_forward.11} parent=65 // pred_check_branch
          %347 = sbr.rel (%p345) target = $region70
        $region69: #{graphsage_forward.11} parent=65 // pred_region
          _
        $region70: #{graphsage_forward.11} parent=65 // pred_fallthru
          _
        %s348 = sand.u32 %s36, 1
        %s349 = sand.u32 %s36, 1
        %s350 = smul.addr %s349, 256
        %s351 = scalar_lea.vmem [#allocation3], %s350
        %p352 = pneg %p49
        %p353 = pneg %p46
        %s354 = smul.u32 32, %s19
        %p355 = scmp.lt.s32.totalorder %s354, 95
        %s356 = scalar_select %p355, %s354, 95
        %s357 = smul.addr %s356, 4
        %s358 = scalar_lea.vmem %s1, %s357
        %p359 = pneg %p75
        %p360 = pneg %p72
        %s361 = smul.u32 32, %s18
        %p362 = scmp.lt.s32.totalorder %s361, 95
        %s363 = scalar_select %p362, %s361, 95
        %s364 = smul.addr %s363, 8
        %s365 = scalar_lea.vmem %s2, %s364
        %p366 = pneg %p101
        %p367 = pneg %p98
        %p368 = pneg %p127
        %p369 = pneg %p124
        %s370 = smul.u32 32, %s18
        %p371 = scmp.lt.s32.totalorder %s370, 95
        %s372 = scalar_select %p371, %s370, 95
        %s373 = smul.addr %s372, 8
        %s374 = scalar_lea.vmem %s3, %s373
        %s375 = smul.u32 32, %s18
        %s376 = smul.u32 2, %s19
        %s377 = smul.u32 32, %s19
        %p378 = scmp.lt.s32.totalorder %s377, 95
        %s379 = scalar_select %p378, %s377, 95
        %s380 = smul.addr %s379, 4
        %s381 = scalar_lea.vmem %s1, %s380
        %s382 = smul.u32 32, %s19
        %s383 = smul.u32 32, %s18
        %p384 = scmp.lt.s32.totalorder %s383, 95
        %s385 = scalar_select %p384, %s383, 95
        %s386 = smul.addr %s385, 8
        %s387 = scalar_lea.vmem %s2, %s386
        %s388 = smul.u32 32, %s18
        %s389 = smul.u32 32, %s18
        %p390 = scmp.lt.s32.totalorder %s389, 95
        %s391 = scalar_select %p390, %s389, 95
        %s392 = smul.addr %s391, 8
        %s393 = scalar_lea.vmem %s3, %s392
        %s394 = smul.u32 32, %s18
        %p395 = scmp.eq.s32.totalorder %s19, 0
        // Predicated region
        $region71: #{graphsage_forward.11} parent=65 // pred_check
          %p396 = pneg %p395
        $region72: #{graphsage_forward.11} parent=65 // pred_check_branch
          %398 = sbr.rel (%p396) target = $region74
        $region73: #{graphsage_forward.11} parent=65 // pred_region
          %399 = vst [vmem:[#allocation2] sm:$0xff] 0.0
          %400 = vst [vmem:[#allocation2 + $0x8] sm:$0xff] 0.0
          %401 = vst [vmem:[#allocation2 + $0x10] sm:$0xff] 0.0
          %402 = vst [vmem:[#allocation2 + $0x18] sm:$0xff] 0.0
          %403 = vst [vmem:[#allocation2 + $0x20] sm:$0xff] 0.0
          %404 = vst [vmem:[#allocation2 + $0x28] sm:$0xff] 0.0
          %405 = vst [vmem:[#allocation2 + $0x30] sm:$0xff] 0.0
          %406 = vst [vmem:[#allocation2 + $0x38] sm:$0xff] 0.0
          %407 = vst [vmem:[#allocation2 + $0x40] sm:$0xff] 0.0
          %408 = vst [vmem:[#allocation2 + $0x48] sm:$0xff] 0.0
          %409 = vst [vmem:[#allocation2 + $0x50] sm:$0xff] 0.0
          %410 = vst [vmem:[#allocation2 + $0x58] sm:$0xff] 0.0
          %411 = vst [vmem:[#allocation2 + $0x60] sm:$0xff] 0.0
          %412 = vst [vmem:[#allocation2 + $0x68] sm:$0xff] 0.0
          %413 = vst [vmem:[#allocation2 + $0x70] sm:$0xff] 0.0
          %414 = vst [vmem:[#allocation2 + $0x78] sm:$0xff] 0.0
          %415 = vst [vmem:[#allocation2 + $0x80] sm:$0xff] 0.0
          %416 = vst [vmem:[#allocation2 + $0x88] sm:$0xff] 0.0
          %417 = vst [vmem:[#allocation2 + $0x90] sm:$0xff] 0.0
          %418 = vst [vmem:[#allocation2 + $0x98] sm:$0xff] 0.0
          %419 = vst [vmem:[#allocation2 + $0xa0] sm:$0xff] 0.0
          %420 = vst [vmem:[#allocation2 + $0xa8] sm:$0xff] 0.0
          %421 = vst [vmem:[#allocation2 + $0xb0] sm:$0xff] 0.0
          %422 = vst [vmem:[#allocation2 + $0xb8] sm:$0xff] 0.0
          %423 = vst [vmem:[#allocation2 + $0xc0] sm:$0xff] 0.0
          %424 = vst [vmem:[#allocation2 + $0xc8] sm:$0xff] 0.0
          %425 = vst [vmem:[#allocation2 + $0xd0] sm:$0xff] 0.0
          %426 = vst [vmem:[#allocation2 + $0xd8] sm:$0xff] 0.0
          %427 = vst [vmem:[#allocation2 + $0xe0] sm:$0xff] 0.0
          %428 = vst [vmem:[#allocation2 + $0xe8] sm:$0xff] 0.0
          %429 = vst [vmem:[#allocation2 + $0xf0] sm:$0xff] 0.0
          %430 = vst [vmem:[#allocation2 + $0xf8] sm:$0xff] 0.0
        $region74: #{graphsage_forward.11} parent=65 // pred_fallthru
          _
        %v431 = vld [vmem:[#allocation2] sm:$0xff]
        %v432 = vld [vmem:[#allocation2 + $0x8] sm:$0xff]
        %v433 = vld [vmem:[#allocation2 + $0x10] sm:$0xff]
        %v434 = vld [vmem:[#allocation2 + $0x18] sm:$0xff]
        %v435 = vld [vmem:[#allocation2 + $0x20] sm:$0xff]
        %v436 = vld [vmem:[#allocation2 + $0x28] sm:$0xff]
        %v437 = vld [vmem:[#allocation2 + $0x30] sm:$0xff]
        %v438 = vld [vmem:[#allocation2 + $0x38] sm:$0xff]
        %v439 = vld [vmem:[#allocation2 + $0x40] sm:$0xff]
        %v440 = vld [vmem:[#allocation2 + $0x48] sm:$0xff]
        %v441 = vld [vmem:[#allocation2 + $0x50] sm:$0xff]
        %v442 = vld [vmem:[#allocation2 + $0x58] sm:$0xff]
        %v443 = vld [vmem:[#allocation2 + $0x60] sm:$0xff]
        %v444 = vld [vmem:[#allocation2 + $0x68] sm:$0xff]
        %v445 = vld [vmem:[#allocation2 + $0x70] sm:$0xff]
        %v446 = vld [vmem:[#allocation2 + $0x78] sm:$0xff]
        %v447 = vld [vmem:[#allocation2 + $0x80] sm:$0xff]
        %v448 = vld [vmem:[#allocation2 + $0x88] sm:$0xff]
        %v449 = vld [vmem:[#allocation2 + $0x90] sm:$0xff]
        %v450 = vld [vmem:[#allocation2 + $0x98] sm:$0xff]
        %v451 = vld [vmem:[#allocation2 + $0xa0] sm:$0xff]
        %v452 = vld [vmem:[#allocation2 + $0xa8] sm:$0xff]
        %v453 = vld [vmem:[#allocation2 + $0xb0] sm:$0xff]
        %v454 = vld [vmem:[#allocation2 + $0xb8] sm:$0xff]
        %v455 = vld [vmem:[#allocation2 + $0xc0] sm:$0xff]
        %v456 = vld [vmem:[#allocation2 + $0xc8] sm:$0xff]
        %v457 = vld [vmem:[#allocation2 + $0xd0] sm:$0xff]
        %v458 = vld [vmem:[#allocation2 + $0xd8] sm:$0xff]
        %v459 = vld [vmem:[#allocation2 + $0xe0] sm:$0xff]
        %v460 = vld [vmem:[#allocation2 + $0xe8] sm:$0xff]
        %v461 = vld [vmem:[#allocation2 + $0xf0] sm:$0xff]
        %v462 = vld [vmem:[#allocation2 + $0xf8] sm:$0xff]
        %v463 = vld [vmem:[%s344] sm:$0xff]
        %v464 = vld [vmem:[%s344 + $0x8] sm:$0xff]
        %v465 = vld [vmem:[%s344 + $0x10] sm:$0xff]
        %v466 = vld [vmem:[%s344 + $0x18] sm:$0xff]
        %v467 = vld [vmem:[%s344 + $0x20] sm:$0xff]
        %v468 = vld [vmem:[%s344 + $0x28] sm:$0xff]
        %v469 = vld [vmem:[%s344 + $0x30] sm:$0xff]
        %v470 = vld [vmem:[%s344 + $0x38] sm:$0xff]
        %v471 = vld [vmem:[%s344 + $0x40] sm:$0xff]
        %v472 = vld [vmem:[%s344 + $0x48] sm:$0xff]
        %v473 = vld [vmem:[%s344 + $0x50] sm:$0xff]
        %v474 = vld [vmem:[%s344 + $0x58] sm:$0xff]
        %v475 = vld [vmem:[%s344 + $0x60] sm:$0xff]
        %v476 = vld [vmem:[%s344 + $0x68] sm:$0xff]
        %v477 = vld [vmem:[%s344 + $0x70] sm:$0xff]
        %v478 = vld [vmem:[%s344 + $0x78] sm:$0xff]
        %v479 = vld [vmem:[%s344 + $0x80] sm:$0xff]
        %v480 = vld [vmem:[%s344 + $0x88] sm:$0xff]
        %v481 = vld [vmem:[%s344 + $0x90] sm:$0xff]
        %v482 = vld [vmem:[%s344 + $0x98] sm:$0xff]
        %v483 = vld [vmem:[%s344 + $0xa0] sm:$0xff]
        %v484 = vld [vmem:[%s344 + $0xa8] sm:$0xff]
        %v485 = vld [vmem:[%s344 + $0xb0] sm:$0xff]
        %v486 = vld [vmem:[%s344 + $0xb8] sm:$0xff]
        %v487 = vld [vmem:[%s344 + $0xc0] sm:$0xff]
        %v488 = vld [vmem:[%s344 + $0xc8] sm:$0xff]
        %v489 = vld [vmem:[%s344 + $0xd0] sm:$0xff]
        %v490 = vld [vmem:[%s344 + $0xd8] sm:$0xff]
        %v491 = vld [vmem:[%s344 + $0xe0] sm:$0xff]
        %v492 = vld [vmem:[%s344 + $0xe8] sm:$0xff]
        %v493 = vld [vmem:[%s344 + $0xf0] sm:$0xff]
        %v494 = vld [vmem:[%s344 + $0xf8] sm:$0xff]
        %v495 = vld [vmem:[%s381] sm:$0xf]
        %v496 = vld [vmem:[%s381 + $0x4] sm:$0xf]
        %v497 = vld [vmem:[%s381 + $0x8] sm:$0xf]
        %v498 = vld [vmem:[%s381 + $0xc] sm:$0xf]
        %v499 = vld [vmem:[%s381 + $0x10] sm:$0xf]
        %v500 = vld [vmem:[%s381 + $0x14] sm:$0xf]
        %v501 = vld [vmem:[%s381 + $0x18] sm:$0xf]
        %v502 = vld [vmem:[%s381 + $0x1c] sm:$0xf]
        %v503 = vld [vmem:[%s381 + $0x20] sm:$0xf]
        %v504 = vld [vmem:[%s381 + $0x24] sm:$0xf]
        %v505 = vld [vmem:[%s381 + $0x28] sm:$0xf]
        %v506 = vld [vmem:[%s381 + $0x2c] sm:$0xf]
        %v507 = vld [vmem:[%s381 + $0x30] sm:$0xf]
        %v508 = vld [vmem:[%s381 + $0x34] sm:$0xf]
        %v509 = vld [vmem:[%s381 + $0x38] sm:$0xf]
        %v510 = vld [vmem:[%s381 + $0x3c] sm:$0xf]
        %v511 = vld [vmem:[%s381 + $0x40] sm:$0xf]
        %v512 = vld [vmem:[%s381 + $0x44] sm:$0xf]
        %v513 = vld [vmem:[%s381 + $0x48] sm:$0xf]
        %v514 = vld [vmem:[%s381 + $0x4c] sm:$0xf]
        %v515 = vld [vmem:[%s381 + $0x50] sm:$0xf]
        %v516 = vld [vmem:[%s381 + $0x54] sm:$0xf]
        %v517 = vld [vmem:[%s381 + $0x58] sm:$0xf]
        %v518 = vld [vmem:[%s381 + $0x5c] sm:$0xf]
        %v519 = vld [vmem:[%s381 + $0x60] sm:$0xf]
        %v520 = vld [vmem:[%s381 + $0x64] sm:$0xf]
        %v521 = vld [vmem:[%s381 + $0x68] sm:$0xf]
        %v522 = vld [vmem:[%s381 + $0x6c] sm:$0xf]
        %v523 = vld [vmem:[%s381 + $0x70] sm:$0xf]
        %v524 = vld [vmem:[%s381 + $0x74] sm:$0xf]
        %v525 = vld [vmem:[%s381 + $0x78] sm:$0xf]
        %v526 = vld [vmem:[%s381 + $0x7c] sm:$0xf]
        %v559 = vunpack.c.l.b16 %v463
        %v560 = vunpack.c.h.b16 %v463
        %v561 = vunpack.c.l.b16 %v464
        %v562 = vunpack.c.h.b16 %v464
        %v563 = vunpack.c.l.b16 %v465
        %v564 = vunpack.c.h.b16 %v465
        %v565 = vunpack.c.l.b16 %v466
        %v566 = vunpack.c.h.b16 %v466
        %v567 = vunpack.c.l.b16 %v467
        %v568 = vunpack.c.h.b16 %v467
        %v569 = vunpack.c.l.b16 %v468
        %v570 = vunpack.c.h.b16 %v468
        %v571 = vunpack.c.l.b16 %v469
        %v572 = vunpack.c.h.b16 %v469
        %v573 = vunpack.c.l.b16 %v470
        %v574 = vunpack.c.h.b16 %v470
        %v575 = vunpack.c.l.b16 %v471
        %v576 = vunpack.c.h.b16 %v471
        %v577 = vunpack.c.l.b16 %v472
        %v578 = vunpack.c.h.b16 %v472
        %v579 = vunpack.c.l.b16 %v473
        %v580 = vunpack.c.h.b16 %v473
        %v581 = vunpack.c.l.b16 %v474
        %v582 = vunpack.c.h.b16 %v474
        %v583 = vunpack.c.l.b16 %v475
        %v584 = vunpack.c.h.b16 %v475
        %v585 = vunpack.c.l.b16 %v476
        %v586 = vunpack.c.h.b16 %v476
        %v587 = vunpack.c.l.b16 %v477
        %v588 = vunpack.c.h.b16 %v477
        %v589 = vunpack.c.l.b16 %v478
        %v590 = vunpack.c.h.b16 %v478
        %v591 = vunpack.c.l.b16 %v479
        %v592 = vunpack.c.h.b16 %v479
        %v593 = vunpack.c.l.b16 %v480
        %v594 = vunpack.c.h.b16 %v480
        %v595 = vunpack.c.l.b16 %v481
        %v596 = vunpack.c.h.b16 %v481
        %v597 = vunpack.c.l.b16 %v482
        %v598 = vunpack.c.h.b16 %v482
        %v599 = vunpack.c.l.b16 %v483
        %v600 = vunpack.c.h.b16 %v483
        %v601 = vunpack.c.l.b16 %v484
        %v602 = vunpack.c.h.b16 %v484
        %v603 = vunpack.c.l.b16 %v485
        %v604 = vunpack.c.h.b16 %v485
        %v605 = vunpack.c.l.b16 %v486
        %v606 = vunpack.c.h.b16 %v486
        %v607 = vunpack.c.l.b16 %v487
        %v608 = vunpack.c.h.b16 %v487
        %v609 = vunpack.c.l.b16 %v488
        %v610 = vunpack.c.h.b16 %v488
        %v611 = vunpack.c.l.b16 %v489
        %v612 = vunpack.c.h.b16 %v489
        %v613 = vunpack.c.l.b16 %v490
        %v614 = vunpack.c.h.b16 %v490
        %v615 = vunpack.c.l.b16 %v491
        %v616 = vunpack.c.h.b16 %v491
        %v617 = vunpack.c.l.b16 %v492
        %v618 = vunpack.c.h.b16 %v492
        %v619 = vunpack.c.l.b16 %v493
        %v620 = vunpack.c.h.b16 %v493
        %v621 = vunpack.c.l.b16 %v494
        %v622 = vunpack.c.h.b16 %v494
        %v623 = vpack.c.b16 %v561, %v559
        %v624 = vpack.c.b16 %v562, %v560
        %v625 = vpack.c.b16 %v565, %v563
        %v626 = vpack.c.b16 %v566, %v564
        %v627 = vpack.c.b16 %v569, %v567
        %v628 = vpack.c.b16 %v570, %v568
        %v629 = vpack.c.b16 %v573, %v571
        %v630 = vpack.c.b16 %v574, %v572
        %v631 = vpack.c.b16 %v577, %v575
        %v632 = vpack.c.b16 %v578, %v576
        %v633 = vpack.c.b16 %v581, %v579
        %v634 = vpack.c.b16 %v582, %v580
        %v635 = vpack.c.b16 %v585, %v583
        %v636 = vpack.c.b16 %v586, %v584
        %v637 = vpack.c.b16 %v589, %v587
        %v638 = vpack.c.b16 %v590, %v588
        %v639 = vpack.c.b16 %v593, %v591
        %v640 = vpack.c.b16 %v594, %v592
        %v641 = vpack.c.b16 %v597, %v595
        %v642 = vpack.c.b16 %v598, %v596
        %v643 = vpack.c.b16 %v601, %v599
        %v644 = vpack.c.b16 %v602, %v600
        %v645 = vpack.c.b16 %v605, %v603
        %v646 = vpack.c.b16 %v606, %v604
        %v647 = vpack.c.b16 %v609, %v607
        %v648 = vpack.c.b16 %v610, %v608
        %v649 = vpack.c.b16 %v613, %v611
        %v650 = vpack.c.b16 %v614, %v612
        %v651 = vpack.c.b16 %v617, %v615
        %v652 = vpack.c.b16 %v618, %v616
        %v653 = vpack.c.b16 %v621, %v619
        %v654 = vpack.c.b16 %v622, %v620
        %v719 = vunpack.c.l.b16 %v495
        %v720 = vunpack.c.l.b16 %v496
        %v721 = vunpack.c.l.b16 %v497
        %v722 = vunpack.c.l.b16 %v498
        %v723 = vunpack.c.l.b16 %v499
        %v724 = vunpack.c.l.b16 %v500
        %v725 = vunpack.c.l.b16 %v501
        %v726 = vunpack.c.l.b16 %v502
        %v727 = vunpack.c.l.b16 %v503
        %v728 = vunpack.c.l.b16 %v504
        %v729 = vunpack.c.l.b16 %v505
        %v730 = vunpack.c.l.b16 %v506
        %v731 = vunpack.c.l.b16 %v507
        %v732 = vunpack.c.l.b16 %v508
        %v733 = vunpack.c.l.b16 %v509
        %v734 = vunpack.c.l.b16 %v510
        %v735 = vunpack.c.l.b16 %v511
        %v736 = vunpack.c.l.b16 %v512
        %v737 = vunpack.c.l.b16 %v513
        %v738 = vunpack.c.l.b16 %v514
        %v739 = vunpack.c.l.b16 %v515
        %v740 = vunpack.c.l.b16 %v516
        %v741 = vunpack.c.l.b16 %v517
        %v742 = vunpack.c.l.b16 %v518
        %v743 = vunpack.c.l.b16 %v519
        %v744 = vunpack.c.l.b16 %v520
        %v745 = vunpack.c.l.b16 %v521
        %v746 = vunpack.c.l.b16 %v522
        %v747 = vunpack.c.l.b16 %v523
        %v748 = vunpack.c.l.b16 %v524
        %v749 = vunpack.c.l.b16 %v525
        %v750 = vunpack.c.l.b16 %v526
        %v751 = vpack.c.b16 %v720, %v719
        %v752 = vpack.c.b16 %v722, %v721
        %v753 = vpack.c.b16 %v724, %v723
        %v754 = vpack.c.b16 %v726, %v725
        %v755 = vpack.c.b16 %v728, %v727
        %v756 = vpack.c.b16 %v730, %v729
        %v757 = vpack.c.b16 %v732, %v731
        %v758 = vpack.c.b16 %v734, %v733
        %v759 = vpack.c.b16 %v736, %v735
        %v760 = vpack.c.b16 %v738, %v737
        %v761 = vpack.c.b16 %v740, %v739
        %v762 = vpack.c.b16 %v742, %v741
        %v763 = vpack.c.b16 %v744, %v743
        %v764 = vpack.c.b16 %v746, %v745
        %v765 = vpack.c.b16 %v748, %v747
        %v766 = vpack.c.b16 %v750, %v749
        %783 = vmatpush.bf16.msra.mxu0 %v758
        %784 = vmatpush.bf16.msra.mxu0 %v757
        %785 = vmatpush.bf16.msra.mxu0 %v756
        %786 = vmatpush.bf16.msra.mxu0 %v755
        %787 = vmatpush.bf16.msra.mxu0 %v754
        %788 = vmatpush.bf16.msra.mxu0 %v753
        %789 = vmatpush.bf16.msra.mxu0 %v752
        %790 = vmatpush.bf16.msra.mxu0 %v751
        %791 = vmatmul.bf16.gmra.mxu0 %v623
        %v792 = vpop.f32.mrf.mxu0
        %v793 = vadd.f32 0.0, %v792
        %v794 = vpop.f32.mrf.mxu0
        %v795 = vadd.f32 0.0, %v794
        %796 = vmatmul.bf16.gmra.mxu0 %v625
        %v797 = vpop.f32.mrf.mxu0
        %v798 = vadd.f32 0.0, %v797
        %v799 = vpop.f32.mrf.mxu0
        %v800 = vadd.f32 0.0, %v799
        %801 = vmatmul.bf16.gmra.mxu0 %v627
        %v802 = vpop.f32.mrf.mxu0
        %v803 = vadd.f32 0.0, %v802
        %v804 = vpop.f32.mrf.mxu0
        %v805 = vadd.f32 0.0, %v804
        %806 = vmatmul.bf16.gmra.mxu0 %v629
        %v807 = vpop.f32.mrf.mxu0
        %v808 = vadd.f32 0.0, %v807
        %v809 = vpop.f32.mrf.mxu0
        %v810 = vadd.f32 0.0, %v809
        %811 = vmatmul.bf16.gmra.mxu0 %v631
        %v812 = vpop.f32.mrf.mxu0
        %v813 = vadd.f32 0.0, %v812
        %v814 = vpop.f32.mrf.mxu0
        %v815 = vadd.f32 0.0, %v814
        %816 = vmatmul.bf16.gmra.mxu0 %v633
        %v817 = vpop.f32.mrf.mxu0
        %v818 = vadd.f32 0.0, %v817
        %v819 = vpop.f32.mrf.mxu0
        %v820 = vadd.f32 0.0, %v819
        %821 = vmatmul.bf16.gmra.mxu0 %v635
        %v822 = vpop.f32.mrf.mxu0
        %v823 = vadd.f32 0.0, %v822
        %v824 = vpop.f32.mrf.mxu0
        %v825 = vadd.f32 0.0, %v824
        %826 = vmatmul.bf16.gmra.mxu0 %v637
        %v827 = vpop.f32.mrf.mxu0
        %v828 = vadd.f32 0.0, %v827
        %v829 = vpop.f32.mrf.mxu0
        %v830 = vadd.f32 0.0, %v829
        %831 = vmatmul.bf16.gmra.mxu0 %v639
        %v832 = vpop.f32.mrf.mxu0
        %v833 = vadd.f32 0.0, %v832
        %v834 = vpop.f32.mrf.mxu0
        %v835 = vadd.f32 0.0, %v834
        %836 = vmatmul.bf16.gmra.mxu0 %v641
        %v837 = vpop.f32.mrf.mxu0
        %v838 = vadd.f32 0.0, %v837
        %v839 = vpop.f32.mrf.mxu0
        %v840 = vadd.f32 0.0, %v839
        %841 = vmatmul.bf16.gmra.mxu0 %v643
        %v842 = vpop.f32.mrf.mxu0
        %v843 = vadd.f32 0.0, %v842
        %v844 = vpop.f32.mrf.mxu0
        %v845 = vadd.f32 0.0, %v844
        %846 = vmatmul.bf16.gmra.mxu0 %v645
        %v847 = vpop.f32.mrf.mxu0
        %v848 = vadd.f32 0.0, %v847
        %v849 = vpop.f32.mrf.mxu0
        %v850 = vadd.f32 0.0, %v849
        %851 = vmatmul.bf16.gmra.mxu0 %v647
        %v852 = vpop.f32.mrf.mxu0
        %v853 = vadd.f32 0.0, %v852
        %v854 = vpop.f32.mrf.mxu0
        %v855 = vadd.f32 0.0, %v854
        %856 = vmatmul.bf16.gmra.mxu0 %v649
        %v857 = vpop.f32.mrf.mxu0
        %v858 = vadd.f32 0.0, %v857
        %v859 = vpop.f32.mrf.mxu0
        %v860 = vadd.f32 0.0, %v859
        %861 = vmatmul.bf16.gmra.mxu0 %v651
        %v862 = vpop.f32.mrf.mxu0
        %v863 = vadd.f32 0.0, %v862
        %v864 = vpop.f32.mrf.mxu0
        %v865 = vadd.f32 0.0, %v864
        %866 = vmatmul.bf16.gmra.mxu0 %v653
        %v867 = vpop.f32.mrf.mxu0
        %v868 = vadd.f32 0.0, %v867
        %v869 = vpop.f32.mrf.mxu0
        %v870 = vadd.f32 0.0, %v869
        %871 = vdwg.mxu0
        %872 = vmatpush.bf16.msra.mxu0 %v766
        %873 = vmatpush.bf16.msra.mxu0 %v765
        %874 = vmatpush.bf16.msra.mxu0 %v764
        %875 = vmatpush.bf16.msra.mxu0 %v763
        %876 = vmatpush.bf16.msra.mxu0 %v762
        %877 = vmatpush.bf16.msra.mxu0 %v761
        %878 = vmatpush.bf16.msra.mxu0 %v760
        %879 = vmatpush.bf16.msra.mxu0 %v759
        %880 = vmatmul.bf16.gmra.mxu0 %v624
        %v881 = vpop.f32.mrf.mxu0
        %v882 = vadd.f32 %v793, %v881
        %v883 = vpop.f32.mrf.mxu0
        %v884 = vadd.f32 %v795, %v883
        %885 = vmatmul.bf16.gmra.mxu0 %v626
        %v886 = vpop.f32.mrf.mxu0
        %v887 = vadd.f32 %v798, %v886
        %v888 = vpop.f32.mrf.mxu0
        %v889 = vadd.f32 %v800, %v888
        %890 = vmatmul.bf16.gmra.mxu0 %v628
        %v891 = vpop.f32.mrf.mxu0
        %v892 = vadd.f32 %v803, %v891
        %v893 = vpop.f32.mrf.mxu0
        %v894 = vadd.f32 %v805, %v893
        %895 = vmatmul.bf16.gmra.mxu0 %v630
        %v896 = vpop.f32.mrf.mxu0
        %v897 = vadd.f32 %v808, %v896
        %v898 = vpop.f32.mrf.mxu0
        %v899 = vadd.f32 %v810, %v898
        %900 = vmatmul.bf16.gmra.mxu0 %v632
        %v901 = vpop.f32.mrf.mxu0
        %v902 = vadd.f32 %v813, %v901
        %v903 = vpop.f32.mrf.mxu0
        %v904 = vadd.f32 %v815, %v903
        %905 = vmatmul.bf16.gmra.mxu0 %v634
        %v906 = vpop.f32.mrf.mxu0
        %v907 = vadd.f32 %v818, %v906
        %v908 = vpop.f32.mrf.mxu0
        %v909 = vadd.f32 %v820, %v908
        %910 = vmatmul.bf16.gmra.mxu0 %v636
        %v911 = vpop.f32.mrf.mxu0
        %v912 = vadd.f32 %v823, %v911
        %v913 = vpop.f32.mrf.mxu0
        %v914 = vadd.f32 %v825, %v913
        %915 = vmatmul.bf16.gmra.mxu0 %v638
        %v916 = vpop.f32.mrf.mxu0
        %v917 = vadd.f32 %v828, %v916
        %v918 = vpop.f32.mrf.mxu0
        %v919 = vadd.f32 %v830, %v918
        %920 = vmatmul.bf16.gmra.mxu0 %v640
        %v921 = vpop.f32.mrf.mxu0
        %v922 = vadd.f32 %v833, %v921
        %v923 = vpop.f32.mrf.mxu0
        %v924 = vadd.f32 %v835, %v923
        %925 = vmatmul.bf16.gmra.mxu0 %v642
        %v926 = vpop.f32.mrf.mxu0
        %v927 = vadd.f32 %v838, %v926
        %v928 = vpop.f32.mrf.mxu0
        %v929 = vadd.f32 %v840, %v928
        %930 = vmatmul.bf16.gmra.mxu0 %v644
        %v931 = vpop.f32.mrf.mxu0
        %v932 = vadd.f32 %v843, %v931
        %v933 = vpop.f32.mrf.mxu0
        %v934 = vadd.f32 %v845, %v933
        %935 = vmatmul.bf16.gmra.mxu0 %v646
        %v936 = vpop.f32.mrf.mxu0
        %v937 = vadd.f32 %v848, %v936
        %v938 = vpop.f32.mrf.mxu0
        %v939 = vadd.f32 %v850, %v938
        %940 = vmatmul.bf16.gmra.mxu0 %v648
        %v941 = vpop.f32.mrf.mxu0
        %v942 = vadd.f32 %v853, %v941
        %v943 = vpop.f32.mrf.mxu0
        %v944 = vadd.f32 %v855, %v943
        %945 = vmatmul.bf16.gmra.mxu0 %v650
        %v946 = vpop.f32.mrf.mxu0
        %v947 = vadd.f32 %v858, %v946
        %v948 = vpop.f32.mrf.mxu0
        %v949 = vadd.f32 %v860, %v948
        %950 = vmatmul.bf16.gmra.mxu0 %v652
        %v951 = vpop.f32.mrf.mxu0
        %v952 = vadd.f32 %v863, %v951
        %v953 = vpop.f32.mrf.mxu0
        %v954 = vadd.f32 %v865, %v953
        %955 = vmatmul.bf16.gmra.mxu0 %v654
        %v956 = vpop.f32.mrf.mxu0
        %v957 = vadd.f32 %v868, %v956
        %v958 = vpop.f32.mrf.mxu0
        %v959 = vadd.f32 %v870, %v958
        %960 = vdwg.mxu0
        %v961 = vadd.f32 %v431, %v882
        %v962 = vadd.f32 %v432, %v884
        %v963 = vadd.f32 %v433, %v887
        %v964 = vadd.f32 %v434, %v889
        %v965 = vadd.f32 %v435, %v892
        %v966 = vadd.f32 %v436, %v894
        %v967 = vadd.f32 %v437, %v897
        %v968 = vadd.f32 %v438, %v899
        %v969 = vadd.f32 %v439, %v902
        %v970 = vadd.f32 %v440, %v904
        %v971 = vadd.f32 %v441, %v907
        %v972 = vadd.f32 %v442, %v909
        %v973 = vadd.f32 %v443, %v912
        %v974 = vadd.f32 %v444, %v914
        %v975 = vadd.f32 %v445, %v917
        %v976 = vadd.f32 %v446, %v919
        %v977 = vadd.f32 %v447, %v922
        %v978 = vadd.f32 %v448, %v924
        %v979 = vadd.f32 %v449, %v927
        %v980 = vadd.f32 %v450, %v929
        %v981 = vadd.f32 %v451, %v932
        %v982 = vadd.f32 %v452, %v934
        %v983 = vadd.f32 %v453, %v937
        %v984 = vadd.f32 %v454, %v939
        %v985 = vadd.f32 %v455, %v942
        %v986 = vadd.f32 %v456, %v944
        %v987 = vadd.f32 %v457, %v947
        %v988 = vadd.f32 %v458, %v949
        %v989 = vadd.f32 %v459, %v952
        %v990 = vadd.f32 %v460, %v954
        %v991 = vadd.f32 %v461, %v957
        %v992 = vadd.f32 %v462, %v959
        %993 = vst [vmem:[#allocation2] sm:$0xff] %v961
        %994 = vst [vmem:[#allocation2 + $0x8] sm:$0xff] %v962
        %995 = vst [vmem:[#allocation2 + $0x10] sm:$0xff] %v963
        %996 = vst [vmem:[#allocation2 + $0x18] sm:$0xff] %v964
        %997 = vst [vmem:[#allocation2 + $0x20] sm:$0xff] %v965
        %998 = vst [vmem:[#allocation2 + $0x28] sm:$0xff] %v966
        %999 = vst [vmem:[#allocation2 + $0x30] sm:$0xff] %v967
        %1000 = vst [vmem:[#allocation2 + $0x38] sm:$0xff] %v968
        %1001 = vst [vmem:[#allocation2 + $0x40] sm:$0xff] %v969
        %1002 = vst [vmem:[#allocation2 + $0x48] sm:$0xff] %v970
        %1003 = vst [vmem:[#allocation2 + $0x50] sm:$0xff] %v971
        %1004 = vst [vmem:[#allocation2 + $0x58] sm:$0xff] %v972
        %1005 = vst [vmem:[#allocation2 + $0x60] sm:$0xff] %v973
        %1006 = vst [vmem:[#allocation2 + $0x68] sm:$0xff] %v974
        %1007 = vst [vmem:[#allocation2 + $0x70] sm:$0xff] %v975
        %1008 = vst [vmem:[#allocation2 + $0x78] sm:$0xff] %v976
        %1009 = vst [vmem:[#allocation2 + $0x80] sm:$0xff] %v977
        %1010 = vst [vmem:[#allocation2 + $0x88] sm:$0xff] %v978
        %1011 = vst [vmem:[#allocation2 + $0x90] sm:$0xff] %v979
        %1012 = vst [vmem:[#allocation2 + $0x98] sm:$0xff] %v980
        %1013 = vst [vmem:[#allocation2 + $0xa0] sm:$0xff] %v981
        %1014 = vst [vmem:[#allocation2 + $0xa8] sm:$0xff] %v982
        %1015 = vst [vmem:[#allocation2 + $0xb0] sm:$0xff] %v983
        %1016 = vst [vmem:[#allocation2 + $0xb8] sm:$0xff] %v984
        %1017 = vst [vmem:[#allocation2 + $0xc0] sm:$0xff] %v985
        %1018 = vst [vmem:[#allocation2 + $0xc8] sm:$0xff] %v986
        %1019 = vst [vmem:[#allocation2 + $0xd0] sm:$0xff] %v987
        %1020 = vst [vmem:[#allocation2 + $0xd8] sm:$0xff] %v988
        %1021 = vst [vmem:[#allocation2 + $0xe0] sm:$0xff] %v989
        %1022 = vst [vmem:[#allocation2 + $0xe8] sm:$0xff] %v990
        %1023 = vst [vmem:[#allocation2 + $0xf0] sm:$0xff] %v991
        %1024 = vst [vmem:[#allocation2 + $0xf8] sm:$0xff] %v992
        %p1025 = scmp.eq.s32.totalorder %s19, 2
        // Predicated region
        $region75: #{graphsage_forward.11} parent=65 // pred_check
          %p1026 = pneg %p1025
        $region76: #{graphsage_forward.11} parent=65 // pred_check_branch
          %1028 = sbr.rel (%p1026) target = $region78
        $region77: #{graphsage_forward.11} parent=65 // pred_region
          %v1029 = vld [vmem:[#allocation2] sm:$0xff]
          %v1030 = vld [vmem:[#allocation2 + $0x8] sm:$0xff]
          %v1031 = vld [vmem:[#allocation2 + $0x10] sm:$0xff]
          %v1032 = vld [vmem:[#allocation2 + $0x18] sm:$0xff]
          %v1033 = vld [vmem:[#allocation2 + $0x20] sm:$0xff]
          %v1034 = vld [vmem:[#allocation2 + $0x28] sm:$0xff]
          %v1035 = vld [vmem:[#allocation2 + $0x30] sm:$0xff]
          %v1036 = vld [vmem:[#allocation2 + $0x38] sm:$0xff]
          %v1037 = vld [vmem:[#allocation2 + $0x40] sm:$0xff]
          %v1038 = vld [vmem:[#allocation2 + $0x48] sm:$0xff]
          %v1039 = vld [vmem:[#allocation2 + $0x50] sm:$0xff]
          %v1040 = vld [vmem:[#allocation2 + $0x58] sm:$0xff]
          %v1041 = vld [vmem:[#allocation2 + $0x60] sm:$0xff]
          %v1042 = vld [vmem:[#allocation2 + $0x68] sm:$0xff]
          %v1043 = vld [vmem:[#allocation2 + $0x70] sm:$0xff]
          %v1044 = vld [vmem:[#allocation2 + $0x78] sm:$0xff]
          %v1045 = vld [vmem:[#allocation2 + $0x80] sm:$0xff]
          %v1046 = vld [vmem:[#allocation2 + $0x88] sm:$0xff]
          %v1047 = vld [vmem:[#allocation2 + $0x90] sm:$0xff]
          %v1048 = vld [vmem:[#allocation2 + $0x98] sm:$0xff]
          %v1049 = vld [vmem:[#allocation2 + $0xa0] sm:$0xff]
          %v1050 = vld [vmem:[#allocation2 + $0xa8] sm:$0xff]
          %v1051 = vld [vmem:[#allocation2 + $0xb0] sm:$0xff]
          %v1052 = vld [vmem:[#allocation2 + $0xb8] sm:$0xff]
          %v1053 = vld [vmem:[#allocation2 + $0xc0] sm:$0xff]
          %v1054 = vld [vmem:[#allocation2 + $0xc8] sm:$0xff]
          %v1055 = vld [vmem:[#allocation2 + $0xd0] sm:$0xff]
          %v1056 = vld [vmem:[#allocation2 + $0xd8] sm:$0xff]
          %v1057 = vld [vmem:[#allocation2 + $0xe0] sm:$0xff]
          %v1058 = vld [vmem:[#allocation2 + $0xe8] sm:$0xff]
          %v1059 = vld [vmem:[#allocation2 + $0xf0] sm:$0xff]
          %v1060 = vld [vmem:[#allocation2 + $0xf8] sm:$0xff]
          %v1061 = vld [vmem:[%s387] sm:$0xff]
          %v1062 = vld [vmem:[%s387 + $0x8] sm:$0xff]
          %v1063 = vld [vmem:[%s387 + $0x10] sm:$0xff]
          %v1064 = vld [vmem:[%s387 + $0x18] sm:$0xff]
          %v1065 = vld [vmem:[%s387 + $0x20] sm:$0xff]
          %v1066 = vld [vmem:[%s387 + $0x28] sm:$0xff]
          %v1067 = vld [vmem:[%s387 + $0x30] sm:$0xff]
          %v1068 = vld [vmem:[%s387 + $0x38] sm:$0xff]
          %v1069 = vld [vmem:[%s387 + $0x40] sm:$0xff]
          %v1070 = vld [vmem:[%s387 + $0x48] sm:$0xff]
          %v1071 = vld [vmem:[%s387 + $0x50] sm:$0xff]
          %v1072 = vld [vmem:[%s387 + $0x58] sm:$0xff]
          %v1073 = vld [vmem:[%s387 + $0x60] sm:$0xff]
          %v1074 = vld [vmem:[%s387 + $0x68] sm:$0xff]
          %v1075 = vld [vmem:[%s387 + $0x70] sm:$0xff]
          %v1076 = vld [vmem:[%s387 + $0x78] sm:$0xff]
          %v1077 = vld [vmem:[%s387 + $0x80] sm:$0xff]
          %v1078 = vld [vmem:[%s387 + $0x88] sm:$0xff]
          %v1079 = vld [vmem:[%s387 + $0x90] sm:$0xff]
          %v1080 = vld [vmem:[%s387 + $0x98] sm:$0xff]
          %v1081 = vld [vmem:[%s387 + $0xa0] sm:$0xff]
          %v1082 = vld [vmem:[%s387 + $0xa8] sm:$0xff]
          %v1083 = vld [vmem:[%s387 + $0xb0] sm:$0xff]
          %v1084 = vld [vmem:[%s387 + $0xb8] sm:$0xff]
          %v1085 = vld [vmem:[%s387 + $0xc0] sm:$0xff]
          %v1086 = vld [vmem:[%s387 + $0xc8] sm:$0xff]
          %v1087 = vld [vmem:[%s387 + $0xd0] sm:$0xff]
          %v1088 = vld [vmem:[%s387 + $0xd8] sm:$0xff]
          %v1089 = vld [vmem:[%s387 + $0xe0] sm:$0xff]
          %v1090 = vld [vmem:[%s387 + $0xe8] sm:$0xff]
          %v1091 = vld [vmem:[%s387 + $0xf0] sm:$0xff]
          %v1092 = vld [vmem:[%s387 + $0xf8] sm:$0xff]
          %v1093 = vadd.f32 %v1029, %v1061
          %v1094 = vadd.f32 %v1030, %v1062
          %v1095 = vadd.f32 %v1031, %v1063
          %v1096 = vadd.f32 %v1032, %v1064
          %v1097 = vadd.f32 %v1033, %v1065
          %v1098 = vadd.f32 %v1034, %v1066
          %v1099 = vadd.f32 %v1035, %v1067
          %v1100 = vadd.f32 %v1036, %v1068
          %v1101 = vadd.f32 %v1037, %v1069
          %v1102 = vadd.f32 %v1038, %v1070
          %v1103 = vadd.f32 %v1039, %v1071
          %v1104 = vadd.f32 %v1040, %v1072
          %v1105 = vadd.f32 %v1041, %v1073
          %v1106 = vadd.f32 %v1042, %v1074
          %v1107 = vadd.f32 %v1043, %v1075
          %v1108 = vadd.f32 %v1044, %v1076
          %v1109 = vadd.f32 %v1045, %v1077
          %v1110 = vadd.f32 %v1046, %v1078
          %v1111 = vadd.f32 %v1047, %v1079
          %v1112 = vadd.f32 %v1048, %v1080
          %v1113 = vadd.f32 %v1049, %v1081
          %v1114 = vadd.f32 %v1050, %v1082
          %v1115 = vadd.f32 %v1051, %v1083
          %v1116 = vadd.f32 %v1052, %v1084
          %v1117 = vadd.f32 %v1053, %v1085
          %v1118 = vadd.f32 %v1054, %v1086
          %v1119 = vadd.f32 %v1055, %v1087
          %v1120 = vadd.f32 %v1056, %v1088
          %v1121 = vadd.f32 %v1057, %v1089
          %v1122 = vadd.f32 %v1058, %v1090
          %v1123 = vadd.f32 %v1059, %v1091
          %v1124 = vadd.f32 %v1060, %v1092
          %1125 = vst [vmem:[%s393] sm:$0xff] %v1093
          %1126 = vst [vmem:[%s393 + $0x8] sm:$0xff] %v1094
          %1127 = vst [vmem:[%s393 + $0x10] sm:$0xff] %v1095
          %1128 = vst [vmem:[%s393 + $0x18] sm:$0xff] %v1096
          %1129 = vst [vmem:[%s393 + $0x20] sm:$0xff] %v1097
          %1130 = vst [vmem:[%s393 + $0x28] sm:$0xff] %v1098
          %1131 = vst [vmem:[%s393 + $0x30] sm:$0xff] %v1099
          %1132 = vst [vmem:[%s393 + $0x38] sm:$0xff] %v1100
          %1133 = vst [vmem:[%s393 + $0x40] sm:$0xff] %v1101
          %1134 = vst [vmem:[%s393 + $0x48] sm:$0xff] %v1102
          %1135 = vst [vmem:[%s393 + $0x50] sm:$0xff] %v1103
          %1136 = vst [vmem:[%s393 + $0x58] sm:$0xff] %v1104
          %1137 = vst [vmem:[%s393 + $0x60] sm:$0xff] %v1105
          %1138 = vst [vmem:[%s393 + $0x68] sm:$0xff] %v1106
          %1139 = vst [vmem:[%s393 + $0x70] sm:$0xff] %v1107
          %1140 = vst [vmem:[%s393 + $0x78] sm:$0xff] %v1108
          %1141 = vst [vmem:[%s393 + $0x80] sm:$0xff] %v1109
          %1142 = vst [vmem:[%s393 + $0x88] sm:$0xff] %v1110
          %1143 = vst [vmem:[%s393 + $0x90] sm:$0xff] %v1111
          %1144 = vst [vmem:[%s393 + $0x98] sm:$0xff] %v1112
          %1145 = vst [vmem:[%s393 + $0xa0] sm:$0xff] %v1113
          %1146 = vst [vmem:[%s393 + $0xa8] sm:$0xff] %v1114
          %1147 = vst [vmem:[%s393 + $0xb0] sm:$0xff] %v1115
          %1148 = vst [vmem:[%s393 + $0xb8] sm:$0xff] %v1116
          %1149 = vst [vmem:[%s393 + $0xc0] sm:$0xff] %v1117
          %1150 = vst [vmem:[%s393 + $0xc8] sm:$0xff] %v1118
          %1151 = vst [vmem:[%s393 + $0xd0] sm:$0xff] %v1119
          %1152 = vst [vmem:[%s393 + $0xd8] sm:$0xff] %v1120
          %1153 = vst [vmem:[%s393 + $0xe0] sm:$0xff] %v1121
          %1154 = vst [vmem:[%s393 + $0xe8] sm:$0xff] %v1122
          %1155 = vst [vmem:[%s393 + $0xf0] sm:$0xff] %v1123
          %1156 = vst [vmem:[%s393 + $0xf8] sm:$0xff] %v1124
        $region78: #{graphsage_forward.11} parent=65 // pred_fallthru
          _
        %s1157 = smul.u32 32, %s18
        %p1158 = scmp.lt.s32.totalorder %s1157, 95
        %s1159 = scalar_select %p1158, %s1157, 95
        %s1160 = smul.addr %s1159, 8
        %s1161 = scalar_lea.vmem %s3, %s1160
        // Predicated region
        $region79: #{graphsage_forward.11} parent=65 // pred_check
          %p1162 = pneg %p124
        $region80: #{graphsage_forward.11} parent=65 // pred_check_branch
          %1164 = sbr.rel (%p1162) target = $region82
        $region81: #{graphsage_forward.11} parent=65 // pred_region
          %s1165 = smul.u32 32, %s18
        $region82: #{graphsage_forward.11} parent=65 // pred_fallthru
          _
      $region66: #{graphsage_forward.11} parent=5 // pred_fallthru
        _
      %p1166 = scmp.le.s32.totalorder 2, %s9
      // Predicated region
      $region83: #{graphsage_forward.11} parent=5 // pred_check
        %p1167 = pneg %p1166
      $region84: #{graphsage_forward.11} parent=5 // pred_check_branch
        %1169 = sbr.rel (%p1167) target = $region86
      $region85: #{graphsage_forward.11} parent=5 // pred_region
        %s1170 = ssub.s32 %s9, 2
        // Predicated region
        $region87: #{graphsage_forward.11} parent=85 // pred_check
          %p1171 = pneg %p130
        $region88: #{graphsage_forward.11} parent=85 // pred_check_branch
          %1173 = sbr.rel (%p1171) target = $region90
        $region89: #{graphsage_forward.11} parent=85 // pred_region
          %s1174 = smul.u32 32, %s20
          %p1175 = scmp.lt.s32.totalorder %s1174, 95
          %s1176 = scalar_select %p1175, %s1174, 95
          %s1177 = smul.addr %s1176, 8
          %s1178 = scalar_lea.vmem %s3, %s1177
        $region90: #{graphsage_forward.11} parent=85 // pred_fallthru
          _
      $region86: #{graphsage_forward.11} parent=5 // pred_fallthru
        _
    $region6: #{graphsage_forward.11} parent=1 // loop_footer
      %s13 = sadd.s32 1, %s9
    $region7: #{graphsage_forward.11} parent=1 // loop_footer_branch
      %8 = sbr.rel target = $region3
    $region8: #{graphsage_forward.11} parent=1 // loop_exit
      _

</llo_original>
